<compile_context>
chip_gen: v5e
topology: v5e:2x2
jax: 0.10.0
libtpu: 0.0.40
codegen_flags: <defaults>
</compile_context>

<pallas_src>
import functools
import math

import jax
import jax.numpy as jnp
from jax import lax
from jax.experimental import pallas as pl
from jax.experimental.pallas import tpu as pltpu

# ---------------- small config consistent with ViT-B/16 structure ----------------
BATCH = 2
IN_CH = 3
IMG = 16
PATCH = 8
HIDDEN = 32
HEADS = 4
HEAD_DIM = HIDDEN // HEADS
MLP_DIM = 64
LAYERS = 2
NUM_CLASSES = 200
NUM_CLASSES_PAD = ((NUM_CLASSES + 127) // 128) * 128   # 256, lane-dense head output
LN_EPS = 1e-6

N_PATCH = (IMG // PATCH) ** 2          # 4 patches
SEQ = N_PATCH + 1                      # 5 tokens (class token first)
PATCH_DIM = IN_CH * PATCH * PATCH      # 192

PARAMS_PER_BLOCK = 12


# ---------------- in-kernel helpers (pure value math, stays in vregs) ----------------
def _layernorm(x, g, b):
    mean = jnp.mean(x, axis=-1, keepdims=True)
    var = jnp.mean(jnp.square(x - mean), axis=-1, keepdims=True)
    return (x - mean) * lax.rsqrt(var + LN_EPS) * g + b


def _gelu(x):
    # exact (erf-based) GELU, matching nn.GELU() default
    return 0.5 * x * (1.0 + lax.erf(x * (1.0 / math.sqrt(2.0))))


# ---------------- single fused kernel: one grid step == one batch element ----------------
def _vit_fused_kernel(*refs):
    x_scr = refs[-1]       # VMEM scratch (SEQ, HIDDEN) -- token activations
    out_ref = refs[-2]     # (1, NUM_CLASSES_PAD) lane-dense output row

    patches = refs[0][...]     # (N_PATCH, PATCH_DIM)
    conv_w = refs[1][...]      # (PATCH_DIM, HIDDEN)  (pre-transposed at init)
    conv_b = refs[2][...]      # (1, HIDDEN)
    cls_tok = refs[3][...]     # (1, HIDDEN)
    pos = refs[4][...]         # (SEQ, HIDDEN)

    # --- patch embedding: conv(kernel=stride=P) == matmul over flattened patches ---
    tokens = jnp.dot(patches, conv_w, preferred_element_type=jnp.float32) + conv_b
    x_scr[pl.ds(0, 1), :] = cls_tok + pos[0:1, :]
    x_scr[pl.ds(1, N_PATCH), :] = tokens + pos[1:, :]
    # TODO(synk): dropout layers are identity in eval mode and therefore omitted.

    scale = 1.0 / math.sqrt(HEAD_DIM)
    base = 5
    for l in range(LAYERS):
        (ln1_g, ln1_b, qkv_w, qkv_b, out_w, out_b,
         ln2_g, ln2_b, fc1_w, fc1_b, fc2_w, fc2_b) = (
            r[...] for r in refs[base + PARAMS_PER_BLOCK * l:
                                 base + PARAMS_PER_BLOCK * (l + 1)])

        # ---- multi-head self-attention (pre-LN) ----
        x = x_scr[...]                                   # (SEQ, D)
        y = _layernorm(x, ln1_g, ln1_b)
        qkv = jnp.dot(y, qkv_w, preferred_element_type=jnp.float32) + qkv_b  # (SEQ, 3D)

        attn_o = jnp.zeros((SEQ, HIDDEN), jnp.float32)
        for h in range(HEADS):                           # static head loop, value slices
            lo = h * HEAD_DIM
            q = qkv[:, lo:lo + HEAD_DIM] * scale         # fold 1/sqrt(dh) into q
            k = qkv[:, HIDDEN + lo:HIDDEN + lo + HEAD_DIM]
            v = qkv[:, 2 * HIDDEN + lo:2 * HIDDEN + lo + HEAD_DIM]
            s = lax.dot_general(q, k, (((1,), (1,)), ((), ())),
                                preferred_element_type=jnp.float32)   # (SEQ, SEQ)
            s = s - jnp.max(s, axis=-1, keepdims=True)
            p = jnp.exp(s)
            p = p * pl.reciprocal(jnp.sum(p, axis=-1, keepdims=True), approx=True)
            hv = jnp.dot(p, v, preferred_element_type=jnp.float32)    # (SEQ, dh)
            # fold out_proj into per-head accumulation: concat(heads) @ out_w
            attn_o = attn_o + jnp.dot(hv, out_w[lo:lo + HEAD_DIM, :],
                                      preferred_element_type=jnp.float32)
        x_scr[...] = x + attn_o + out_b                  # residual + out_proj bias

        # ---- MLP block (pre-LN, erf-GELU) ----
        x = x_scr[...]
        y = _layernorm(x, ln2_g, ln2_b)
        h1 = _gelu(jnp.dot(y, fc1_w, preferred_element_type=jnp.float32) + fc1_b)
        o2 = jnp.dot(h1, fc2_w, preferred_element_type=jnp.float32) + fc2_b
        x_scr[...] = x + o2

    # ---- final LN, class-token readout, lane-padded linear head ----
    tail = base + PARAMS_PER_BLOCK * LAYERS
    ln_f_g = refs[tail][...]
    ln_f_b = refs[tail + 1][...]
    head_w = refs[tail + 2][...]        # (HIDDEN, NUM_CLASSES_PAD), zero-padded cols
    head_b = refs[tail + 3][...]        # (1, NUM_CLASSES_PAD)
    y = _layernorm(x_scr[...], ln_f_g, ln_f_b)
    cls_vec = y[0:1, :]                 # class token row
    out_ref[...] = (jnp.dot(cls_vec, head_w, preferred_element_type=jnp.float32)
                    + head_b)


# ---------------- deterministic synthetic parameters (kernel-ready layouts) ----------------
def init_params(key):
    n_keys = 8 + LAYERS * 8
    keys = iter(jax.random.split(key, n_keys))

    def nrm(shape, std=0.02):
        return std * jax.random.normal(next(keys), shape, dtype=jnp.float32)

    conv_w = nrm((HIDDEN, IN_CH, PATCH, PATCH))          # Conv2d weight (OIHW)
    head_w = nrm((HIDDEN, NUM_CLASSES))
    params = {
        # pre-transposed / pre-flattened once at init (not per trace)
        "conv_w_t": conv_w.reshape(HIDDEN, PATCH_DIM).T,                 # (192, 32)
        "conv_b": nrm((HIDDEN,)).reshape(1, HIDDEN),
        "class_token": jnp.zeros((1, HIDDEN), jnp.float32),
        "pos_emb": nrm((1, SEQ, HIDDEN)).reshape(SEQ, HIDDEN),
        "ln_f_g": jnp.ones((1, HIDDEN), jnp.float32),
        "ln_f_b": jnp.zeros((1, HIDDEN), jnp.float32),
        # lane-dense head: zero-pad 200 -> 256 output columns
        "head_w_pad": jnp.zeros((HIDDEN, NUM_CLASSES_PAD),
                                jnp.float32).at[:, :NUM_CLASSES].set(head_w),
        "head_b_pad": jnp.zeros((1, NUM_CLASSES_PAD), jnp.float32),
        "blocks": [],
    }
    for _ in range(LAYERS):
        params["blocks"].append(
            {
                "ln1_g": jnp.ones((1, HIDDEN), jnp.float32),
                "ln1_b": jnp.zeros((1, HIDDEN), jnp.float32),
                "qkv_w": nrm((HIDDEN, 3 * HIDDEN)),      # in_proj_weight.T (q|k|v cols)
                "qkv_b": nrm((3 * HIDDEN,)).reshape(1, 3 * HIDDEN),
                "out_w": nrm((HIDDEN, HIDDEN)),          # out_proj.weight.T
                "out_b": nrm((HIDDEN,)).reshape(1, HIDDEN),
                "ln2_g": jnp.ones((1, HIDDEN), jnp.float32),
                "ln2_b": jnp.zeros((1, HIDDEN), jnp.float32),
                "fc1_w": nrm((HIDDEN, MLP_DIM)),
                "fc1_b": nrm((MLP_DIM,)).reshape(1, MLP_DIM),
                "fc2_w": nrm((MLP_DIM, HIDDEN)),
                "fc2_b": nrm((HIDDEN,)).reshape(1, HIDDEN),
            }
        )
    return params


def _flatten_params(params):
    flat = [params["conv_w_t"], params["conv_b"],
            params["class_token"], params["pos_emb"]]
    for blk in params["blocks"]:
        flat += [blk["ln1_g"], blk["ln1_b"], blk["qkv_w"], blk["qkv_b"],
                 blk["out_w"], blk["out_b"], blk["ln2_g"], blk["ln2_b"],
                 blk["fc1_w"], blk["fc1_b"], blk["fc2_w"], blk["fc2_b"]]
    flat += [params["ln_f_g"], params["ln_f_b"],
             params["head_w_pad"], params["head_b_pad"]]
    return flat


def _full_spec(shape):
    """Whole-array VMEM block, replicated across the batch grid."""
    nd = len(shape)
    return pl.BlockSpec(shape, lambda *_args, _nd=nd: (0,) * _nd)


# ---------------- forward pass: ONE pallas_call for the whole network ----------------
def vit_forward(params, x):
    B, C, H, W = x.shape
    nH, nW = H // PATCH, W // PATCH
    s0 = nH * nW

    # Patch extraction: a single tiny XLA transpose feeding the fused kernel.
    # TODO(synk): folding this 6-D transpose into the kernel would need an
    # in-kernel (C,P,P)->(C*P*P,) relayout with no measurable upside at this size.
    patches = (
        x.reshape(B, C, nH, PATCH, nW, PATCH)
        .transpose(0, 2, 4, 1, 3, 5)
        .reshape(B, s0, C * PATCH * PATCH)
    )

    flat = _flatten_params(params)
    in_specs = [pl.BlockSpec((None, s0, C * PATCH * PATCH), lambda b: (b, 0, 0))]
    in_specs += [_full_spec(p.shape) for p in flat]

    logits_pad = pl.pallas_call(
        _vit_fused_kernel,
        out_shape=jax.ShapeDtypeStruct((B, 1, NUM_CLASSES_PAD), jnp.float32),
        grid=(B,),
        in_specs=in_specs,
        out_specs=pl.BlockSpec((None, 1, NUM_CLASSES_PAD), lambda b: (b, 0, 0)),
        scratch_shapes=[pltpu.VMEM((SEQ, HIDDEN), jnp.float32)],
        compiler_params=pltpu.CompilerParams(
            dimension_semantics=("parallel",)),   # batch elements independent -> 2 TCs on v7x
    )(patches, *flat)

    return logits_pad.reshape(B, NUM_CLASSES_PAD)[:, :NUM_CLASSES]


if __name__ == "__main__":
    key = jax.random.PRNGKey(0)
    pkey, xkey = jax.random.split(key)
    params = init_params(pkey)
    x = jax.random.normal(xkey, (BATCH, IN_CH, IMG, IMG), dtype=jnp.float32)

    fwd = jax.jit(functools.partial(vit_forward, params))
    logits = fwd(x)
    jax.block_until_ready(logits)

    assert logits.shape == (BATCH, NUM_CLASSES), logits.shape
    assert bool(jnp.all(jnp.isfinite(logits)))
    print("KERNEL_OK")
</pallas_src>

<mosaic_0001>
module attributes {stable_mosaic.version = 11 : i64} {
  func.func @_vit_fused_kernel(%arg0: i32, %arg1: memref<1x4x192xf32, #tpu.memory_space<vmem>>, %arg2: memref<192x32xf32, #tpu.memory_space<vmem>>, %arg3: memref<1x32xf32, #tpu.memory_space<vmem>>, %arg4: memref<1x32xf32, #tpu.memory_space<vmem>>, %arg5: memref<5x32xf32, #tpu.memory_space<vmem>>, %arg6: memref<1x32xf32, #tpu.memory_space<vmem>>, %arg7: memref<1x32xf32, #tpu.memory_space<vmem>>, %arg8: memref<32x96xf32, #tpu.memory_space<vmem>>, %arg9: memref<1x96xf32, #tpu.memory_space<vmem>>, %arg10: memref<32x32xf32, #tpu.memory_space<vmem>>, %arg11: memref<1x32xf32, #tpu.memory_space<vmem>>, %arg12: memref<1x32xf32, #tpu.memory_space<vmem>>, %arg13: memref<1x32xf32, #tpu.memory_space<vmem>>, %arg14: memref<32x64xf32, #tpu.memory_space<vmem>>, %arg15: memref<1x64xf32, #tpu.memory_space<vmem>>, %arg16: memref<64x32xf32, #tpu.memory_space<vmem>>, %arg17: memref<1x32xf32, #tpu.memory_space<vmem>>, %arg18: memref<1x32xf32, #tpu.memory_space<vmem>>, %arg19: memref<1x32xf32, #tpu.memory_space<vmem>>, %arg20: memref<32x96xf32, #tpu.memory_space<vmem>>, %arg21: memref<1x96xf32, #tpu.memory_space<vmem>>, %arg22: memref<32x32xf32, #tpu.memory_space<vmem>>, %arg23: memref<1x32xf32, #tpu.memory_space<vmem>>, %arg24: memref<1x32xf32, #tpu.memory_space<vmem>>, %arg25: memref<1x32xf32, #tpu.memory_space<vmem>>, %arg26: memref<32x64xf32, #tpu.memory_space<vmem>>, %arg27: memref<1x64xf32, #tpu.memory_space<vmem>>, %arg28: memref<64x32xf32, #tpu.memory_space<vmem>>, %arg29: memref<1x32xf32, #tpu.memory_space<vmem>>, %arg30: memref<1x32xf32, #tpu.memory_space<vmem>>, %arg31: memref<1x32xf32, #tpu.memory_space<vmem>>, %arg32: memref<32x256xf32, #tpu.memory_space<vmem>>, %arg33: memref<1x256xf32, #tpu.memory_space<vmem>>, %arg34: memref<1x1x256xf32, #tpu.memory_space<vmem>>, %arg35: memref<5x32xf32, #tpu.memory_space<vmem>>) attributes {dimension_semantics = [#tpu.dimension_semantics<parallel>], iteration_bounds = array<i64: 2>, scalar_prefetch = 0 : i64, scratch_operands = 1 : i64, tpu.core_type = #tpu.core_type<tc>, window_params = [{transform_indices = @transform_0, window_bounds = array<i64: 1, 4, 192>}, {pipeline_mode = #tpu.pipeline_mode<synchronous>, transform_indices = @transform_1, window_bounds = array<i64: 192, 32>}, {pipeline_mode = #tpu.pipeline_mode<synchronous>, transform_indices = @transform_2, window_bounds = array<i64: 1, 32>}, {pipeline_mode = #tpu.pipeline_mode<synchronous>, transform_indices = @transform_3, window_bounds = array<i64: 1, 32>}, {pipeline_mode = #tpu.pipeline_mode<synchronous>, transform_indices = @transform_4, window_bounds = array<i64: 5, 32>}, {pipeline_mode = #tpu.pipeline_mode<synchronous>, transform_indices = @transform_5, window_bounds = array<i64: 1, 32>}, {pipeline_mode = #tpu.pipeline_mode<synchronous>, transform_indices = @transform_6, window_bounds = array<i64: 1, 32>}, {pipeline_mode = #tpu.pipeline_mode<synchronous>, transform_indices = @transform_7, window_bounds = array<i64: 32, 96>}, {pipeline_mode = #tpu.pipeline_mode<synchronous>, transform_indices = @transform_8, window_bounds = array<i64: 1, 96>}, {pipeline_mode = #tpu.pipeline_mode<synchronous>, transform_indices = @transform_9, window_bounds = array<i64: 32, 32>}, {pipeline_mode = #tpu.pipeline_mode<synchronous>, transform_indices = @transform_10, window_bounds = array<i64: 1, 32>}, {pipeline_mode = #tpu.pipeline_mode<synchronous>, transform_indices = @transform_11, window_bounds = array<i64: 1, 32>}, {pipeline_mode = #tpu.pipeline_mode<synchronous>, transform_indices = @transform_12, window_bounds = array<i64: 1, 32>}, {pipeline_mode = #tpu.pipeline_mode<synchronous>, transform_indices = @transform_13, window_bounds = array<i64: 32, 64>}, {pipeline_mode = #tpu.pipeline_mode<synchronous>, transform_indices = @transform_14, window_bounds = array<i64: 1, 64>}, {pipeline_mode = #tpu.pipeline_mode<synchronous>, transform_indices = @transform_15, window_bounds = array<i64: 64, 32>}, {pipeline_mode = #tpu.pipeline_mode<synchronous>, transform_indices = @transform_16, window_bounds = array<i64: 1, 32>}, {pipeline_mode = #tpu.pipeline_mode<synchronous>, transform_indices = @transform_17, window_bounds = array<i64: 1, 32>}, {pipeline_mode = #tpu.pipeline_mode<synchronous>, transform_indices = @transform_18, window_bounds = array<i64: 1, 32>}, {pipeline_mode = #tpu.pipeline_mode<synchronous>, transform_indices = @transform_19, window_bounds = array<i64: 32, 96>}, {pipeline_mode = #tpu.pipeline_mode<synchronous>, transform_indices = @transform_20, window_bounds = array<i64: 1, 96>}, {pipeline_mode = #tpu.pipeline_mode<synchronous>, transform_indices = @transform_21, window_bounds = array<i64: 32, 32>}, {pipeline_mode = #tpu.pipeline_mode<synchronous>, transform_indices = @transform_22, window_bounds = array<i64: 1, 32>}, {pipeline_mode = #tpu.pipeline_mode<synchronous>, transform_indices = @transform_23, window_bounds = array<i64: 1, 32>}, {pipeline_mode = #tpu.pipeline_mode<synchronous>, transform_indices = @transform_24, window_bounds = array<i64: 1, 32>}, {pipeline_mode = #tpu.pipeline_mode<synchronous>, transform_indices = @transform_25, window_bounds = array<i64: 32, 64>}, {pipeline_mode = #tpu.pipeline_mode<synchronous>, transform_indices = @transform_26, window_bounds = array<i64: 1, 64>}, {pipeline_mode = #tpu.pipeline_mode<synchronous>, transform_indices = @transform_27, window_bounds = array<i64: 64, 32>}, {pipeline_mode = #tpu.pipeline_mode<synchronous>, transform_indices = @transform_28, window_bounds = array<i64: 1, 32>}, {pipeline_mode = #tpu.pipeline_mode<synchronous>, transform_indices = @transform_29, window_bounds = array<i64: 1, 32>}, {pipeline_mode = #tpu.pipeline_mode<synchronous>, transform_indices = @transform_30, window_bounds = array<i64: 1, 32>}, {pipeline_mode = #tpu.pipeline_mode<synchronous>, transform_indices = @transform_31, window_bounds = array<i64: 32, 256>}, {pipeline_mode = #tpu.pipeline_mode<synchronous>, transform_indices = @transform_32, window_bounds = array<i64: 1, 256>}, {transform_indices = @transform_33, window_bounds = array<i64: 1, 1, 256>}]} {
    %c0 = arith.constant 0 : index
    %c0_0 = arith.constant 0 : index
    %c0_1 = arith.constant 0 : index
    %0 = vector.load %arg1[%c0, %c0_0, %c0_1] : memref<1x4x192xf32, #tpu.memory_space<vmem>>, vector<1x4x192xf32>
    %1 = vector.shape_cast %0 : vector<1x4x192xf32> to vector<4x192xf32>
    %c0_2 = arith.constant 0 : index
    %c0_3 = arith.constant 0 : index
    %2 = vector.load %arg2[%c0_2, %c0_3] : memref<192x32xf32, #tpu.memory_space<vmem>>, vector<192x32xf32>
    %c0_4 = arith.constant 0 : index
    %c0_5 = arith.constant 0 : index
    %3 = vector.load %arg3[%c0_4, %c0_5] : memref<1x32xf32, #tpu.memory_space<vmem>>, vector<1x32xf32>
    %c0_6 = arith.constant 0 : index
    %c0_7 = arith.constant 0 : index
    %4 = vector.load %arg4[%c0_6, %c0_7] : memref<1x32xf32, #tpu.memory_space<vmem>>, vector<1x32xf32>
    %c0_8 = arith.constant 0 : index
    %c0_9 = arith.constant 0 : index
    %5 = vector.load %arg5[%c0_8, %c0_9] : memref<5x32xf32, #tpu.memory_space<vmem>>, vector<5x32xf32>
    %cst = arith.constant dense<0.000000e+00> : vector<4x32xf32>
    %6 = tpu.matmul %1, %2, %cst {dimension_numbers = #tpu.dot_dimension_numbers<[1], [0], [0], [1], [0, 0, 1, 1], [], []>} : vector<4x192xf32>, vector<192x32xf32>, vector<4x32xf32> -> vector<4x32xf32>
    %7 = vector.broadcast %3 : vector<1x32xf32> to vector<4x32xf32>
    %8 = arith.addf %6, %7 : vector<4x32xf32>
    %9 = vector.extract_strided_slice %5 {offsets = [0, 0], sizes = [1, 32], strides = [1, 1]} : vector<5x32xf32> to vector<1x32xf32>
    %10 = arith.addf %4, %9 : vector<1x32xf32>
    %c0_10 = arith.constant 0 : index
    %c0_11 = arith.constant 0 : index
    %11 = vector.load %arg35[%c0_10, %c0_11] : memref<5x32xf32, #tpu.memory_space<vmem>>, vector<1x32xf32>
    tpu.vector_store %arg35[%c0_10, %c0_11], %10 {strides = array<i32>} : memref<5x32xf32, #tpu.memory_space<vmem>>, vector<1x32xf32>,
    %12 = vector.extract_strided_slice %5 {offsets = [1, 0], sizes = [4, 32], strides = [1, 1]} : vector<5x32xf32> to vector<4x32xf32>
    %13 = arith.addf %8, %12 : vector<4x32xf32>
    %c1 = arith.constant 1 : index
    %c0_12 = arith.constant 0 : index
    %14 = vector.load %arg35[%c1, %c0_12] : memref<5x32xf32, #tpu.memory_space<vmem>>, vector<4x32xf32>
    tpu.vector_store %arg35[%c1, %c0_12], %13 {strides = array<i32>} : memref<5x32xf32, #tpu.memory_space<vmem>>, vector<4x32xf32>,
    %c0_13 = arith.constant 0 : index
    %c0_14 = arith.constant 0 : index
    %15 = vector.load %arg6[%c0_13, %c0_14] : memref<1x32xf32, #tpu.memory_space<vmem>>, vector<1x32xf32>
    %c0_15 = arith.constant 0 : index
    %c0_16 = arith.constant 0 : index
    %16 = vector.load %arg7[%c0_15, %c0_16] : memref<1x32xf32, #tpu.memory_space<vmem>>, vector<1x32xf32>
    %c0_17 = arith.constant 0 : index
    %c0_18 = arith.constant 0 : index
    %17 = vector.load %arg8[%c0_17, %c0_18] : memref<32x96xf32, #tpu.memory_space<vmem>>, vector<32x96xf32>
    %c0_19 = arith.constant 0 : index
    %c0_20 = arith.constant 0 : index
    %18 = vector.load %arg9[%c0_19, %c0_20] : memref<1x96xf32, #tpu.memory_space<vmem>>, vector<1x96xf32>
    %c0_21 = arith.constant 0 : index
    %c0_22 = arith.constant 0 : index
    %19 = vector.load %arg10[%c0_21, %c0_22] : memref<32x32xf32, #tpu.memory_space<vmem>>, vector<32x32xf32>
    %c0_23 = arith.constant 0 : index
    %c0_24 = arith.constant 0 : index
    %20 = vector.load %arg11[%c0_23, %c0_24] : memref<1x32xf32, #tpu.memory_space<vmem>>, vector<1x32xf32>
    %c0_25 = arith.constant 0 : index
    %c0_26 = arith.constant 0 : index
    %21 = vector.load %arg12[%c0_25, %c0_26] : memref<1x32xf32, #tpu.memory_space<vmem>>, vector<1x32xf32>
    %c0_27 = arith.constant 0 : index
    %c0_28 = arith.constant 0 : index
    %22 = vector.load %arg13[%c0_27, %c0_28] : memref<1x32xf32, #tpu.memory_space<vmem>>, vector<1x32xf32>
    %c0_29 = arith.constant 0 : index
    %c0_30 = arith.constant 0 : index
    %23 = vector.load %arg14[%c0_29, %c0_30] : memref<32x64xf32, #tpu.memory_space<vmem>>, vector<32x64xf32>
    %c0_31 = arith.constant 0 : index
    %c0_32 = arith.constant 0 : index
    %24 = vector.load %arg15[%c0_31, %c0_32] : memref<1x64xf32, #tpu.memory_space<vmem>>, vector<1x64xf32>
    %c0_33 = arith.constant 0 : index
    %c0_34 = arith.constant 0 : index
    %25 = vector.load %arg16[%c0_33, %c0_34] : memref<64x32xf32, #tpu.memory_space<vmem>>, vector<64x32xf32>
    %c0_35 = arith.constant 0 : index
    %c0_36 = arith.constant 0 : index
    %26 = vector.load %arg17[%c0_35, %c0_36] : memref<1x32xf32, #tpu.memory_space<vmem>>, vector<1x32xf32>
    %c0_37 = arith.constant 0 : index
    %c0_38 = arith.constant 0 : index
    %27 = vector.load %arg35[%c0_37, %c0_38] : memref<5x32xf32, #tpu.memory_space<vmem>>, vector<5x32xf32>
    %cst_39 = arith.constant dense<0.000000e+00> : vector<5xf32>
    %28 = vector.multi_reduction <add>, %27, %cst_39 [1] : vector<5x32xf32> to vector<5xf32>
    %29 = vector.shape_cast %28 : vector<5xf32> to vector<5x1xf32>
    %cst_40 = arith.constant 3.200000e+01 : f32
    %30 = vector.broadcast %cst_40 : f32 to vector<5x1xf32>
    %31 = arith.divf %29, %30 : vector<5x1xf32>
    %32 = vector.broadcast %31 : vector<5x1xf32> to vector<5x32xf32>
    %33 = arith.subf %27, %32 : vector<5x32xf32>
    %34 = arith.mulf %33, %33 : vector<5x32xf32>
    %cst_41 = arith.constant dense<0.000000e+00> : vector<5xf32>
    %35 = vector.multi_reduction <add>, %34, %cst_41 [1] : vector<5x32xf32> to vector<5xf32>
    %36 = vector.shape_cast %35 : vector<5xf32> to vector<5x1xf32>
    %cst_42 = arith.constant 3.200000e+01 : f32
    %37 = vector.broadcast %cst_42 : f32 to vector<5x1xf32>
    %38 = arith.divf %36, %37 : vector<5x1xf32>
    %39 = vector.broadcast %31 : vector<5x1xf32> to vector<5x32xf32>
    %40 = arith.subf %27, %39 : vector<5x32xf32>
    %cst_43 = arith.constant 9.99999997E-7 : f32
    %41 = vector.broadcast %cst_43 : f32 to vector<5x1xf32>
    %42 = arith.addf %38, %41 : vector<5x1xf32>
    %43 = math.rsqrt %42 : vector<5x1xf32>
    %44 = vector.broadcast %43 : vector<5x1xf32> to vector<5x32xf32>
    %45 = arith.mulf %40, %44 : vector<5x32xf32>
    %46 = vector.broadcast %15 : vector<1x32xf32> to vector<5x32xf32>
    %47 = arith.mulf %45, %46 : vector<5x32xf32>
    %48 = vector.broadcast %16 : vector<1x32xf32> to vector<5x32xf32>
    %49 = arith.addf %47, %48 : vector<5x32xf32>
    %cst_44 = arith.constant dense<0.000000e+00> : vector<5x96xf32>
    %50 = tpu.matmul %49, %17, %cst_44 {dimension_numbers = #tpu.dot_dimension_numbers<[1], [0], [0], [1], [0, 0, 1, 1], [], []>} : vector<5x32xf32>, vector<32x96xf32>, vector<5x96xf32> -> vector<5x96xf32>
    %51 = vector.broadcast %18 : vector<1x96xf32> to vector<5x96xf32>
    %52 = arith.addf %50, %51 : vector<5x96xf32>
    %cst_45 = arith.constant 0.000000e+00 : f32
    %53 = vector.broadcast %cst_45 : f32 to vector<5x32xf32>
    %54 = vector.extract_strided_slice %52 {offsets = [0, 0], sizes = [5, 8], strides = [1, 1]} : vector<5x96xf32> to vector<5x8xf32>
    %cst_46 = arith.constant 0.353553385 : f32
    %55 = vector.broadcast %cst_46 : f32 to vector<5x8xf32>
    %56 = arith.mulf %54, %55 : vector<5x8xf32>
    %57 = vector.extract_strided_slice %52 {offsets = [0, 32], sizes = [5, 8], strides = [1, 1]} : vector<5x96xf32> to vector<5x8xf32>
    %58 = vector.extract_strided_slice %52 {offsets = [0, 64], sizes = [5, 8], strides = [1, 1]} : vector<5x96xf32> to vector<5x8xf32>
    %cst_47 = arith.constant dense<0.000000e+00> : vector<5x5xf32>
    %59 = tpu.matmul %56, %57, %cst_47 {dimension_numbers = #tpu.dot_dimension_numbers<[1], [1], [0], [0], [0, 0, 1, 0], [], []>} : vector<5x8xf32>, vector<5x8xf32>, vector<5x5xf32> -> vector<5x5xf32>
    %cst_48 = arith.constant dense<0xFF800000> : vector<5xf32>
    %60 = vector.multi_reduction <maximumf>, %59, %cst_48 [1] : vector<5x5xf32> to vector<5xf32>
    %61 = vector.shape_cast %60 : vector<5xf32> to vector<5x1xf32>
    %62 = vector.broadcast %61 : vector<5x1xf32> to vector<5x5xf32>
    %63 = arith.subf %59, %62 : vector<5x5xf32>
    %64 = math.exp %63 : vector<5x5xf32>
    %cst_49 = arith.constant dense<0.000000e+00> : vector<5xf32>
    %65 = vector.multi_reduction <add>, %64, %cst_49 [1] : vector<5x5xf32> to vector<5xf32>
    %66 = vector.shape_cast %65 : vector<5xf32> to vector<5x1xf32>
    %67 = tpu.reciprocal %66 {approx = true} : vector<5x1xf32> -> vector<5x1xf32>
    %68 = vector.broadcast %67 : vector<5x1xf32> to vector<5x5xf32>
    %69 = arith.mulf %64, %68 : vector<5x5xf32>
    %cst_50 = arith.constant dense<0.000000e+00> : vector<5x8xf32>
    %70 = tpu.matmul %69, %58, %cst_50 {dimension_numbers = #tpu.dot_dimension_numbers<[1], [0], [0], [1], [0, 0, 1, 1], [], []>} : vector<5x5xf32>, vector<5x8xf32>, vector<5x8xf32> -> vector<5x8xf32>
    %71 = vector.extract_strided_slice %19 {offsets = [0, 0], sizes = [8, 32], strides = [1, 1]} : vector<32x32xf32> to vector<8x32xf32>
    %cst_51 = arith.constant dense<0.000000e+00> : vector<5x32xf32>
    %72 = tpu.matmul %70, %71, %cst_51 {dimension_numbers = #tpu.dot_dimension_numbers<[1], [0], [0], [1], [0, 0, 1, 1], [], []>} : vector<5x8xf32>, vector<8x32xf32>, vector<5x32xf32> -> vector<5x32xf32>
    %73 = arith.addf %53, %72 : vector<5x32xf32>
    %74 = vector.extract_strided_slice %52 {offsets = [0, 8], sizes = [5, 8], strides = [1, 1]} : vector<5x96xf32> to vector<5x8xf32>
    %cst_52 = arith.constant 0.353553385 : f32
    %75 = vector.broadcast %cst_52 : f32 to vector<5x8xf32>
    %76 = arith.mulf %74, %75 : vector<5x8xf32>
    %77 = vector.extract_strided_slice %52 {offsets = [0, 40], sizes = [5, 8], strides = [1, 1]} : vector<5x96xf32> to vector<5x8xf32>
    %78 = vector.extract_strided_slice %52 {offsets = [0, 72], sizes = [5, 8], strides = [1, 1]} : vector<5x96xf32> to vector<5x8xf32>
    %cst_53 = arith.constant dense<0.000000e+00> : vector<5x5xf32>
    %79 = tpu.matmul %76, %77, %cst_53 {dimension_numbers = #tpu.dot_dimension_numbers<[1], [1], [0], [0], [0, 0, 1, 0], [], []>} : vector<5x8xf32>, vector<5x8xf32>, vector<5x5xf32> -> vector<5x5xf32>
    %cst_54 = arith.constant dense<0xFF800000> : vector<5xf32>
    %80 = vector.multi_reduction <maximumf>, %79, %cst_54 [1] : vector<5x5xf32> to vector<5xf32>
    %81 = vector.shape_cast %80 : vector<5xf32> to vector<5x1xf32>
    %82 = vector.broadcast %81 : vector<5x1xf32> to vector<5x5xf32>
    %83 = arith.subf %79, %82 : vector<5x5xf32>
    %84 = math.exp %83 : vector<5x5xf32>
    %cst_55 = arith.constant dense<0.000000e+00> : vector<5xf32>
    %85 = vector.multi_reduction <add>, %84, %cst_55 [1] : vector<5x5xf32> to vector<5xf32>
    %86 = vector.shape_cast %85 : vector<5xf32> to vector<5x1xf32>
    %87 = tpu.reciprocal %86 {approx = true} : vector<5x1xf32> -> vector<5x1xf32>
    %88 = vector.broadcast %87 : vector<5x1xf32> to vector<5x5xf32>
    %89 = arith.mulf %84, %88 : vector<5x5xf32>
    %cst_56 = arith.constant dense<0.000000e+00> : vector<5x8xf32>
    %90 = tpu.matmul %89, %78, %cst_56 {dimension_numbers = #tpu.dot_dimension_numbers<[1], [0], [0], [1], [0, 0, 1, 1], [], []>} : vector<5x5xf32>, vector<5x8xf32>, vector<5x8xf32> -> vector<5x8xf32>
    %91 = vector.extract_strided_slice %19 {offsets = [8, 0], sizes = [8, 32], strides = [1, 1]} : vector<32x32xf32> to vector<8x32xf32>
    %cst_57 = arith.constant dense<0.000000e+00> : vector<5x32xf32>
    %92 = tpu.matmul %90, %91, %cst_57 {dimension_numbers = #tpu.dot_dimension_numbers<[1], [0], [0], [1], [0, 0, 1, 1], [], []>} : vector<5x8xf32>, vector<8x32xf32>, vector<5x32xf32> -> vector<5x32xf32>
    %93 = arith.addf %73, %92 : vector<5x32xf32>
    %94 = vector.extract_strided_slice %52 {offsets = [0, 16], sizes = [5, 8], strides = [1, 1]} : vector<5x96xf32> to vector<5x8xf32>
    %cst_58 = arith.constant 0.353553385 : f32
    %95 = vector.broadcast %cst_58 : f32 to vector<5x8xf32>
    %96 = arith.mulf %94, %95 : vector<5x8xf32>
    %97 = vector.extract_strided_slice %52 {offsets = [0, 48], sizes = [5, 8], strides = [1, 1]} : vector<5x96xf32> to vector<5x8xf32>
    %98 = vector.extract_strided_slice %52 {offsets = [0, 80], sizes = [5, 8], strides = [1, 1]} : vector<5x96xf32> to vector<5x8xf32>
    %cst_59 = arith.constant dense<0.000000e+00> : vector<5x5xf32>
    %99 = tpu.matmul %96, %97, %cst_59 {dimension_numbers = #tpu.dot_dimension_numbers<[1], [1], [0], [0], [0, 0, 1, 0], [], []>} : vector<5x8xf32>, vector<5x8xf32>, vector<5x5xf32> -> vector<5x5xf32>
    %cst_60 = arith.constant dense<0xFF800000> : vector<5xf32>
    %100 = vector.multi_reduction <maximumf>, %99, %cst_60 [1] : vector<5x5xf32> to vector<5xf32>
    %101 = vector.shape_cast %100 : vector<5xf32> to vector<5x1xf32>
    %102 = vector.broadcast %101 : vector<5x1xf32> to vector<5x5xf32>
    %103 = arith.subf %99, %102 : vector<5x5xf32>
    %104 = math.exp %103 : vector<5x5xf32>
    %cst_61 = arith.constant dense<0.000000e+00> : vector<5xf32>
    %105 = vector.multi_reduction <add>, %104, %cst_61 [1] : vector<5x5xf32> to vector<5xf32>
    %106 = vector.shape_cast %105 : vector<5xf32> to vector<5x1xf32>
    %107 = tpu.reciprocal %106 {approx = true} : vector<5x1xf32> -> vector<5x1xf32>
    %108 = vector.broadcast %107 : vector<5x1xf32> to vector<5x5xf32>
    %109 = arith.mulf %104, %108 : vector<5x5xf32>
    %cst_62 = arith.constant dense<0.000000e+00> : vector<5x8xf32>
    %110 = tpu.matmul %109, %98, %cst_62 {dimension_numbers = #tpu.dot_dimension_numbers<[1], [0], [0], [1], [0, 0, 1, 1], [], []>} : vector<5x5xf32>, vector<5x8xf32>, vector<5x8xf32> -> vector<5x8xf32>
    %111 = vector.extract_strided_slice %19 {offsets = [16, 0], sizes = [8, 32], strides = [1, 1]} : vector<32x32xf32> to vector<8x32xf32>
    %cst_63 = arith.constant dense<0.000000e+00> : vector<5x32xf32>
    %112 = tpu.matmul %110, %111, %cst_63 {dimension_numbers = #tpu.dot_dimension_numbers<[1], [0], [0], [1], [0, 0, 1, 1], [], []>} : vector<5x8xf32>, vector<8x32xf32>, vector<5x32xf32> -> vector<5x32xf32>
    %113 = arith.addf %93, %112 : vector<5x32xf32>
    %114 = vector.extract_strided_slice %52 {offsets = [0, 24], sizes = [5, 8], strides = [1, 1]} : vector<5x96xf32> to vector<5x8xf32>
    %cst_64 = arith.constant 0.353553385 : f32
    %115 = vector.broadcast %cst_64 : f32 to vector<5x8xf32>
    %116 = arith.mulf %114, %115 : vector<5x8xf32>
    %117 = vector.extract_strided_slice %52 {offsets = [0, 56], sizes = [5, 8], strides = [1, 1]} : vector<5x96xf32> to vector<5x8xf32>
    %118 = vector.extract_strided_slice %52 {offsets = [0, 88], sizes = [5, 8], strides = [1, 1]} : vector<5x96xf32> to vector<5x8xf32>
    %cst_65 = arith.constant dense<0.000000e+00> : vector<5x5xf32>
    %119 = tpu.matmul %116, %117, %cst_65 {dimension_numbers = #tpu.dot_dimension_numbers<[1], [1], [0], [0], [0, 0, 1, 0], [], []>} : vector<5x8xf32>, vector<5x8xf32>, vector<5x5xf32> -> vector<5x5xf32>
    %cst_66 = arith.constant dense<0xFF800000> : vector<5xf32>
    %120 = vector.multi_reduction <maximumf>, %119, %cst_66 [1] : vector<5x5xf32> to vector<5xf32>
    %121 = vector.shape_cast %120 : vector<5xf32> to vector<5x1xf32>
    %122 = vector.broadcast %121 : vector<5x1xf32> to vector<5x5xf32>
    %123 = arith.subf %119, %122 : vector<5x5xf32>
    %124 = math.exp %123 : vector<5x5xf32>
    %cst_67 = arith.constant dense<0.000000e+00> : vector<5xf32>
    %125 = vector.multi_reduction <add>, %124, %cst_67 [1] : vector<5x5xf32> to vector<5xf32>
    %126 = vector.shape_cast %125 : vector<5xf32> to vector<5x1xf32>
    %127 = tpu.reciprocal %126 {approx = true} : vector<5x1xf32> -> vector<5x1xf32>
    %128 = vector.broadcast %127 : vector<5x1xf32> to vector<5x5xf32>
    %129 = arith.mulf %124, %128 : vector<5x5xf32>
    %cst_68 = arith.constant dense<0.000000e+00> : vector<5x8xf32>
    %130 = tpu.matmul %129, %118, %cst_68 {dimension_numbers = #tpu.dot_dimension_numbers<[1], [0], [0], [1], [0, 0, 1, 1], [], []>} : vector<5x5xf32>, vector<5x8xf32>, vector<5x8xf32> -> vector<5x8xf32>
    %131 = vector.extract_strided_slice %19 {offsets = [24, 0], sizes = [8, 32], strides = [1, 1]} : vector<32x32xf32> to vector<8x32xf32>
    %cst_69 = arith.constant dense<0.000000e+00> : vector<5x32xf32>
    %132 = tpu.matmul %130, %131, %cst_69 {dimension_numbers = #tpu.dot_dimension_numbers<[1], [0], [0], [1], [0, 0, 1, 1], [], []>} : vector<5x8xf32>, vector<8x32xf32>, vector<5x32xf32> -> vector<5x32xf32>
    %133 = arith.addf %113, %132 : vector<5x32xf32>
    %134 = arith.addf %27, %133 : vector<5x32xf32>
    %135 = vector.broadcast %20 : vector<1x32xf32> to vector<5x32xf32>
    %136 = arith.addf %134, %135 : vector<5x32xf32>
    %c0_70 = arith.constant 0 : index
    %c0_71 = arith.constant 0 : index
    %137 = vector.load %arg35[%c0_70, %c0_71] : memref<5x32xf32, #tpu.memory_space<vmem>>, vector<5x32xf32>
    tpu.vector_store %arg35[%c0_70, %c0_71], %136 {strides = array<i32>} : memref<5x32xf32, #tpu.memory_space<vmem>>, vector<5x32xf32>,
    %c0_72 = arith.constant 0 : index
    %c0_73 = arith.constant 0 : index
    %138 = vector.load %arg35[%c0_72, %c0_73] : memref<5x32xf32, #tpu.memory_space<vmem>>, vector<5x32xf32>
    %cst_74 = arith.constant dense<0.000000e+00> : vector<5xf32>
    %139 = vector.multi_reduction <add>, %138, %cst_74 [1] : vector<5x32xf32> to vector<5xf32>
    %140 = vector.shape_cast %139 : vector<5xf32> to vector<5x1xf32>
    %cst_75 = arith.constant 3.200000e+01 : f32
    %141 = vector.broadcast %cst_75 : f32 to vector<5x1xf32>
    %142 = arith.divf %140, %141 : vector<5x1xf32>
    %143 = vector.broadcast %142 : vector<5x1xf32> to vector<5x32xf32>
    %144 = arith.subf %138, %143 : vector<5x32xf32>
    %145 = arith.mulf %144, %144 : vector<5x32xf32>
    %cst_76 = arith.constant dense<0.000000e+00> : vector<5xf32>
    %146 = vector.multi_reduction <add>, %145, %cst_76 [1] : vector<5x32xf32> to vector<5xf32>
    %147 = vector.shape_cast %146 : vector<5xf32> to vector<5x1xf32>
    %cst_77 = arith.constant 3.200000e+01 : f32
    %148 = vector.broadcast %cst_77 : f32 to vector<5x1xf32>
    %149 = arith.divf %147, %148 : vector<5x1xf32>
    %150 = vector.broadcast %142 : vector<5x1xf32> to vector<5x32xf32>
    %151 = arith.subf %138, %150 : vector<5x32xf32>
    %cst_78 = arith.constant 9.99999997E-7 : f32
    %152 = vector.broadcast %cst_78 : f32 to vector<5x1xf32>
    %153 = arith.addf %149, %152 : vector<5x1xf32>
    %154 = math.rsqrt %153 : vector<5x1xf32>
    %155 = vector.broadcast %154 : vector<5x1xf32> to vector<5x32xf32>
    %156 = arith.mulf %151, %155 : vector<5x32xf32>
    %157 = vector.broadcast %21 : vector<1x32xf32> to vector<5x32xf32>
    %158 = arith.mulf %156, %157 : vector<5x32xf32>
    %159 = vector.broadcast %22 : vector<1x32xf32> to vector<5x32xf32>
    %160 = arith.addf %158, %159 : vector<5x32xf32>
    %cst_79 = arith.constant dense<0.000000e+00> : vector<5x64xf32>
    %161 = tpu.matmul %160, %23, %cst_79 {dimension_numbers = #tpu.dot_dimension_numbers<[1], [0], [0], [1], [0, 0, 1, 1], [], []>} : vector<5x32xf32>, vector<32x64xf32>, vector<5x64xf32> -> vector<5x64xf32>
    %162 = vector.broadcast %24 : vector<1x64xf32> to vector<5x64xf32>
    %163 = arith.addf %161, %162 : vector<5x64xf32>
    %cst_80 = arith.constant 5.000000e-01 : f32
    %164 = vector.broadcast %cst_80 : f32 to vector<5x64xf32>
    %165 = arith.mulf %164, %163 : vector<5x64xf32>
    %cst_81 = arith.constant 0.707106769 : f32
    %166 = vector.broadcast %cst_81 : f32 to vector<5x64xf32>
    %167 = arith.mulf %163, %166 : vector<5x64xf32>
    %168 = math.erf %167 : vector<5x64xf32>
    %cst_82 = arith.constant 1.000000e+00 : f32
    %169 = vector.broadcast %cst_82 : f32 to vector<5x64xf32>
    %170 = arith.addf %169, %168 : vector<5x64xf32>
    %171 = arith.mulf %165, %170 : vector<5x64xf32>
    %cst_83 = arith.constant dense<0.000000e+00> : vector<5x32xf32>
    %172 = tpu.matmul %171, %25, %cst_83 {dimension_numbers = #tpu.dot_dimension_numbers<[1], [0], [0], [1], [0, 0, 1, 1], [], []>} : vector<5x64xf32>, vector<64x32xf32>, vector<5x32xf32> -> vector<5x32xf32>
    %173 = vector.broadcast %26 : vector<1x32xf32> to vector<5x32xf32>
    %174 = arith.addf %172, %173 : vector<5x32xf32>
    %175 = arith.addf %138, %174 : vector<5x32xf32>
    %c0_84 = arith.constant 0 : index
    %c0_85 = arith.constant 0 : index
    %176 = vector.load %arg35[%c0_84, %c0_85] : memref<5x32xf32, #tpu.memory_space<vmem>>, vector<5x32xf32>
    tpu.vector_store %arg35[%c0_84, %c0_85], %175 {strides = array<i32>} : memref<5x32xf32, #tpu.memory_space<vmem>>, vector<5x32xf32>,
    %c0_86 = arith.constant 0 : index
    %c0_87 = arith.constant 0 : index
    %177 = vector.load %arg18[%c0_86, %c0_87] : memref<1x32xf32, #tpu.memory_space<vmem>>, vector<1x32xf32>
    %c0_88 = arith.constant 0 : index
    %c0_89 = arith.constant 0 : index
    %178 = vector.load %arg19[%c0_88, %c0_89] : memref<1x32xf32, #tpu.memory_space<vmem>>, vector<1x32xf32>
    %c0_90 = arith.constant 0 : index
    %c0_91 = arith.constant 0 : index
    %179 = vector.load %arg20[%c0_90, %c0_91] : memref<32x96xf32, #tpu.memory_space<vmem>>, vector<32x96xf32>
    %c0_92 = arith.constant 0 : index
    %c0_93 = arith.constant 0 : index
    %180 = vector.load %arg21[%c0_92, %c0_93] : memref<1x96xf32, #tpu.memory_space<vmem>>, vector<1x96xf32>
    %c0_94 = arith.constant 0 : index
    %c0_95 = arith.constant 0 : index
    %181 = vector.load %arg22[%c0_94, %c0_95] : memref<32x32xf32, #tpu.memory_space<vmem>>, vector<32x32xf32>
    %c0_96 = arith.constant 0 : index
    %c0_97 = arith.constant 0 : index
    %182 = vector.load %arg23[%c0_96, %c0_97] : memref<1x32xf32, #tpu.memory_space<vmem>>, vector<1x32xf32>
    %c0_98 = arith.constant 0 : index
    %c0_99 = arith.constant 0 : index
    %183 = vector.load %arg24[%c0_98, %c0_99] : memref<1x32xf32, #tpu.memory_space<vmem>>, vector<1x32xf32>
    %c0_100 = arith.constant 0 : index
    %c0_101 = arith.constant 0 : index
    %184 = vector.load %arg25[%c0_100, %c0_101] : memref<1x32xf32, #tpu.memory_space<vmem>>, vector<1x32xf32>
    %c0_102 = arith.constant 0 : index
    %c0_103 = arith.constant 0 : index
    %185 = vector.load %arg26[%c0_102, %c0_103] : memref<32x64xf32, #tpu.memory_space<vmem>>, vector<32x64xf32>
    %c0_104 = arith.constant 0 : index
    %c0_105 = arith.constant 0 : index
    %186 = vector.load %arg27[%c0_104, %c0_105] : memref<1x64xf32, #tpu.memory_space<vmem>>, vector<1x64xf32>
    %c0_106 = arith.constant 0 : index
    %c0_107 = arith.constant 0 : index
    %187 = vector.load %arg28[%c0_106, %c0_107] : memref<64x32xf32, #tpu.memory_space<vmem>>, vector<64x32xf32>
    %c0_108 = arith.constant 0 : index
    %c0_109 = arith.constant 0 : index
    %188 = vector.load %arg29[%c0_108, %c0_109] : memref<1x32xf32, #tpu.memory_space<vmem>>, vector<1x32xf32>
    %c0_110 = arith.constant 0 : index
    %c0_111 = arith.constant 0 : index
    %189 = vector.load %arg35[%c0_110, %c0_111] : memref<5x32xf32, #tpu.memory_space<vmem>>, vector<5x32xf32>
    %cst_112 = arith.constant dense<0.000000e+00> : vector<5xf32>
    %190 = vector.multi_reduction <add>, %189, %cst_112 [1] : vector<5x32xf32> to vector<5xf32>
    %191 = vector.shape_cast %190 : vector<5xf32> to vector<5x1xf32>
    %cst_113 = arith.constant 3.200000e+01 : f32
    %192 = vector.broadcast %cst_113 : f32 to vector<5x1xf32>
    %193 = arith.divf %191, %192 : vector<5x1xf32>
    %194 = vector.broadcast %193 : vector<5x1xf32> to vector<5x32xf32>
    %195 = arith.subf %189, %194 : vector<5x32xf32>
    %196 = arith.mulf %195, %195 : vector<5x32xf32>
    %cst_114 = arith.constant dense<0.000000e+00> : vector<5xf32>
    %197 = vector.multi_reduction <add>, %196, %cst_114 [1] : vector<5x32xf32> to vector<5xf32>
    %198 = vector.shape_cast %197 : vector<5xf32> to vector<5x1xf32>
    %cst_115 = arith.constant 3.200000e+01 : f32
    %199 = vector.broadcast %cst_115 : f32 to vector<5x1xf32>
    %200 = arith.divf %198, %199 : vector<5x1xf32>
    %201 = vector.broadcast %193 : vector<5x1xf32> to vector<5x32xf32>
    %202 = arith.subf %189, %201 : vector<5x32xf32>
    %cst_116 = arith.constant 9.99999997E-7 : f32
    %203 = vector.broadcast %cst_116 : f32 to vector<5x1xf32>
    %204 = arith.addf %200, %203 : vector<5x1xf32>
    %205 = math.rsqrt %204 : vector<5x1xf32>
    %206 = vector.broadcast %205 : vector<5x1xf32> to vector<5x32xf32>
    %207 = arith.mulf %202, %206 : vector<5x32xf32>
    %208 = vector.broadcast %177 : vector<1x32xf32> to vector<5x32xf32>
    %209 = arith.mulf %207, %208 : vector<5x32xf32>
    %210 = vector.broadcast %178 : vector<1x32xf32> to vector<5x32xf32>
    %211 = arith.addf %209, %210 : vector<5x32xf32>
    %cst_117 = arith.constant dense<0.000000e+00> : vector<5x96xf32>
    %212 = tpu.matmul %211, %179, %cst_117 {dimension_numbers = #tpu.dot_dimension_numbers<[1], [0], [0], [1], [0, 0, 1, 1], [], []>} : vector<5x32xf32>, vector<32x96xf32>, vector<5x96xf32> -> vector<5x96xf32>
    %213 = vector.broadcast %180 : vector<1x96xf32> to vector<5x96xf32>
    %214 = arith.addf %212, %213 : vector<5x96xf32>
    %cst_118 = arith.constant 0.000000e+00 : f32
    %215 = vector.broadcast %cst_118 : f32 to vector<5x32xf32>
    %216 = vector.extract_strided_slice %214 {offsets = [0, 0], sizes = [5, 8], strides = [1, 1]} : vector<5x96xf32> to vector<5x8xf32>
    %cst_119 = arith.constant 0.353553385 : f32
    %217 = vector.broadcast %cst_119 : f32 to vector<5x8xf32>
    %218 = arith.mulf %216, %217 : vector<5x8xf32>
    %219 = vector.extract_strided_slice %214 {offsets = [0, 32], sizes = [5, 8], strides = [1, 1]} : vector<5x96xf32> to vector<5x8xf32>
    %220 = vector.extract_strided_slice %214 {offsets = [0, 64], sizes = [5, 8], strides = [1, 1]} : vector<5x96xf32> to vector<5x8xf32>
    %cst_120 = arith.constant dense<0.000000e+00> : vector<5x5xf32>
    %221 = tpu.matmul %218, %219, %cst_120 {dimension_numbers = #tpu.dot_dimension_numbers<[1], [1], [0], [0], [0, 0, 1, 0], [], []>} : vector<5x8xf32>, vector<5x8xf32>, vector<5x5xf32> -> vector<5x5xf32>
    %cst_121 = arith.constant dense<0xFF800000> : vector<5xf32>
    %222 = vector.multi_reduction <maximumf>, %221, %cst_121 [1] : vector<5x5xf32> to vector<5xf32>
    %223 = vector.shape_cast %222 : vector<5xf32> to vector<5x1xf32>
    %224 = vector.broadcast %223 : vector<5x1xf32> to vector<5x5xf32>
    %225 = arith.subf %221, %224 : vector<5x5xf32>
    %226 = math.exp %225 : vector<5x5xf32>
    %cst_122 = arith.constant dense<0.000000e+00> : vector<5xf32>
    %227 = vector.multi_reduction <add>, %226, %cst_122 [1] : vector<5x5xf32> to vector<5xf32>
    %228 = vector.shape_cast %227 : vector<5xf32> to vector<5x1xf32>
    %229 = tpu.reciprocal %228 {approx = true} : vector<5x1xf32> -> vector<5x1xf32>
    %230 = vector.broadcast %229 : vector<5x1xf32> to vector<5x5xf32>
    %231 = arith.mulf %226, %230 : vector<5x5xf32>
    %cst_123 = arith.constant dense<0.000000e+00> : vector<5x8xf32>
    %232 = tpu.matmul %231, %220, %cst_123 {dimension_numbers = #tpu.dot_dimension_numbers<[1], [0], [0], [1], [0, 0, 1, 1], [], []>} : vector<5x5xf32>, vector<5x8xf32>, vector<5x8xf32> -> vector<5x8xf32>
    %233 = vector.extract_strided_slice %181 {offsets = [0, 0], sizes = [8, 32], strides = [1, 1]} : vector<32x32xf32> to vector<8x32xf32>
    %cst_124 = arith.constant dense<0.000000e+00> : vector<5x32xf32>
    %234 = tpu.matmul %232, %233, %cst_124 {dimension_numbers = #tpu.dot_dimension_numbers<[1], [0], [0], [1], [0, 0, 1, 1], [], []>} : vector<5x8xf32>, vector<8x32xf32>, vector<5x32xf32> -> vector<5x32xf32>
    %235 = arith.addf %215, %234 : vector<5x32xf32>
    %236 = vector.extract_strided_slice %214 {offsets = [0, 8], sizes = [5, 8], strides = [1, 1]} : vector<5x96xf32> to vector<5x8xf32>
    %cst_125 = arith.constant 0.353553385 : f32
    %237 = vector.broadcast %cst_125 : f32 to vector<5x8xf32>
    %238 = arith.mulf %236, %237 : vector<5x8xf32>
    %239 = vector.extract_strided_slice %214 {offsets = [0, 40], sizes = [5, 8], strides = [1, 1]} : vector<5x96xf32> to vector<5x8xf32>
    %240 = vector.extract_strided_slice %214 {offsets = [0, 72], sizes = [5, 8], strides = [1, 1]} : vector<5x96xf32> to vector<5x8xf32>
    %cst_126 = arith.constant dense<0.000000e+00> : vector<5x5xf32>
    %241 = tpu.matmul %238, %239, %cst_126 {dimension_numbers = #tpu.dot_dimension_numbers<[1], [1], [0], [0], [0, 0, 1, 0], [], []>} : vector<5x8xf32>, vector<5x8xf32>, vector<5x5xf32> -> vector<5x5xf32>
    %cst_127 = arith.constant dense<0xFF800000> : vector<5xf32>
    %242 = vector.multi_reduction <maximumf>, %241, %cst_127 [1] : vector<5x5xf32> to vector<5xf32>
    %243 = vector.shape_cast %242 : vector<5xf32> to vector<5x1xf32>
    %244 = vector.broadcast %243 : vector<5x1xf32> to vector<5x5xf32>
    %245 = arith.subf %241, %244 : vector<5x5xf32>
    %246 = math.exp %245 : vector<5x5xf32>
    %cst_128 = arith.constant dense<0.000000e+00> : vector<5xf32>
    %247 = vector.multi_reduction <add>, %246, %cst_128 [1] : vector<5x5xf32> to vector<5xf32>
    %248 = vector.shape_cast %247 : vector<5xf32> to vector<5x1xf32>
    %249 = tpu.reciprocal %248 {approx = true} : vector<5x1xf32> -> vector<5x1xf32>
    %250 = vector.broadcast %249 : vector<5x1xf32> to vector<5x5xf32>
    %251 = arith.mulf %246, %250 : vector<5x5xf32>
    %cst_129 = arith.constant dense<0.000000e+00> : vector<5x8xf32>
    %252 = tpu.matmul %251, %240, %cst_129 {dimension_numbers = #tpu.dot_dimension_numbers<[1], [0], [0], [1], [0, 0, 1, 1], [], []>} : vector<5x5xf32>, vector<5x8xf32>, vector<5x8xf32> -> vector<5x8xf32>
    %253 = vector.extract_strided_slice %181 {offsets = [8, 0], sizes = [8, 32], strides = [1, 1]} : vector<32x32xf32> to vector<8x32xf32>
    %cst_130 = arith.constant dense<0.000000e+00> : vector<5x32xf32>
    %254 = tpu.matmul %252, %253, %cst_130 {dimension_numbers = #tpu.dot_dimension_numbers<[1], [0], [0], [1], [0, 0, 1, 1], [], []>} : vector<5x8xf32>, vector<8x32xf32>, vector<5x32xf32> -> vector<5x32xf32>
    %255 = arith.addf %235, %254 : vector<5x32xf32>
    %256 = vector.extract_strided_slice %214 {offsets = [0, 16], sizes = [5, 8], strides = [1, 1]} : vector<5x96xf32> to vector<5x8xf32>
    %cst_131 = arith.constant 0.353553385 : f32
    %257 = vector.broadcast %cst_131 : f32 to vector<5x8xf32>
    %258 = arith.mulf %256, %257 : vector<5x8xf32>
    %259 = vector.extract_strided_slice %214 {offsets = [0, 48], sizes = [5, 8], strides = [1, 1]} : vector<5x96xf32> to vector<5x8xf32>
    %260 = vector.extract_strided_slice %214 {offsets = [0, 80], sizes = [5, 8], strides = [1, 1]} : vector<5x96xf32> to vector<5x8xf32>
    %cst_132 = arith.constant dense<0.000000e+00> : vector<5x5xf32>
    %261 = tpu.matmul %258, %259, %cst_132 {dimension_numbers = #tpu.dot_dimension_numbers<[1], [1], [0], [0], [0, 0, 1, 0], [], []>} : vector<5x8xf32>, vector<5x8xf32>, vector<5x5xf32> -> vector<5x5xf32>
    %cst_133 = arith.constant dense<0xFF800000> : vector<5xf32>
    %262 = vector.multi_reduction <maximumf>, %261, %cst_133 [1] : vector<5x5xf32> to vector<5xf32>
    %263 = vector.shape_cast %262 : vector<5xf32> to vector<5x1xf32>
    %264 = vector.broadcast %263 : vector<5x1xf32> to vector<5x5xf32>
    %265 = arith.subf %261, %264 : vector<5x5xf32>
    %266 = math.exp %265 : vector<5x5xf32>
    %cst_134 = arith.constant dense<0.000000e+00> : vector<5xf32>
    %267 = vector.multi_reduction <add>, %266, %cst_134 [1] : vector<5x5xf32> to vector<5xf32>
    %268 = vector.shape_cast %267 : vector<5xf32> to vector<5x1xf32>
    %269 = tpu.reciprocal %268 {approx = true} : vector<5x1xf32> -> vector<5x1xf32>
    %270 = vector.broadcast %269 : vector<5x1xf32> to vector<5x5xf32>
    %271 = arith.mulf %266, %270 : vector<5x5xf32>
    %cst_135 = arith.constant dense<0.000000e+00> : vector<5x8xf32>
    %272 = tpu.matmul %271, %260, %cst_135 {dimension_numbers = #tpu.dot_dimension_numbers<[1], [0], [0], [1], [0, 0, 1, 1], [], []>} : vector<5x5xf32>, vector<5x8xf32>, vector<5x8xf32> -> vector<5x8xf32>
    %273 = vector.extract_strided_slice %181 {offsets = [16, 0], sizes = [8, 32], strides = [1, 1]} : vector<32x32xf32> to vector<8x32xf32>
    %cst_136 = arith.constant dense<0.000000e+00> : vector<5x32xf32>
    %274 = tpu.matmul %272, %273, %cst_136 {dimension_numbers = #tpu.dot_dimension_numbers<[1], [0], [0], [1], [0, 0, 1, 1], [], []>} : vector<5x8xf32>, vector<8x32xf32>, vector<5x32xf32> -> vector<5x32xf32>
    %275 = arith.addf %255, %274 : vector<5x32xf32>
    %276 = vector.extract_strided_slice %214 {offsets = [0, 24], sizes = [5, 8], strides = [1, 1]} : vector<5x96xf32> to vector<5x8xf32>
    %cst_137 = arith.constant 0.353553385 : f32
    %277 = vector.broadcast %cst_137 : f32 to vector<5x8xf32>
    %278 = arith.mulf %276, %277 : vector<5x8xf32>
    %279 = vector.extract_strided_slice %214 {offsets = [0, 56], sizes = [5, 8], strides = [1, 1]} : vector<5x96xf32> to vector<5x8xf32>
    %280 = vector.extract_strided_slice %214 {offsets = [0, 88], sizes = [5, 8], strides = [1, 1]} : vector<5x96xf32> to vector<5x8xf32>
    %cst_138 = arith.constant dense<0.000000e+00> : vector<5x5xf32>
    %281 = tpu.matmul %278, %279, %cst_138 {dimension_numbers = #tpu.dot_dimension_numbers<[1], [1], [0], [0], [0, 0, 1, 0], [], []>} : vector<5x8xf32>, vector<5x8xf32>, vector<5x5xf32> -> vector<5x5xf32>
    %cst_139 = arith.constant dense<0xFF800000> : vector<5xf32>
    %282 = vector.multi_reduction <maximumf>, %281, %cst_139 [1] : vector<5x5xf32> to vector<5xf32>
    %283 = vector.shape_cast %282 : vector<5xf32> to vector<5x1xf32>
    %284 = vector.broadcast %283 : vector<5x1xf32> to vector<5x5xf32>
    %285 = arith.subf %281, %284 : vector<5x5xf32>
    %286 = math.exp %285 : vector<5x5xf32>
    %cst_140 = arith.constant dense<0.000000e+00> : vector<5xf32>
    %287 = vector.multi_reduction <add>, %286, %cst_140 [1] : vector<5x5xf32> to vector<5xf32>
    %288 = vector.shape_cast %287 : vector<5xf32> to vector<5x1xf32>
    %289 = tpu.reciprocal %288 {approx = true} : vector<5x1xf32> -> vector<5x1xf32>
    %290 = vector.broadcast %289 : vector<5x1xf32> to vector<5x5xf32>
    %291 = arith.mulf %286, %290 : vector<5x5xf32>
    %cst_141 = arith.constant dense<0.000000e+00> : vector<5x8xf32>
    %292 = tpu.matmul %291, %280, %cst_141 {dimension_numbers = #tpu.dot_dimension_numbers<[1], [0], [0], [1], [0, 0, 1, 1], [], []>} : vector<5x5xf32>, vector<5x8xf32>, vector<5x8xf32> -> vector<5x8xf32>
    %293 = vector.extract_strided_slice %181 {offsets = [24, 0], sizes = [8, 32], strides = [1, 1]} : vector<32x32xf32> to vector<8x32xf32>
    %cst_142 = arith.constant dense<0.000000e+00> : vector<5x32xf32>
    %294 = tpu.matmul %292, %293, %cst_142 {dimension_numbers = #tpu.dot_dimension_numbers<[1], [0], [0], [1], [0, 0, 1, 1], [], []>} : vector<5x8xf32>, vector<8x32xf32>, vector<5x32xf32> -> vector<5x32xf32>
    %295 = arith.addf %275, %294 : vector<5x32xf32>
    %296 = arith.addf %189, %295 : vector<5x32xf32>
    %297 = vector.broadcast %182 : vector<1x32xf32> to vector<5x32xf32>
    %298 = arith.addf %296, %297 : vector<5x32xf32>
    %c0_143 = arith.constant 0 : index
    %c0_144 = arith.constant 0 : index
    %299 = vector.load %arg35[%c0_143, %c0_144] : memref<5x32xf32, #tpu.memory_space<vmem>>, vector<5x32xf32>
    tpu.vector_store %arg35[%c0_143, %c0_144], %298 {strides = array<i32>} : memref<5x32xf32, #tpu.memory_space<vmem>>, vector<5x32xf32>,
    %c0_145 = arith.constant 0 : index
    %c0_146 = arith.constant 0 : index
    %300 = vector.load %arg35[%c0_145, %c0_146] : memref<5x32xf32, #tpu.memory_space<vmem>>, vector<5x32xf32>
    %cst_147 = arith.constant dense<0.000000e+00> : vector<5xf32>
    %301 = vector.multi_reduction <add>, %300, %cst_147 [1] : vector<5x32xf32> to vector<5xf32>
    %302 = vector.shape_cast %301 : vector<5xf32> to vector<5x1xf32>
    %cst_148 = arith.constant 3.200000e+01 : f32
    %303 = vector.broadcast %cst_148 : f32 to vector<5x1xf32>
    %304 = arith.divf %302, %303 : vector<5x1xf32>
    %305 = vector.broadcast %304 : vector<5x1xf32> to vector<5x32xf32>
    %306 = arith.subf %300, %305 : vector<5x32xf32>
    %307 = arith.mulf %306, %306 : vector<5x32xf32>
    %cst_149 = arith.constant dense<0.000000e+00> : vector<5xf32>
    %308 = vector.multi_reduction <add>, %307, %cst_149 [1] : vector<5x32xf32> to vector<5xf32>
    %309 = vector.shape_cast %308 : vector<5xf32> to vector<5x1xf32>
    %cst_150 = arith.constant 3.200000e+01 : f32
    %310 = vector.broadcast %cst_150 : f32 to vector<5x1xf32>
    %311 = arith.divf %309, %310 : vector<5x1xf32>
    %312 = vector.broadcast %304 : vector<5x1xf32> to vector<5x32xf32>
    %313 = arith.subf %300, %312 : vector<5x32xf32>
    %cst_151 = arith.constant 9.99999997E-7 : f32
    %314 = vector.broadcast %cst_151 : f32 to vector<5x1xf32>
    %315 = arith.addf %311, %314 : vector<5x1xf32>
    %316 = math.rsqrt %315 : vector<5x1xf32>
    %317 = vector.broadcast %316 : vector<5x1xf32> to vector<5x32xf32>
    %318 = arith.mulf %313, %317 : vector<5x32xf32>
    %319 = vector.broadcast %183 : vector<1x32xf32> to vector<5x32xf32>
    %320 = arith.mulf %318, %319 : vector<5x32xf32>
    %321 = vector.broadcast %184 : vector<1x32xf32> to vector<5x32xf32>
    %322 = arith.addf %320, %321 : vector<5x32xf32>
    %cst_152 = arith.constant dense<0.000000e+00> : vector<5x64xf32>
    %323 = tpu.matmul %322, %185, %cst_152 {dimension_numbers = #tpu.dot_dimension_numbers<[1], [0], [0], [1], [0, 0, 1, 1], [], []>} : vector<5x32xf32>, vector<32x64xf32>, vector<5x64xf32> -> vector<5x64xf32>
    %324 = vector.broadcast %186 : vector<1x64xf32> to vector<5x64xf32>
    %325 = arith.addf %323, %324 : vector<5x64xf32>
    %cst_153 = arith.constant 5.000000e-01 : f32
    %326 = vector.broadcast %cst_153 : f32 to vector<5x64xf32>
    %327 = arith.mulf %326, %325 : vector<5x64xf32>
    %cst_154 = arith.constant 0.707106769 : f32
    %328 = vector.broadcast %cst_154 : f32 to vector<5x64xf32>
    %329 = arith.mulf %325, %328 : vector<5x64xf32>
    %330 = math.erf %329 : vector<5x64xf32>
    %cst_155 = arith.constant 1.000000e+00 : f32
    %331 = vector.broadcast %cst_155 : f32 to vector<5x64xf32>
    %332 = arith.addf %331, %330 : vector<5x64xf32>
    %333 = arith.mulf %327, %332 : vector<5x64xf32>
    %cst_156 = arith.constant dense<0.000000e+00> : vector<5x32xf32>
    %334 = tpu.matmul %333, %187, %cst_156 {dimension_numbers = #tpu.dot_dimension_numbers<[1], [0], [0], [1], [0, 0, 1, 1], [], []>} : vector<5x64xf32>, vector<64x32xf32>, vector<5x32xf32> -> vector<5x32xf32>
    %335 = vector.broadcast %188 : vector<1x32xf32> to vector<5x32xf32>
    %336 = arith.addf %334, %335 : vector<5x32xf32>
    %337 = arith.addf %300, %336 : vector<5x32xf32>
    %c0_157 = arith.constant 0 : index
    %c0_158 = arith.constant 0 : index
    %338 = vector.load %arg35[%c0_157, %c0_158] : memref<5x32xf32, #tpu.memory_space<vmem>>, vector<5x32xf32>
    tpu.vector_store %arg35[%c0_157, %c0_158], %337 {strides = array<i32>} : memref<5x32xf32, #tpu.memory_space<vmem>>, vector<5x32xf32>,
    %c0_159 = arith.constant 0 : index
    %c0_160 = arith.constant 0 : index
    %339 = vector.load %arg30[%c0_159, %c0_160] : memref<1x32xf32, #tpu.memory_space<vmem>>, vector<1x32xf32>
    %c0_161 = arith.constant 0 : index
    %c0_162 = arith.constant 0 : index
    %340 = vector.load %arg31[%c0_161, %c0_162] : memref<1x32xf32, #tpu.memory_space<vmem>>, vector<1x32xf32>
    %c0_163 = arith.constant 0 : index
    %c0_164 = arith.constant 0 : index
    %341 = vector.load %arg32[%c0_163, %c0_164] : memref<32x256xf32, #tpu.memory_space<vmem>>, vector<32x256xf32>
    %c0_165 = arith.constant 0 : index
    %c0_166 = arith.constant 0 : index
    %342 = vector.load %arg33[%c0_165, %c0_166] : memref<1x256xf32, #tpu.memory_space<vmem>>, vector<1x256xf32>
    %c0_167 = arith.constant 0 : index
    %c0_168 = arith.constant 0 : index
    %343 = vector.load %arg35[%c0_167, %c0_168] : memref<5x32xf32, #tpu.memory_space<vmem>>, vector<5x32xf32>
    %cst_169 = arith.constant dense<0.000000e+00> : vector<5xf32>
    %344 = vector.multi_reduction <add>, %343, %cst_169 [1] : vector<5x32xf32> to vector<5xf32>
    %345 = vector.shape_cast %344 : vector<5xf32> to vector<5x1xf32>
    %cst_170 = arith.constant 3.200000e+01 : f32
    %346 = vector.broadcast %cst_170 : f32 to vector<5x1xf32>
    %347 = arith.divf %345, %346 : vector<5x1xf32>
    %348 = vector.broadcast %347 : vector<5x1xf32> to vector<5x32xf32>
    %349 = arith.subf %343, %348 : vector<5x32xf32>
    %350 = arith.mulf %349, %349 : vector<5x32xf32>
    %cst_171 = arith.constant dense<0.000000e+00> : vector<5xf32>
    %351 = vector.multi_reduction <add>, %350, %cst_171 [1] : vector<5x32xf32> to vector<5xf32>
    %352 = vector.shape_cast %351 : vector<5xf32> to vector<5x1xf32>
    %cst_172 = arith.constant 3.200000e+01 : f32
    %353 = vector.broadcast %cst_172 : f32 to vector<5x1xf32>
    %354 = arith.divf %352, %353 : vector<5x1xf32>
    %355 = vector.broadcast %347 : vector<5x1xf32> to vector<5x32xf32>
    %356 = arith.subf %343, %355 : vector<5x32xf32>
    %cst_173 = arith.constant 9.99999997E-7 : f32
    %357 = vector.broadcast %cst_173 : f32 to vector<5x1xf32>
    %358 = arith.addf %354, %357 : vector<5x1xf32>
    %359 = math.rsqrt %358 : vector<5x1xf32>
    %360 = vector.broadcast %359 : vector<5x1xf32> to vector<5x32xf32>
    %361 = arith.mulf %356, %360 : vector<5x32xf32>
    %362 = vector.broadcast %339 : vector<1x32xf32> to vector<5x32xf32>
    %363 = arith.mulf %361, %362 : vector<5x32xf32>
    %364 = vector.broadcast %340 : vector<1x32xf32> to vector<5x32xf32>
    %365 = arith.addf %363, %364 : vector<5x32xf32>
    %366 = vector.extract_strided_slice %365 {offsets = [0, 0], sizes = [1, 32], strides = [1, 1]} : vector<5x32xf32> to vector<1x32xf32>
    %cst_174 = arith.constant dense<0.000000e+00> : vector<1x256xf32>
    %367 = tpu.matmul %366, %341, %cst_174 {dimension_numbers = #tpu.dot_dimension_numbers<[1], [0], [0], [1], [0, 0, 1, 1], [], []>} : vector<1x32xf32>, vector<32x256xf32>, vector<1x256xf32> -> vector<1x256xf32>
    %368 = arith.addf %367, %342 : vector<1x256xf32>
    %c0_175 = arith.constant 0 : index
    %c0_176 = arith.constant 0 : index
    %c0_177 = arith.constant 0 : index
    %369 = vector.load %arg34[%c0_175, %c0_176, %c0_177] : memref<1x1x256xf32, #tpu.memory_space<vmem>>, vector<1x1x256xf32>
    %370 = vector.shape_cast %369 : vector<1x1x256xf32> to vector<1x256xf32>
    %371 = vector.shape_cast %368 : vector<1x256xf32> to vector<1x1x256xf32>
    tpu.vector_store %arg34[%c0_175, %c0_176, %c0_177], %371 {strides = array<i32>} : memref<1x1x256xf32, #tpu.memory_space<vmem>>, vector<1x1x256xf32>,
    return
  }
  func.func @transform_0(%arg0: i32) -> (i32, i32, i32) {
    %c0_i32 = arith.constant 0 : i32
    %c0_i32_0 = arith.constant 0 : i32
    %c0_i32_1 = arith.constant 0 : i32
    return %arg0, %c0_i32, %c0_i32_0 : i32, i32, i32
  }
  func.func @transform_1(%arg0: i32) -> (i32, i32) {
    %c0_i32 = arith.constant 0 : i32
    %c0_i32_0 = arith.constant 0 : i32
    %c0_i32_1 = arith.constant 0 : i32
    return %c0_i32, %c0_i32_0 : i32, i32
  }
  func.func @transform_2(%arg0: i32) -> (i32, i32) {
    %c0_i32 = arith.constant 0 : i32
    %c0_i32_0 = arith.constant 0 : i32
    %c0_i32_1 = arith.constant 0 : i32
    return %c0_i32, %c0_i32_0 : i32, i32
  }
  func.func @transform_3(%arg0: i32) -> (i32, i32) {
    %c0_i32 = arith.constant 0 : i32
    %c0_i32_0 = arith.constant 0 : i32
    %c0_i32_1 = arith.constant 0 : i32
    return %c0_i32, %c0_i32_0 : i32, i32
  }
  func.func @transform_4(%arg0: i32) -> (i32, i32) {
    %c0_i32 = arith.constant 0 : i32
    %c0_i32_0 = arith.constant 0 : i32
    %c0_i32_1 = arith.constant 0 : i32
    return %c0_i32, %c0_i32_0 : i32, i32
  }
  func.func @transform_5(%arg0: i32) -> (i32, i32) {
    %c0_i32 = arith.constant 0 : i32
    %c0_i32_0 = arith.constant 0 : i32
    %c0_i32_1 = arith.constant 0 : i32
    return %c0_i32, %c0_i32_0 : i32, i32
  }
  func.func @transform_6(%arg0: i32) -> (i32, i32) {
    %c0_i32 = arith.constant 0 : i32
    %c0_i32_0 = arith.constant 0 : i32
    %c0_i32_1 = arith.constant 0 : i32
    return %c0_i32, %c0_i32_0 : i32, i32
  }
  func.func @transform_7(%arg0: i32) -> (i32, i32) {
    %c0_i32 = arith.constant 0 : i32
    %c0_i32_0 = arith.constant 0 : i32
    %c0_i32_1 = arith.constant 0 : i32
    return %c0_i32, %c0_i32_0 : i32, i32
  }
  func.func @transform_8(%arg0: i32) -> (i32, i32) {
    %c0_i32 = arith.constant 0 : i32
    %c0_i32_0 = arith.constant 0 : i32
    %c0_i32_1 = arith.constant 0 : i32
    return %c0_i32, %c0_i32_0 : i32, i32
  }
  func.func @transform_9(%arg0: i32) -> (i32, i32) {
    %c0_i32 = arith.constant 0 : i32
    %c0_i32_0 = arith.constant 0 : i32
    %c0_i32_1 = arith.constant 0 : i32
    return %c0_i32, %c0_i32_0 : i32, i32
  }
  func.func @transform_10(%arg0: i32) -> (i32, i32) {
    %c0_i32 = arith.constant 0 : i32
    %c0_i32_0 = arith.constant 0 : i32
    %c0_i32_1 = arith.constant 0 : i32
    return %c0_i32, %c0_i32_0 : i32, i32
  }
  func.func @transform_11(%arg0: i32) -> (i32, i32) {
    %c0_i32 = arith.constant 0 : i32
    %c0_i32_0 = arith.constant 0 : i32
    %c0_i32_1 = arith.constant 0 : i32
    return %c0_i32, %c0_i32_0 : i32, i32
  }
  func.func @transform_12(%arg0: i32) -> (i32, i32) {
    %c0_i32 = arith.constant 0 : i32
    %c0_i32_0 = arith.constant 0 : i32
    %c0_i32_1 = arith.constant 0 : i32
    return %c0_i32, %c0_i32_0 : i32, i32
  }
  func.func @transform_13(%arg0: i32) -> (i32, i32) {
    %c0_i32 = arith.constant 0 : i32
    %c0_i32_0 = arith.constant 0 : i32
    %c0_i32_1 = arith.constant 0 : i32
    return %c0_i32, %c0_i32_0 : i32, i32
  }
  func.func @transform_14(%arg0: i32) -> (i32, i32) {
    %c0_i32 = arith.constant 0 : i32
    %c0_i32_0 = arith.constant 0 : i32
    %c0_i32_1 = arith.constant 0 : i32
    return %c0_i32, %c0_i32_0 : i32, i32
  }
  func.func @transform_15(%arg0: i32) -> (i32, i32) {
    %c0_i32 = arith.constant 0 : i32
    %c0_i32_0 = arith.constant 0 : i32
    %c0_i32_1 = arith.constant 0 : i32
    return %c0_i32, %c0_i32_0 : i32, i32
  }
  func.func @transform_16(%arg0: i32) -> (i32, i32) {
    %c0_i32 = arith.constant 0 : i32
    %c0_i32_0 = arith.constant 0 : i32
    %c0_i32_1 = arith.constant 0 : i32
    return %c0_i32, %c0_i32_0 : i32, i32
  }
  func.func @transform_17(%arg0: i32) -> (i32, i32) {
    %c0_i32 = arith.constant 0 : i32
    %c0_i32_0 = arith.constant 0 : i32
    %c0_i32_1 = arith.constant 0 : i32
    return %c0_i32, %c0_i32_0 : i32, i32
  }
  func.func @transform_18(%arg0: i32) -> (i32, i32) {
    %c0_i32 = arith.constant 0 : i32
    %c0_i32_0 = arith.constant 0 : i32
    %c0_i32_1 = arith.constant 0 : i32
    return %c0_i32, %c0_i32_0 : i32, i32
  }
  func.func @transform_19(%arg0: i32) -> (i32, i32) {
    %c0_i32 = arith.constant 0 : i32
    %c0_i32_0 = arith.constant 0 : i32
    %c0_i32_1 = arith.constant 0 : i32
    return %c0_i32, %c0_i32_0 : i32, i32
  }
  func.func @transform_20(%arg0: i32) -> (i32, i32) {
    %c0_i32 = arith.constant 0 : i32
    %c0_i32_0 = arith.constant 0 : i32
    %c0_i32_1 = arith.constant 0 : i32
    return %c0_i32, %c0_i32_0 : i32, i32
  }
  func.func @transform_21(%arg0: i32) -> (i32, i32) {
    %c0_i32 = arith.constant 0 : i32
    %c0_i32_0 = arith.constant 0 : i32
    %c0_i32_1 = arith.constant 0 : i32
    return %c0_i32, %c0_i32_0 : i32, i32
  }
  func.func @transform_22(%arg0: i32) -> (i32, i32) {
    %c0_i32 = arith.constant 0 : i32
    %c0_i32_0 = arith.constant 0 : i32
    %c0_i32_1 = arith.constant 0 : i32
    return %c0_i32, %c0_i32_0 : i32, i32
  }
  func.func @transform_23(%arg0: i32) -> (i32, i32) {
    %c0_i32 = arith.constant 0 : i32
    %c0_i32_0 = arith.constant 0 : i32
    %c0_i32_1 = arith.constant 0 : i32
    return %c0_i32, %c0_i32_0 : i32, i32
  }
  func.func @transform_24(%arg0: i32) -> (i32, i32) {
    %c0_i32 = arith.constant 0 : i32
    %c0_i32_0 = arith.constant 0 : i32
    %c0_i32_1 = arith.constant 0 : i32
    return %c0_i32, %c0_i32_0 : i32, i32
  }
  func.func @transform_25(%arg0: i32) -> (i32, i32) {
    %c0_i32 = arith.constant 0 : i32
    %c0_i32_0 = arith.constant 0 : i32
    %c0_i32_1 = arith.constant 0 : i32
    return %c0_i32, %c0_i32_0 : i32, i32
  }
  func.func @transform_26(%arg0: i32) -> (i32, i32) {
    %c0_i32 = arith.constant 0 : i32
    %c0_i32_0 = arith.constant 0 : i32
    %c0_i32_1 = arith.constant 0 : i32
    return %c0_i32, %c0_i32_0 : i32, i32
  }
  func.func @transform_27(%arg0: i32) -> (i32, i32) {
    %c0_i32 = arith.constant 0 : i32
    %c0_i32_0 = arith.constant 0 : i32
    %c0_i32_1 = arith.constant 0 : i32
    return %c0_i32, %c0_i32_0 : i32, i32
  }
  func.func @transform_28(%arg0: i32) -> (i32, i32) {
    %c0_i32 = arith.constant 0 : i32
    %c0_i32_0 = arith.constant 0 : i32
    %c0_i32_1 = arith.constant 0 : i32
    return %c0_i32, %c0_i32_0 : i32, i32
  }
  func.func @transform_29(%arg0: i32) -> (i32, i32) {
    %c0_i32 = arith.constant 0 : i32
    %c0_i32_0 = arith.constant 0 : i32
    %c0_i32_1 = arith.constant 0 : i32
    return %c0_i32, %c0_i32_0 : i32, i32
  }
  func.func @transform_30(%arg0: i32) -> (i32, i32) {
    %c0_i32 = arith.constant 0 : i32
    %c0_i32_0 = arith.constant 0 : i32
    %c0_i32_1 = arith.constant 0 : i32
    return %c0_i32, %c0_i32_0 : i32, i32
  }
  func.func @transform_31(%arg0: i32) -> (i32, i32) {
    %c0_i32 = arith.constant 0 : i32
    %c0_i32_0 = arith.constant 0 : i32
    %c0_i32_1 = arith.constant 0 : i32
    return %c0_i32, %c0_i32_0 : i32, i32
  }
  func.func @transform_32(%arg0: i32) -> (i32, i32) {
    %c0_i32 = arith.constant 0 : i32
    %c0_i32_0 = arith.constant 0 : i32
    %c0_i32_1 = arith.constant 0 : i32
    return %c0_i32, %c0_i32_0 : i32, i32
  }
  func.func @transform_33(%arg0: i32) -> (i32, i32, i32) {
    %c0_i32 = arith.constant 0 : i32
    %c0_i32_0 = arith.constant 0 : i32
    %c0_i32_1 = arith.constant 0 : i32
    return %arg0, %c0_i32, %c0_i32_0 : i32, i32, i32
  }
}

</mosaic_0001>

<llo_original>
// kernel: vit_forward.1
$region0: #{vit_forward.1}
  #allocation0 [shape = 'u32[]', space=smem, size = 0x4, offset = 0x4, fixed_abs, tag = 'smem constant byte address 0x4 - core index']
  #allocation1 [shape = 'u32[72,128]{1,0:T(1,128)}', space=vmem, size = 0x9000, scoped, tag = 'internal scratch']
  #allocation2 [shape = 'f32[5,32]{1,0:T(8,128)}', space=vmem, size = 0x1000, scoped, tag = 'scratch operand']
  %s0 = inlined_call_operand.smem [shape: u32[34], index: -1, kind: input, shape index: {}]
  %s1 = sld [smem:[%s0]]
  %s2 = scalar_lea.smem %s0, 1
  %s3 = sld [smem:[%s2]]
  %s4 = scalar_lea.smem %s0, 2
  %s5 = sld [smem:[%s4]]
  %s6 = scalar_lea.smem %s0, 3
  %s7 = sld [smem:[%s6]]
  %s8 = scalar_lea.smem %s0, 4
  %s9 = sld [smem:[%s8]]
  %s10 = scalar_lea.smem %s0, 5
  %s11 = sld [smem:[%s10]]
  %s12 = scalar_lea.smem %s0, 6
  %s13 = sld [smem:[%s12]]
  %s14 = scalar_lea.smem %s0, 7
  %s15 = sld [smem:[%s14]]
  %s16 = scalar_lea.smem %s0, 8
  %s17 = sld [smem:[%s16]]
  %s18 = scalar_lea.smem %s0, 9
  %s19 = sld [smem:[%s18]]
  %s20 = scalar_lea.smem %s0, 10
  %s21 = sld [smem:[%s20]]
  %s22 = scalar_lea.smem %s0, 11
  %s23 = sld [smem:[%s22]]
  %s24 = scalar_lea.smem %s0, 12
  %s25 = sld [smem:[%s24]]
  %s26 = scalar_lea.smem %s0, 13
  %s27 = sld [smem:[%s26]]
  %s28 = scalar_lea.smem %s0, 14
  %s29 = sld [smem:[%s28]]
  %s30 = scalar_lea.smem %s0, 15
  %s31 = sld [smem:[%s30]]
  %s32 = scalar_lea.smem %s0, 16
  %s33 = sld [smem:[%s32]]
  %s34 = scalar_lea.smem %s0, 17
  %s35 = sld [smem:[%s34]]
  %s36 = scalar_lea.smem %s0, 18
  %s37 = sld [smem:[%s36]]
  %s38 = scalar_lea.smem %s0, 19
  %s39 = sld [smem:[%s38]]
  %s40 = scalar_lea.smem %s0, 20
  %s41 = sld [smem:[%s40]]
  %s42 = scalar_lea.smem %s0, 21
  %s43 = sld [smem:[%s42]]
  %s44 = scalar_lea.smem %s0, 22
  %s45 = sld [smem:[%s44]]
  %s46 = scalar_lea.smem %s0, 23
  %s47 = sld [smem:[%s46]]
  %s48 = scalar_lea.smem %s0, 24
  %s49 = sld [smem:[%s48]]
  %s50 = scalar_lea.smem %s0, 25
  %s51 = sld [smem:[%s50]]
  %s52 = scalar_lea.smem %s0, 26
  %s53 = sld [smem:[%s52]]
  %s54 = scalar_lea.smem %s0, 27
  %s55 = sld [smem:[%s54]]
  %s56 = scalar_lea.smem %s0, 28
  %s57 = sld [smem:[%s56]]
  %s58 = scalar_lea.smem %s0, 29
  %s59 = sld [smem:[%s58]]
  %s60 = scalar_lea.smem %s0, 30
  %s61 = sld [smem:[%s60]]
  %s62 = scalar_lea.smem %s0, 31
  %s63 = sld [smem:[%s62]]
  %s64 = scalar_lea.smem %s0, 32
  %s65 = sld [smem:[%s64]]
  %s66 = scalar_lea.smem %s0, 33
  %s67 = sld [smem:[%s66]]
  %s68 = sld [smem:[#allocation0]]
  $region165: #{vit_forward.1} parent=0
    _
  %s70 = ssub.s32 1, %s68
  %s71 = scalar_select 0, %s70, %s68
  loop: start=0, step=1, limit=4
  $region2: #{vit_forward.1} parent=0 // loop_pre_header
    _
  $region3: #{vit_forward.1} parent=0 // loop_header
    %s73 = sphi 0, %s77
    %p74 = scmp.ge.s32.totalorder %s73, 4
    %s83 = sphi 0, %s85
    %s86 = sphi 0, %s83
    %s87 = sphi 0, %s86
    %s103 = sphi 0, %s87
    %s107 = sphi 0, %s107
    %s109 = sphi 0, %s107
    %s110 = sphi 0, %s109
    %s124 = sphi 0, %s110
    %s128 = sphi 0, %s128
    %s130 = sphi 0, %s128
    %s131 = sphi 0, %s130
    %s145 = sphi 0, %s131
    %s149 = sphi 0, %s149
    %s151 = sphi 0, %s149
    %s152 = sphi 0, %s151
    %s166 = sphi 0, %s152
    %s170 = sphi 0, %s170
    %s172 = sphi 0, %s170
    %s173 = sphi 0, %s172
    %s187 = sphi 0, %s173
    %s191 = sphi 0, %s191
    %s193 = sphi 0, %s191
    %s194 = sphi 0, %s193
    %s208 = sphi 0, %s194
    %s212 = sphi 0, %s212
    %s214 = sphi 0, %s212
    %s215 = sphi 0, %s214
    %s229 = sphi 0, %s215
    %s233 = sphi 0, %s233
    %s235 = sphi 0, %s233
    %s236 = sphi 0, %s235
    %s250 = sphi 0, %s236
    %s254 = sphi 0, %s254
    %s256 = sphi 0, %s254
    %s257 = sphi 0, %s256
    %s271 = sphi 0, %s257
    %s275 = sphi 0, %s275
    %s277 = sphi 0, %s275
    %s278 = sphi 0, %s277
    %s292 = sphi 0, %s278
    %s296 = sphi 0, %s296
    %s298 = sphi 0, %s296
    %s299 = sphi 0, %s298
    %s313 = sphi 0, %s299
    %s317 = sphi 0, %s317
    %s319 = sphi 0, %s317
    %s320 = sphi 0, %s319
    %s334 = sphi 0, %s320
    %s338 = sphi 0, %s338
    %s340 = sphi 0, %s338
    %s341 = sphi 0, %s340
    %s355 = sphi 0, %s341
    %s359 = sphi 0, %s359
    %s361 = sphi 0, %s359
    %s362 = sphi 0, %s361
    %s376 = sphi 0, %s362
    %s380 = sphi 0, %s380
    %s382 = sphi 0, %s380
    %s383 = sphi 0, %s382
    %s397 = sphi 0, %s383
    %s401 = sphi 0, %s401
    %s403 = sphi 0, %s401
    %s404 = sphi 0, %s403
    %s418 = sphi 0, %s404
    %s422 = sphi 0, %s422
    %s424 = sphi 0, %s422
    %s425 = sphi 0, %s424
    %s439 = sphi 0, %s425
    %s443 = sphi 0, %s443
    %s445 = sphi 0, %s443
    %s446 = sphi 0, %s445
    %s460 = sphi 0, %s446
    %s464 = sphi 0, %s464
    %s466 = sphi 0, %s464
    %s467 = sphi 0, %s466
    %s481 = sphi 0, %s467
    %s485 = sphi 0, %s485
    %s487 = sphi 0, %s485
    %s488 = sphi 0, %s487
    %s502 = sphi 0, %s488
    %s506 = sphi 0, %s506
    %s508 = sphi 0, %s506
    %s509 = sphi 0, %s508
    %s523 = sphi 0, %s509
    %s527 = sphi 0, %s527
    %s529 = sphi 0, %s527
    %s530 = sphi 0, %s529
    %s544 = sphi 0, %s530
    %s548 = sphi 0, %s548
    %s550 = sphi 0, %s548
    %s551 = sphi 0, %s550
    %s565 = sphi 0, %s551
    %s569 = sphi 0, %s569
    %s571 = sphi 0, %s569
    %s572 = sphi 0, %s571
    %s586 = sphi 0, %s572
    %s590 = sphi 0, %s590
    %s592 = sphi 0, %s590
    %s593 = sphi 0, %s592
    %s607 = sphi 0, %s593
    %s611 = sphi 0, %s611
    %s613 = sphi 0, %s611
    %s614 = sphi 0, %s613
    %s628 = sphi 0, %s614
    %s632 = sphi 0, %s632
    %s634 = sphi 0, %s632
    %s635 = sphi 0, %s634
    %s649 = sphi 0, %s635
    %s653 = sphi 0, %s653
    %s655 = sphi 0, %s653
    %s656 = sphi 0, %s655
    %s670 = sphi 0, %s656
    %s674 = sphi 0, %s674
    %s676 = sphi 0, %s674
    %s677 = sphi 0, %s676
    %s691 = sphi 0, %s677
    %s695 = sphi 0, %s695
    %s697 = sphi 0, %s695
    %s698 = sphi 0, %s697
    %s712 = sphi 0, %s698
    %s716 = sphi 0, %s716
    %s718 = sphi 0, %s716
    %s719 = sphi 0, %s718
    %s733 = sphi 0, %s719
    %s737 = sphi 0, %s737
    %s739 = sphi 0, %s737
    %s740 = sphi 0, %s739
    %s754 = sphi 0, %s740
    %s758 = sphi 0, %s758
    %s760 = sphi 0, %s758
    %s761 = sphi 0, %s760
    %s775 = sphi 0, %s761
    %s781 = sphi 0, %s783
    %s784 = sphi 0, %s781
    %s785 = sphi 0, %s784
    %s801 = sphi 0, %s785
  $region4: #{vit_forward.1} parent=0 // loop_header_branch
    %76 = sbr.rel (%p74) target = $region8
  $region5: #{vit_forward.1} parent=0 // loop_body
    %s78 = ssub.s32 %s73, 1
    %s79 = ssub.s32 %s73, 2
    %s80 = sadd.s32 %s73, 1
    %s81 = ssub.s32 %s73, %s80
    %p82 = scmp.eq.s32.totalorder %s81, 0
    %s84 = sadd.s32 %s83, 1
    %s85 = scalar_select %p82, %s83, %s84
    %p88 = pneg %p82
    %p89 = scmp.eq.s32.totalorder %s73, 1
    %p90 = por %p88, %p89
    %p91 = scmp.ne.s32.totalorder %s83, %s86
    %p92 = scmp.eq.s32.totalorder %s73, 0
    %p93 = por %p91, %p92
    %p94 = scmp.ne.s32.totalorder %s83, %s86
    %p95 = scmp.eq.s32.totalorder %s78, 1
    %p96 = por %p94, %p95
    %p97 = scmp.ne.s32.totalorder %s86, %s87
    %p98 = scmp.eq.s32.totalorder %s78, 0
    %p99 = por %p97, %p98
    %p100 = scmp.ne.s32.totalorder %s86, %s87
    %p101 = scmp.eq.s32.totalorder %s79, 1
    %p102 = por %p100, %p101
    %p104 = scmp.ne.s32.totalorder %s87, %s103
    %p105 = scmp.eq.s32.totalorder %s79, 0
    %p106 = por %p104, %p105
    %s108 = sadd.s32 %s107, 1
    %p111 = scmp.eq.s32.totalorder %s73, 1
    %p112 = scmp.ne.s32.totalorder %s107, %s109
    %p113 = scmp.eq.s32.totalorder %s73, 0
    %p114 = por %p112, %p113
    %p115 = scmp.ne.s32.totalorder %s107, %s109
    %p116 = scmp.eq.s32.totalorder %s78, 1
    %p117 = por %p115, %p116
    %p118 = scmp.ne.s32.totalorder %s109, %s110
    %p119 = scmp.eq.s32.totalorder %s78, 0
    %p120 = por %p118, %p119
    %p121 = scmp.ne.s32.totalorder %s109, %s110
    %p122 = scmp.eq.s32.totalorder %s79, 1
    %p123 = por %p121, %p122
    %p125 = scmp.ne.s32.totalorder %s110, %s124
    %p126 = scmp.eq.s32.totalorder %s79, 0
    %p127 = por %p125, %p126
    %s129 = sadd.s32 %s128, 1
    %p132 = scmp.eq.s32.totalorder %s73, 1
    %p133 = scmp.ne.s32.totalorder %s128, %s130
    %p134 = scmp.eq.s32.totalorder %s73, 0
    %p135 = por %p133, %p134
    %p136 = scmp.ne.s32.totalorder %s128, %s130
    %p137 = scmp.eq.s32.totalorder %s78, 1
    %p138 = por %p136, %p137
    %p139 = scmp.ne.s32.totalorder %s130, %s131
    %p140 = scmp.eq.s32.totalorder %s78, 0
    %p141 = por %p139, %p140
    %p142 = scmp.ne.s32.totalorder %s130, %s131
    %p143 = scmp.eq.s32.totalorder %s79, 1
    %p144 = por %p142, %p143
    %p146 = scmp.ne.s32.totalorder %s131, %s145
    %p147 = scmp.eq.s32.totalorder %s79, 0
    %p148 = por %p146, %p147
    %s150 = sadd.s32 %s149, 1
    %p153 = scmp.eq.s32.totalorder %s73, 1
    %p154 = scmp.ne.s32.totalorder %s149, %s151
    %p155 = scmp.eq.s32.totalorder %s73, 0
    %p156 = por %p154, %p155
    %p157 = scmp.ne.s32.totalorder %s149, %s151
    %p158 = scmp.eq.s32.totalorder %s78, 1
    %p159 = por %p157, %p158
    %p160 = scmp.ne.s32.totalorder %s151, %s152
    %p161 = scmp.eq.s32.totalorder %s78, 0
    %p162 = por %p160, %p161
    %p163 = scmp.ne.s32.totalorder %s151, %s152
    %p164 = scmp.eq.s32.totalorder %s79, 1
    %p165 = por %p163, %p164
    %p167 = scmp.ne.s32.totalorder %s152, %s166
    %p168 = scmp.eq.s32.totalorder %s79, 0
    %p169 = por %p167, %p168
    %s171 = sadd.s32 %s170, 1
    %p174 = scmp.eq.s32.totalorder %s73, 1
    %p175 = scmp.ne.s32.totalorder %s170, %s172
    %p176 = scmp.eq.s32.totalorder %s73, 0
    %p177 = por %p175, %p176
    %p178 = scmp.ne.s32.totalorder %s170, %s172
    %p179 = scmp.eq.s32.totalorder %s78, 1
    %p180 = por %p178, %p179
    %p181 = scmp.ne.s32.totalorder %s172, %s173
    %p182 = scmp.eq.s32.totalorder %s78, 0
    %p183 = por %p181, %p182
    %p184 = scmp.ne.s32.totalorder %s172, %s173
    %p185 = scmp.eq.s32.totalorder %s79, 1
    %p186 = por %p184, %p185
    %p188 = scmp.ne.s32.totalorder %s173, %s187
    %p189 = scmp.eq.s32.totalorder %s79, 0
    %p190 = por %p188, %p189
    %s192 = sadd.s32 %s191, 1
    %p195 = scmp.eq.s32.totalorder %s73, 1
    %p196 = scmp.ne.s32.totalorder %s191, %s193
    %p197 = scmp.eq.s32.totalorder %s73, 0
    %p198 = por %p196, %p197
    %p199 = scmp.ne.s32.totalorder %s191, %s193
    %p200 = scmp.eq.s32.totalorder %s78, 1
    %p201 = por %p199, %p200
    %p202 = scmp.ne.s32.totalorder %s193, %s194
    %p203 = scmp.eq.s32.totalorder %s78, 0
    %p204 = por %p202, %p203
    %p205 = scmp.ne.s32.totalorder %s193, %s194
    %p206 = scmp.eq.s32.totalorder %s79, 1
    %p207 = por %p205, %p206
    %p209 = scmp.ne.s32.totalorder %s194, %s208
    %p210 = scmp.eq.s32.totalorder %s79, 0
    %p211 = por %p209, %p210
    %s213 = sadd.s32 %s212, 1
    %p216 = scmp.eq.s32.totalorder %s73, 1
    %p217 = scmp.ne.s32.totalorder %s212, %s214
    %p218 = scmp.eq.s32.totalorder %s73, 0
    %p219 = por %p217, %p218
    %p220 = scmp.ne.s32.totalorder %s212, %s214
    %p221 = scmp.eq.s32.totalorder %s78, 1
    %p222 = por %p220, %p221
    %p223 = scmp.ne.s32.totalorder %s214, %s215
    %p224 = scmp.eq.s32.totalorder %s78, 0
    %p225 = por %p223, %p224
    %p226 = scmp.ne.s32.totalorder %s214, %s215
    %p227 = scmp.eq.s32.totalorder %s79, 1
    %p228 = por %p226, %p227
    %p230 = scmp.ne.s32.totalorder %s215, %s229
    %p231 = scmp.eq.s32.totalorder %s79, 0
    %p232 = por %p230, %p231
    %s234 = sadd.s32 %s233, 1
    %p237 = scmp.eq.s32.totalorder %s73, 1
    %p238 = scmp.ne.s32.totalorder %s233, %s235
    %p239 = scmp.eq.s32.totalorder %s73, 0
    %p240 = por %p238, %p239
    %p241 = scmp.ne.s32.totalorder %s233, %s235
    %p242 = scmp.eq.s32.totalorder %s78, 1
    %p243 = por %p241, %p242
    %p244 = scmp.ne.s32.totalorder %s235, %s236
    %p245 = scmp.eq.s32.totalorder %s78, 0
    %p246 = por %p244, %p245
    %p247 = scmp.ne.s32.totalorder %s235, %s236
    %p248 = scmp.eq.s32.totalorder %s79, 1
    %p249 = por %p247, %p248
    %p251 = scmp.ne.s32.totalorder %s236, %s250
    %p252 = scmp.eq.s32.totalorder %s79, 0
    %p253 = por %p251, %p252
    %s255 = sadd.s32 %s254, 1
    %p258 = scmp.eq.s32.totalorder %s73, 1
    %p259 = scmp.ne.s32.totalorder %s254, %s256
    %p260 = scmp.eq.s32.totalorder %s73, 0
    %p261 = por %p259, %p260
    %p262 = scmp.ne.s32.totalorder %s254, %s256
    %p263 = scmp.eq.s32.totalorder %s78, 1
    %p264 = por %p262, %p263
    %p265 = scmp.ne.s32.totalorder %s256, %s257
    %p266 = scmp.eq.s32.totalorder %s78, 0
    %p267 = por %p265, %p266
    %p268 = scmp.ne.s32.totalorder %s256, %s257
    %p269 = scmp.eq.s32.totalorder %s79, 1
    %p270 = por %p268, %p269
    %p272 = scmp.ne.s32.totalorder %s257, %s271
    %p273 = scmp.eq.s32.totalorder %s79, 0
    %p274 = por %p272, %p273
    %s276 = sadd.s32 %s275, 1
    %p279 = scmp.eq.s32.totalorder %s73, 1
    %p280 = scmp.ne.s32.totalorder %s275, %s277
    %p281 = scmp.eq.s32.totalorder %s73, 0
    %p282 = por %p280, %p281
    %p283 = scmp.ne.s32.totalorder %s275, %s277
    %p284 = scmp.eq.s32.totalorder %s78, 1
    %p285 = por %p283, %p284
    %p286 = scmp.ne.s32.totalorder %s277, %s278
    %p287 = scmp.eq.s32.totalorder %s78, 0
    %p288 = por %p286, %p287
    %p289 = scmp.ne.s32.totalorder %s277, %s278
    %p290 = scmp.eq.s32.totalorder %s79, 1
    %p291 = por %p289, %p290
    %p293 = scmp.ne.s32.totalorder %s278, %s292
    %p294 = scmp.eq.s32.totalorder %s79, 0
    %p295 = por %p293, %p294
    %s297 = sadd.s32 %s296, 1
    %p300 = scmp.eq.s32.totalorder %s73, 1
    %p301 = scmp.ne.s32.totalorder %s296, %s298
    %p302 = scmp.eq.s32.totalorder %s73, 0
    %p303 = por %p301, %p302
    %p304 = scmp.ne.s32.totalorder %s296, %s298
    %p305 = scmp.eq.s32.totalorder %s78, 1
    %p306 = por %p304, %p305
    %p307 = scmp.ne.s32.totalorder %s298, %s299
    %p308 = scmp.eq.s32.totalorder %s78, 0
    %p309 = por %p307, %p308
    %p310 = scmp.ne.s32.totalorder %s298, %s299
    %p311 = scmp.eq.s32.totalorder %s79, 1
    %p312 = por %p310, %p311
    %p314 = scmp.ne.s32.totalorder %s299, %s313
    %p315 = scmp.eq.s32.totalorder %s79, 0
    %p316 = por %p314, %p315
    %s318 = sadd.s32 %s317, 1
    %p321 = scmp.eq.s32.totalorder %s73, 1
    %p322 = scmp.ne.s32.totalorder %s317, %s319
    %p323 = scmp.eq.s32.totalorder %s73, 0
    %p324 = por %p322, %p323
    %p325 = scmp.ne.s32.totalorder %s317, %s319
    %p326 = scmp.eq.s32.totalorder %s78, 1
    %p327 = por %p325, %p326
    %p328 = scmp.ne.s32.totalorder %s319, %s320
    %p329 = scmp.eq.s32.totalorder %s78, 0
    %p330 = por %p328, %p329
    %p331 = scmp.ne.s32.totalorder %s319, %s320
    %p332 = scmp.eq.s32.totalorder %s79, 1
    %p333 = por %p331, %p332
    %p335 = scmp.ne.s32.totalorder %s320, %s334
    %p336 = scmp.eq.s32.totalorder %s79, 0
    %p337 = por %p335, %p336
    %s339 = sadd.s32 %s338, 1
    %p342 = scmp.eq.s32.totalorder %s73, 1
    %p343 = scmp.ne.s32.totalorder %s338, %s340
    %p344 = scmp.eq.s32.totalorder %s73, 0
    %p345 = por %p343, %p344
    %p346 = scmp.ne.s32.totalorder %s338, %s340
    %p347 = scmp.eq.s32.totalorder %s78, 1
    %p348 = por %p346, %p347
    %p349 = scmp.ne.s32.totalorder %s340, %s341
    %p350 = scmp.eq.s32.totalorder %s78, 0
    %p351 = por %p349, %p350
    %p352 = scmp.ne.s32.totalorder %s340, %s341
    %p353 = scmp.eq.s32.totalorder %s79, 1
    %p354 = por %p352, %p353
    %p356 = scmp.ne.s32.totalorder %s341, %s355
    %p357 = scmp.eq.s32.totalorder %s79, 0
    %p358 = por %p356, %p357
    %s360 = sadd.s32 %s359, 1
    %p363 = scmp.eq.s32.totalorder %s73, 1
    %p364 = scmp.ne.s32.totalorder %s359, %s361
    %p365 = scmp.eq.s32.totalorder %s73, 0
    %p366 = por %p364, %p365
    %p367 = scmp.ne.s32.totalorder %s359, %s361
    %p368 = scmp.eq.s32.totalorder %s78, 1
    %p369 = por %p367, %p368
    %p370 = scmp.ne.s32.totalorder %s361, %s362
    %p371 = scmp.eq.s32.totalorder %s78, 0
    %p372 = por %p370, %p371
    %p373 = scmp.ne.s32.totalorder %s361, %s362
    %p374 = scmp.eq.s32.totalorder %s79, 1
    %p375 = por %p373, %p374
    %p377 = scmp.ne.s32.totalorder %s362, %s376
    %p378 = scmp.eq.s32.totalorder %s79, 0
    %p379 = por %p377, %p378
    %s381 = sadd.s32 %s380, 1
    %p384 = scmp.eq.s32.totalorder %s73, 1
    %p385 = scmp.ne.s32.totalorder %s380, %s382
    %p386 = scmp.eq.s32.totalorder %s73, 0
    %p387 = por %p385, %p386
    %p388 = scmp.ne.s32.totalorder %s380, %s382
    %p389 = scmp.eq.s32.totalorder %s78, 1
    %p390 = por %p388, %p389
    %p391 = scmp.ne.s32.totalorder %s382, %s383
    %p392 = scmp.eq.s32.totalorder %s78, 0
    %p393 = por %p391, %p392
    %p394 = scmp.ne.s32.totalorder %s382, %s383
    %p395 = scmp.eq.s32.totalorder %s79, 1
    %p396 = por %p394, %p395
    %p398 = scmp.ne.s32.totalorder %s383, %s397
    %p399 = scmp.eq.s32.totalorder %s79, 0
    %p400 = por %p398, %p399
    %s402 = sadd.s32 %s401, 1
    %p405 = scmp.eq.s32.totalorder %s73, 1
    %p406 = scmp.ne.s32.totalorder %s401, %s403
    %p407 = scmp.eq.s32.totalorder %s73, 0
    %p408 = por %p406, %p407
    %p409 = scmp.ne.s32.totalorder %s401, %s403
    %p410 = scmp.eq.s32.totalorder %s78, 1
    %p411 = por %p409, %p410
    %p412 = scmp.ne.s32.totalorder %s403, %s404
    %p413 = scmp.eq.s32.totalorder %s78, 0
    %p414 = por %p412, %p413
    %p415 = scmp.ne.s32.totalorder %s403, %s404
    %p416 = scmp.eq.s32.totalorder %s79, 1
    %p417 = por %p415, %p416
    %p419 = scmp.ne.s32.totalorder %s404, %s418
    %p420 = scmp.eq.s32.totalorder %s79, 0
    %p421 = por %p419, %p420
    %s423 = sadd.s32 %s422, 1
    %p426 = scmp.eq.s32.totalorder %s73, 1
    %p427 = scmp.ne.s32.totalorder %s422, %s424
    %p428 = scmp.eq.s32.totalorder %s73, 0
    %p429 = por %p427, %p428
    %p430 = scmp.ne.s32.totalorder %s422, %s424
    %p431 = scmp.eq.s32.totalorder %s78, 1
    %p432 = por %p430, %p431
    %p433 = scmp.ne.s32.totalorder %s424, %s425
    %p434 = scmp.eq.s32.totalorder %s78, 0
    %p435 = por %p433, %p434
    %p436 = scmp.ne.s32.totalorder %s424, %s425
    %p437 = scmp.eq.s32.totalorder %s79, 1
    %p438 = por %p436, %p437
    %p440 = scmp.ne.s32.totalorder %s425, %s439
    %p441 = scmp.eq.s32.totalorder %s79, 0
    %p442 = por %p440, %p441
    %s444 = sadd.s32 %s443, 1
    %p447 = scmp.eq.s32.totalorder %s73, 1
    %p448 = scmp.ne.s32.totalorder %s443, %s445
    %p449 = scmp.eq.s32.totalorder %s73, 0
    %p450 = por %p448, %p449
    %p451 = scmp.ne.s32.totalorder %s443, %s445
    %p452 = scmp.eq.s32.totalorder %s78, 1
    %p453 = por %p451, %p452
    %p454 = scmp.ne.s32.totalorder %s445, %s446
    %p455 = scmp.eq.s32.totalorder %s78, 0
    %p456 = por %p454, %p455
    %p457 = scmp.ne.s32.totalorder %s445, %s446
    %p458 = scmp.eq.s32.totalorder %s79, 1
    %p459 = por %p457, %p458
    %p461 = scmp.ne.s32.totalorder %s446, %s460
    %p462 = scmp.eq.s32.totalorder %s79, 0
    %p463 = por %p461, %p462
    %s465 = sadd.s32 %s464, 1
    %p468 = scmp.eq.s32.totalorder %s73, 1
    %p469 = scmp.ne.s32.totalorder %s464, %s466
    %p470 = scmp.eq.s32.totalorder %s73, 0
    %p471 = por %p469, %p470
    %p472 = scmp.ne.s32.totalorder %s464, %s466
    %p473 = scmp.eq.s32.totalorder %s78, 1
    %p474 = por %p472, %p473
    %p475 = scmp.ne.s32.totalorder %s466, %s467
    %p476 = scmp.eq.s32.totalorder %s78, 0
    %p477 = por %p475, %p476
    %p478 = scmp.ne.s32.totalorder %s466, %s467
    %p479 = scmp.eq.s32.totalorder %s79, 1
    %p480 = por %p478, %p479
    %p482 = scmp.ne.s32.totalorder %s467, %s481
    %p483 = scmp.eq.s32.totalorder %s79, 0
    %p484 = por %p482, %p483
    %s486 = sadd.s32 %s485, 1
    %p489 = scmp.eq.s32.totalorder %s73, 1
    %p490 = scmp.ne.s32.totalorder %s485, %s487
    %p491 = scmp.eq.s32.totalorder %s73, 0
    %p492 = por %p490, %p491
    %p493 = scmp.ne.s32.totalorder %s485, %s487
    %p494 = scmp.eq.s32.totalorder %s78, 1
    %p495 = por %p493, %p494
    %p496 = scmp.ne.s32.totalorder %s487, %s488
    %p497 = scmp.eq.s32.totalorder %s78, 0
    %p498 = por %p496, %p497
    %p499 = scmp.ne.s32.totalorder %s487, %s488
    %p500 = scmp.eq.s32.totalorder %s79, 1
    %p501 = por %p499, %p500
    %p503 = scmp.ne.s32.totalorder %s488, %s502
    %p504 = scmp.eq.s32.totalorder %s79, 0
    %p505 = por %p503, %p504
    %s507 = sadd.s32 %s506, 1
    %p510 = scmp.eq.s32.totalorder %s73, 1
    %p511 = scmp.ne.s32.totalorder %s506, %s508
    %p512 = scmp.eq.s32.totalorder %s73, 0
    %p513 = por %p511, %p512
    %p514 = scmp.ne.s32.totalorder %s506, %s508
    %p515 = scmp.eq.s32.totalorder %s78, 1
    %p516 = por %p514, %p515
    %p517 = scmp.ne.s32.totalorder %s508, %s509
    %p518 = scmp.eq.s32.totalorder %s78, 0
    %p519 = por %p517, %p518
    %p520 = scmp.ne.s32.totalorder %s508, %s509
    %p521 = scmp.eq.s32.totalorder %s79, 1
    %p522 = por %p520, %p521
    %p524 = scmp.ne.s32.totalorder %s509, %s523
    %p525 = scmp.eq.s32.totalorder %s79, 0
    %p526 = por %p524, %p525
    %s528 = sadd.s32 %s527, 1
    %p531 = scmp.eq.s32.totalorder %s73, 1
    %p532 = scmp.ne.s32.totalorder %s527, %s529
    %p533 = scmp.eq.s32.totalorder %s73, 0
    %p534 = por %p532, %p533
    %p535 = scmp.ne.s32.totalorder %s527, %s529
    %p536 = scmp.eq.s32.totalorder %s78, 1
    %p537 = por %p535, %p536
    %p538 = scmp.ne.s32.totalorder %s529, %s530
    %p539 = scmp.eq.s32.totalorder %s78, 0
    %p540 = por %p538, %p539
    %p541 = scmp.ne.s32.totalorder %s529, %s530
    %p542 = scmp.eq.s32.totalorder %s79, 1
    %p543 = por %p541, %p542
    %p545 = scmp.ne.s32.totalorder %s530, %s544
    %p546 = scmp.eq.s32.totalorder %s79, 0
    %p547 = por %p545, %p546
    %s549 = sadd.s32 %s548, 1
    %p552 = scmp.eq.s32.totalorder %s73, 1
    %p553 = scmp.ne.s32.totalorder %s548, %s550
    %p554 = scmp.eq.s32.totalorder %s73, 0
    %p555 = por %p553, %p554
    %p556 = scmp.ne.s32.totalorder %s548, %s550
    %p557 = scmp.eq.s32.totalorder %s78, 1
    %p558 = por %p556, %p557
    %p559 = scmp.ne.s32.totalorder %s550, %s551
    %p560 = scmp.eq.s32.totalorder %s78, 0
    %p561 = por %p559, %p560
    %p562 = scmp.ne.s32.totalorder %s550, %s551
    %p563 = scmp.eq.s32.totalorder %s79, 1
    %p564 = por %p562, %p563
    %p566 = scmp.ne.s32.totalorder %s551, %s565
    %p567 = scmp.eq.s32.totalorder %s79, 0
    %p568 = por %p566, %p567
    %s570 = sadd.s32 %s569, 1
    %p573 = scmp.eq.s32.totalorder %s73, 1
    %p574 = scmp.ne.s32.totalorder %s569, %s571
    %p575 = scmp.eq.s32.totalorder %s73, 0
    %p576 = por %p574, %p575
    %p577 = scmp.ne.s32.totalorder %s569, %s571
    %p578 = scmp.eq.s32.totalorder %s78, 1
    %p579 = por %p577, %p578
    %p580 = scmp.ne.s32.totalorder %s571, %s572
    %p581 = scmp.eq.s32.totalorder %s78, 0
    %p582 = por %p580, %p581
    %p583 = scmp.ne.s32.totalorder %s571, %s572
    %p584 = scmp.eq.s32.totalorder %s79, 1
    %p585 = por %p583, %p584
    %p587 = scmp.ne.s32.totalorder %s572, %s586
    %p588 = scmp.eq.s32.totalorder %s79, 0
    %p589 = por %p587, %p588
    %s591 = sadd.s32 %s590, 1
    %p594 = scmp.eq.s32.totalorder %s73, 1
    %p595 = scmp.ne.s32.totalorder %s590, %s592
    %p596 = scmp.eq.s32.totalorder %s73, 0
    %p597 = por %p595, %p596
    %p598 = scmp.ne.s32.totalorder %s590, %s592
    %p599 = scmp.eq.s32.totalorder %s78, 1
    %p600 = por %p598, %p599
    %p601 = scmp.ne.s32.totalorder %s592, %s593
    %p602 = scmp.eq.s32.totalorder %s78, 0
    %p603 = por %p601, %p602
    %p604 = scmp.ne.s32.totalorder %s592, %s593
    %p605 = scmp.eq.s32.totalorder %s79, 1
    %p606 = por %p604, %p605
    %p608 = scmp.ne.s32.totalorder %s593, %s607
    %p609 = scmp.eq.s32.totalorder %s79, 0
    %p610 = por %p608, %p609
    %s612 = sadd.s32 %s611, 1
    %p615 = scmp.eq.s32.totalorder %s73, 1
    %p616 = scmp.ne.s32.totalorder %s611, %s613
    %p617 = scmp.eq.s32.totalorder %s73, 0
    %p618 = por %p616, %p617
    %p619 = scmp.ne.s32.totalorder %s611, %s613
    %p620 = scmp.eq.s32.totalorder %s78, 1
    %p621 = por %p619, %p620
    %p622 = scmp.ne.s32.totalorder %s613, %s614
    %p623 = scmp.eq.s32.totalorder %s78, 0
    %p624 = por %p622, %p623
    %p625 = scmp.ne.s32.totalorder %s613, %s614
    %p626 = scmp.eq.s32.totalorder %s79, 1
    %p627 = por %p625, %p626
    %p629 = scmp.ne.s32.totalorder %s614, %s628
    %p630 = scmp.eq.s32.totalorder %s79, 0
    %p631 = por %p629, %p630
    %s633 = sadd.s32 %s632, 1
    %p636 = scmp.eq.s32.totalorder %s73, 1
    %p637 = scmp.ne.s32.totalorder %s632, %s634
    %p638 = scmp.eq.s32.totalorder %s73, 0
    %p639 = por %p637, %p638
    %p640 = scmp.ne.s32.totalorder %s632, %s634
    %p641 = scmp.eq.s32.totalorder %s78, 1
    %p642 = por %p640, %p641
    %p643 = scmp.ne.s32.totalorder %s634, %s635
    %p644 = scmp.eq.s32.totalorder %s78, 0
    %p645 = por %p643, %p644
    %p646 = scmp.ne.s32.totalorder %s634, %s635
    %p647 = scmp.eq.s32.totalorder %s79, 1
    %p648 = por %p646, %p647
    %p650 = scmp.ne.s32.totalorder %s635, %s649
    %p651 = scmp.eq.s32.totalorder %s79, 0
    %p652 = por %p650, %p651
    %s654 = sadd.s32 %s653, 1
    %p657 = scmp.eq.s32.totalorder %s73, 1
    %p658 = scmp.ne.s32.totalorder %s653, %s655
    %p659 = scmp.eq.s32.totalorder %s73, 0
    %p660 = por %p658, %p659
    %p661 = scmp.ne.s32.totalorder %s653, %s655
    %p662 = scmp.eq.s32.totalorder %s78, 1
    %p663 = por %p661, %p662
    %p664 = scmp.ne.s32.totalorder %s655, %s656
    %p665 = scmp.eq.s32.totalorder %s78, 0
    %p666 = por %p664, %p665
    %p667 = scmp.ne.s32.totalorder %s655, %s656
    %p668 = scmp.eq.s32.totalorder %s79, 1
    %p669 = por %p667, %p668
    %p671 = scmp.ne.s32.totalorder %s656, %s670
    %p672 = scmp.eq.s32.totalorder %s79, 0
    %p673 = por %p671, %p672
    %s675 = sadd.s32 %s674, 1
    %p678 = scmp.eq.s32.totalorder %s73, 1
    %p679 = scmp.ne.s32.totalorder %s674, %s676
    %p680 = scmp.eq.s32.totalorder %s73, 0
    %p681 = por %p679, %p680
    %p682 = scmp.ne.s32.totalorder %s674, %s676
    %p683 = scmp.eq.s32.totalorder %s78, 1
    %p684 = por %p682, %p683
    %p685 = scmp.ne.s32.totalorder %s676, %s677
    %p686 = scmp.eq.s32.totalorder %s78, 0
    %p687 = por %p685, %p686
    %p688 = scmp.ne.s32.totalorder %s676, %s677
    %p689 = scmp.eq.s32.totalorder %s79, 1
    %p690 = por %p688, %p689
    %p692 = scmp.ne.s32.totalorder %s677, %s691
    %p693 = scmp.eq.s32.totalorder %s79, 0
    %p694 = por %p692, %p693
    %s696 = sadd.s32 %s695, 1
    %p699 = scmp.eq.s32.totalorder %s73, 1
    %p700 = scmp.ne.s32.totalorder %s695, %s697
    %p701 = scmp.eq.s32.totalorder %s73, 0
    %p702 = por %p700, %p701
    %p703 = scmp.ne.s32.totalorder %s695, %s697
    %p704 = scmp.eq.s32.totalorder %s78, 1
    %p705 = por %p703, %p704
    %p706 = scmp.ne.s32.totalorder %s697, %s698
    %p707 = scmp.eq.s32.totalorder %s78, 0
    %p708 = por %p706, %p707
    %p709 = scmp.ne.s32.totalorder %s697, %s698
    %p710 = scmp.eq.s32.totalorder %s79, 1
    %p711 = por %p709, %p710
    %p713 = scmp.ne.s32.totalorder %s698, %s712
    %p714 = scmp.eq.s32.totalorder %s79, 0
    %p715 = por %p713, %p714
    %s717 = sadd.s32 %s716, 1
    %p720 = scmp.eq.s32.totalorder %s73, 1
    %p721 = scmp.ne.s32.totalorder %s716, %s718
    %p722 = scmp.eq.s32.totalorder %s73, 0
    %p723 = por %p721, %p722
    %p724 = scmp.ne.s32.totalorder %s716, %s718
    %p725 = scmp.eq.s32.totalorder %s78, 1
    %p726 = por %p724, %p725
    %p727 = scmp.ne.s32.totalorder %s718, %s719
    %p728 = scmp.eq.s32.totalorder %s78, 0
    %p729 = por %p727, %p728
    %p730 = scmp.ne.s32.totalorder %s718, %s719
    %p731 = scmp.eq.s32.totalorder %s79, 1
    %p732 = por %p730, %p731
    %p734 = scmp.ne.s32.totalorder %s719, %s733
    %p735 = scmp.eq.s32.totalorder %s79, 0
    %p736 = por %p734, %p735
    %s738 = sadd.s32 %s737, 1
    %p741 = scmp.eq.s32.totalorder %s73, 1
    %p742 = scmp.ne.s32.totalorder %s737, %s739
    %p743 = scmp.eq.s32.totalorder %s73, 0
    %p744 = por %p742, %p743
    %p745 = scmp.ne.s32.totalorder %s737, %s739
    %p746 = scmp.eq.s32.totalorder %s78, 1
    %p747 = por %p745, %p746
    %p748 = scmp.ne.s32.totalorder %s739, %s740
    %p749 = scmp.eq.s32.totalorder %s78, 0
    %p750 = por %p748, %p749
    %p751 = scmp.ne.s32.totalorder %s739, %s740
    %p752 = scmp.eq.s32.totalorder %s79, 1
    %p753 = por %p751, %p752
    %p755 = scmp.ne.s32.totalorder %s740, %s754
    %p756 = scmp.eq.s32.totalorder %s79, 0
    %p757 = por %p755, %p756
    %s759 = sadd.s32 %s758, 1
    %p762 = scmp.eq.s32.totalorder %s73, 1
    %p763 = scmp.ne.s32.totalorder %s758, %s760
    %p764 = scmp.eq.s32.totalorder %s73, 0
    %p765 = por %p763, %p764
    %p766 = scmp.ne.s32.totalorder %s758, %s760
    %p767 = scmp.eq.s32.totalorder %s78, 1
    %p768 = por %p766, %p767
    %p769 = scmp.ne.s32.totalorder %s760, %s761
    %p770 = scmp.eq.s32.totalorder %s78, 0
    %p771 = por %p769, %p770
    %p772 = scmp.ne.s32.totalorder %s760, %s761
    %p773 = scmp.eq.s32.totalorder %s79, 1
    %p774 = por %p772, %p773
    %p776 = scmp.ne.s32.totalorder %s761, %s775
    %p777 = scmp.eq.s32.totalorder %s79, 0
    %p778 = por %p776, %p777
    %s779 = ssub.s32 %s73, %s80
    %p780 = scmp.eq.s32.totalorder %s779, 0
    %s782 = sadd.s32 %s781, 1
    %s783 = scalar_select %p780, %s781, %s782
    %p786 = pneg %p780
    %p787 = scmp.eq.s32.totalorder %s73, 1
    %p788 = por %p786, %p787
    %p789 = scmp.ne.s32.totalorder %s781, %s784
    %p790 = scmp.eq.s32.totalorder %s73, 0
    %p791 = por %p789, %p790
    %p792 = scmp.ne.s32.totalorder %s781, %s784
    %p793 = scmp.eq.s32.totalorder %s78, 1
    %p794 = por %p792, %p793
    %p795 = scmp.ne.s32.totalorder %s784, %s785
    %p796 = scmp.eq.s32.totalorder %s78, 0
    %p797 = por %p795, %p796
    %p798 = scmp.ne.s32.totalorder %s784, %s785
    %p799 = scmp.eq.s32.totalorder %s79, 1
    %p800 = por %p798, %p799
    %p802 = scmp.ne.s32.totalorder %s785, %s801
    %p803 = scmp.eq.s32.totalorder %s79, 0
    %p804 = por %p802, %p803
    %p805 = scmp.le.s32.totalorder 1, %s73
    %p806 = scmp.lt.s32.totalorder %s73, 3
    %p807 = pnand %p805, %p806
    %p808 = pneg %p807
    // Predicated region
    $region9: #{vit_forward.1} parent=5 // pred_check
      _
    $region10: #{vit_forward.1} parent=5 // pred_check_branch
      %810 = sbr.rel (%p807) target = $region12
    $region11: #{vit_forward.1} parent=5 // pred_region
      %s811 = ssub.s32 %s73, 1
      // Predicated region
      $region13: #{vit_forward.1} parent=11 // pred_check
        %p812 = pneg %p120
      $region14: #{vit_forward.1} parent=11 // pred_check_branch
        %814 = sbr.rel (%p812) target = $region16
      $region15: #{vit_forward.1} parent=11 // pred_region
        _
      $region16: #{vit_forward.1} parent=11 // pred_fallthru
        _
      // Predicated region
      $region17: #{vit_forward.1} parent=11 // pred_check
        %p815 = pneg %p141
      $region18: #{vit_forward.1} parent=11 // pred_check_branch
        %817 = sbr.rel (%p815) target = $region20
      $region19: #{vit_forward.1} parent=11 // pred_region
        _
      $region20: #{vit_forward.1} parent=11 // pred_fallthru
        _
      // Predicated region
      $region21: #{vit_forward.1} parent=11 // pred_check
        %p818 = pneg %p162
      $region22: #{vit_forward.1} parent=11 // pred_check_branch
        %820 = sbr.rel (%p818) target = $region24
      $region23: #{vit_forward.1} parent=11 // pred_region
        _
      $region24: #{vit_forward.1} parent=11 // pred_fallthru
        _
      // Predicated region
      $region25: #{vit_forward.1} parent=11 // pred_check
        %p821 = pneg %p183
      $region26: #{vit_forward.1} parent=11 // pred_check_branch
        %823 = sbr.rel (%p821) target = $region28
      $region27: #{vit_forward.1} parent=11 // pred_region
        _
      $region28: #{vit_forward.1} parent=11 // pred_fallthru
        _
      // Predicated region
      $region29: #{vit_forward.1} parent=11 // pred_check
        %p824 = pneg %p204
      $region30: #{vit_forward.1} parent=11 // pred_check_branch
        %826 = sbr.rel (%p824) target = $region32
      $region31: #{vit_forward.1} parent=11 // pred_region
        _
      $region32: #{vit_forward.1} parent=11 // pred_fallthru
        _
      // Predicated region
      $region33: #{vit_forward.1} parent=11 // pred_check
        %p827 = pneg %p225
      $region34: #{vit_forward.1} parent=11 // pred_check_branch
        %829 = sbr.rel (%p827) target = $region36
      $region35: #{vit_forward.1} parent=11 // pred_region
        _
      $region36: #{vit_forward.1} parent=11 // pred_fallthru
        _
      // Predicated region
      $region37: #{vit_forward.1} parent=11 // pred_check
        %p830 = pneg %p246
      $region38: #{vit_forward.1} parent=11 // pred_check_branch
        %832 = sbr.rel (%p830) target = $region40
      $region39: #{vit_forward.1} parent=11 // pred_region
        _
      $region40: #{vit_forward.1} parent=11 // pred_fallthru
        _
      // Predicated region
      $region41: #{vit_forward.1} parent=11 // pred_check
        %p833 = pneg %p267
      $region42: #{vit_forward.1} parent=11 // pred_check_branch
        %835 = sbr.rel (%p833) target = $region44
      $region43: #{vit_forward.1} parent=11 // pred_region
        _
      $region44: #{vit_forward.1} parent=11 // pred_fallthru
        _
      // Predicated region
      $region45: #{vit_forward.1} parent=11 // pred_check
        %p836 = pneg %p288
      $region46: #{vit_forward.1} parent=11 // pred_check_branch
        %838 = sbr.rel (%p836) target = $region48
      $region47: #{vit_forward.1} parent=11 // pred_region
        _
      $region48: #{vit_forward.1} parent=11 // pred_fallthru
        _
      // Predicated region
      $region49: #{vit_forward.1} parent=11 // pred_check
        %p839 = pneg %p309
      $region50: #{vit_forward.1} parent=11 // pred_check_branch
        %841 = sbr.rel (%p839) target = $region52
      $region51: #{vit_forward.1} parent=11 // pred_region
        _
      $region52: #{vit_forward.1} parent=11 // pred_fallthru
        _
      // Predicated region
      $region53: #{vit_forward.1} parent=11 // pred_check
        %p842 = pneg %p330
      $region54: #{vit_forward.1} parent=11 // pred_check_branch
        %844 = sbr.rel (%p842) target = $region56
      $region55: #{vit_forward.1} parent=11 // pred_region
        _
      $region56: #{vit_forward.1} parent=11 // pred_fallthru
        _
      // Predicated region
      $region57: #{vit_forward.1} parent=11 // pred_check
        %p845 = pneg %p351
      $region58: #{vit_forward.1} parent=11 // pred_check_branch
        %847 = sbr.rel (%p845) target = $region60
      $region59: #{vit_forward.1} parent=11 // pred_region
        _
      $region60: #{vit_forward.1} parent=11 // pred_fallthru
        _
      // Predicated region
      $region61: #{vit_forward.1} parent=11 // pred_check
        %p848 = pneg %p372
      $region62: #{vit_forward.1} parent=11 // pred_check_branch
        %850 = sbr.rel (%p848) target = $region64
      $region63: #{vit_forward.1} parent=11 // pred_region
        _
      $region64: #{vit_forward.1} parent=11 // pred_fallthru
        _
      // Predicated region
      $region65: #{vit_forward.1} parent=11 // pred_check
        %p851 = pneg %p393
      $region66: #{vit_forward.1} parent=11 // pred_check_branch
        %853 = sbr.rel (%p851) target = $region68
      $region67: #{vit_forward.1} parent=11 // pred_region
        _
      $region68: #{vit_forward.1} parent=11 // pred_fallthru
        _
      // Predicated region
      $region69: #{vit_forward.1} parent=11 // pred_check
        %p854 = pneg %p414
      $region70: #{vit_forward.1} parent=11 // pred_check_branch
        %856 = sbr.rel (%p854) target = $region72
      $region71: #{vit_forward.1} parent=11 // pred_region
        _
      $region72: #{vit_forward.1} parent=11 // pred_fallthru
        _
      // Predicated region
      $region73: #{vit_forward.1} parent=11 // pred_check
        %p857 = pneg %p435
      $region74: #{vit_forward.1} parent=11 // pred_check_branch
        %859 = sbr.rel (%p857) target = $region76
      $region75: #{vit_forward.1} parent=11 // pred_region
        _
      $region76: #{vit_forward.1} parent=11 // pred_fallthru
        _
      // Predicated region
      $region77: #{vit_forward.1} parent=11 // pred_check
        %p860 = pneg %p456
      $region78: #{vit_forward.1} parent=11 // pred_check_branch
        %862 = sbr.rel (%p860) target = $region80
      $region79: #{vit_forward.1} parent=11 // pred_region
        _
      $region80: #{vit_forward.1} parent=11 // pred_fallthru
        _
      // Predicated region
      $region81: #{vit_forward.1} parent=11 // pred_check
        %p863 = pneg %p477
      $region82: #{vit_forward.1} parent=11 // pred_check_branch
        %865 = sbr.rel (%p863) target = $region84
      $region83: #{vit_forward.1} parent=11 // pred_region
        _
      $region84: #{vit_forward.1} parent=11 // pred_fallthru
        _
      // Predicated region
      $region85: #{vit_forward.1} parent=11 // pred_check
        %p866 = pneg %p498
      $region86: #{vit_forward.1} parent=11 // pred_check_branch
        %868 = sbr.rel (%p866) target = $region88
      $region87: #{vit_forward.1} parent=11 // pred_region
        _
      $region88: #{vit_forward.1} parent=11 // pred_fallthru
        _
      // Predicated region
      $region89: #{vit_forward.1} parent=11 // pred_check
        %p869 = pneg %p519
      $region90: #{vit_forward.1} parent=11 // pred_check_branch
        %871 = sbr.rel (%p869) target = $region92
      $region91: #{vit_forward.1} parent=11 // pred_region
        _
      $region92: #{vit_forward.1} parent=11 // pred_fallthru
        _
      // Predicated region
      $region93: #{vit_forward.1} parent=11 // pred_check
        %p872 = pneg %p540
      $region94: #{vit_forward.1} parent=11 // pred_check_branch
        %874 = sbr.rel (%p872) target = $region96
      $region95: #{vit_forward.1} parent=11 // pred_region
        _
      $region96: #{vit_forward.1} parent=11 // pred_fallthru
        _
      // Predicated region
      $region97: #{vit_forward.1} parent=11 // pred_check
        %p875 = pneg %p561
      $region98: #{vit_forward.1} parent=11 // pred_check_branch
        %877 = sbr.rel (%p875) target = $region100
      $region99: #{vit_forward.1} parent=11 // pred_region
        _
      $region100: #{vit_forward.1} parent=11 // pred_fallthru
        _
      // Predicated region
      $region101: #{vit_forward.1} parent=11 // pred_check
        %p878 = pneg %p582
      $region102: #{vit_forward.1} parent=11 // pred_check_branch
        %880 = sbr.rel (%p878) target = $region104
      $region103: #{vit_forward.1} parent=11 // pred_region
        _
      $region104: #{vit_forward.1} parent=11 // pred_fallthru
        _
      // Predicated region
      $region105: #{vit_forward.1} parent=11 // pred_check
        %p881 = pneg %p603
      $region106: #{vit_forward.1} parent=11 // pred_check_branch
        %883 = sbr.rel (%p881) target = $region108
      $region107: #{vit_forward.1} parent=11 // pred_region
        _
      $region108: #{vit_forward.1} parent=11 // pred_fallthru
        _
      // Predicated region
      $region109: #{vit_forward.1} parent=11 // pred_check
        %p884 = pneg %p624
      $region110: #{vit_forward.1} parent=11 // pred_check_branch
        %886 = sbr.rel (%p884) target = $region112
      $region111: #{vit_forward.1} parent=11 // pred_region
        _
      $region112: #{vit_forward.1} parent=11 // pred_fallthru
        _
      // Predicated region
      $region113: #{vit_forward.1} parent=11 // pred_check
        %p887 = pneg %p645
      $region114: #{vit_forward.1} parent=11 // pred_check_branch
        %889 = sbr.rel (%p887) target = $region116
      $region115: #{vit_forward.1} parent=11 // pred_region
        _
      $region116: #{vit_forward.1} parent=11 // pred_fallthru
        _
      // Predicated region
      $region117: #{vit_forward.1} parent=11 // pred_check
        %p890 = pneg %p666
      $region118: #{vit_forward.1} parent=11 // pred_check_branch
        %892 = sbr.rel (%p890) target = $region120
      $region119: #{vit_forward.1} parent=11 // pred_region
        _
      $region120: #{vit_forward.1} parent=11 // pred_fallthru
        _
      // Predicated region
      $region121: #{vit_forward.1} parent=11 // pred_check
        %p893 = pneg %p687
      $region122: #{vit_forward.1} parent=11 // pred_check_branch
        %895 = sbr.rel (%p893) target = $region124
      $region123: #{vit_forward.1} parent=11 // pred_region
        _
      $region124: #{vit_forward.1} parent=11 // pred_fallthru
        _
      // Predicated region
      $region125: #{vit_forward.1} parent=11 // pred_check
        %p896 = pneg %p708
      $region126: #{vit_forward.1} parent=11 // pred_check_branch
        %898 = sbr.rel (%p896) target = $region128
      $region127: #{vit_forward.1} parent=11 // pred_region
        _
      $region128: #{vit_forward.1} parent=11 // pred_fallthru
        _
      // Predicated region
      $region129: #{vit_forward.1} parent=11 // pred_check
        %p899 = pneg %p729
      $region130: #{vit_forward.1} parent=11 // pred_check_branch
        %901 = sbr.rel (%p899) target = $region132
      $region131: #{vit_forward.1} parent=11 // pred_region
        _
      $region132: #{vit_forward.1} parent=11 // pred_fallthru
        _
      // Predicated region
      $region133: #{vit_forward.1} parent=11 // pred_check
        %p902 = pneg %p750
      $region134: #{vit_forward.1} parent=11 // pred_check_branch
        %904 = sbr.rel (%p902) target = $region136
      $region135: #{vit_forward.1} parent=11 // pred_region
        _
      $region136: #{vit_forward.1} parent=11 // pred_fallthru
        _
      // Predicated region
      $region137: #{vit_forward.1} parent=11 // pred_check
        %p905 = pneg %p771
      $region138: #{vit_forward.1} parent=11 // pred_check_branch
        %907 = sbr.rel (%p905) target = $region140
      $region139: #{vit_forward.1} parent=11 // pred_region
        _
      $region140: #{vit_forward.1} parent=11 // pred_fallthru
        _
    $region12: #{vit_forward.1} parent=5 // pred_fallthru
      _
    %p908 = scmp.lt.s32.totalorder %s73, 2
    // Predicated region
    $region141: #{vit_forward.1} parent=5 // pred_check
      %p909 = pneg %p908
    $region142: #{vit_forward.1} parent=5 // pred_check_branch
      %911 = sbr.rel (%p909) target = $region144
    $region143: #{vit_forward.1} parent=5 // pred_region
      // Predicated region
      $region145: #{vit_forward.1} parent=143 // pred_check
        %p912 = pneg %p93
      $region146: #{vit_forward.1} parent=143 // pred_check_branch
        %914 = sbr.rel (%p912) target = $region148
      $region147: #{vit_forward.1} parent=143 // pred_region
        %p915 = scmp.lt.s32.totalorder %s73, 1
        %s916 = scalar_select %p915, %s73, 1
        %s917 = smul.addr %s916, 2
        %s918 = smul.addr %s917, 4
        %s919 = scalar_lea.vmem %s1, %s918
      $region148: #{vit_forward.1} parent=143 // pred_fallthru
        _
    $region144: #{vit_forward.1} parent=5 // pred_fallthru
      _
    %p920 = scmp.le.s32.totalorder 1, %s73
    %p921 = scmp.lt.s32.totalorder %s73, 3
    %p922 = pnand %p920, %p921
    %p923 = pneg %p922
    // Predicated region
    $region149: #{vit_forward.1} parent=5 // pred_check
      _
    $region150: #{vit_forward.1} parent=5 // pred_check_branch
      %925 = sbr.rel (%p922) target = $region152
    $region151: #{vit_forward.1} parent=5 // pred_region
      %s926 = ssub.s32 %s73, 1
      %p927 = scmp.lt.s32.totalorder %s78, 1
      %s928 = scalar_select %p927, %s78, 1
      %s929 = smul.addr %s928, 2
      %s930 = smul.addr %s929, 4
      %s931 = scalar_lea.vmem %s1, %s930
      %p932 = pneg %p99
      %p933 = pneg %p96
      %p934 = pneg %p120
      %p935 = pneg %p117
      %p936 = pneg %p141
      %p937 = pneg %p138
      %p938 = pneg %p162
      %p939 = pneg %p159
      %p940 = pneg %p183
      %p941 = pneg %p180
      %p942 = pneg %p204
      %p943 = pneg %p201
      %p944 = pneg %p225
      %p945 = pneg %p222
      %p946 = pneg %p246
      %p947 = pneg %p243
      %p948 = pneg %p267
      %p949 = pneg %p264
      %p950 = pneg %p288
      %p951 = pneg %p285
      %p952 = pneg %p309
      %p953 = pneg %p306
      %p954 = pneg %p330
      %p955 = pneg %p327
      %p956 = pneg %p351
      %p957 = pneg %p348
      %p958 = pneg %p372
      %p959 = pneg %p369
      %p960 = pneg %p393
      %p961 = pneg %p390
      %p962 = pneg %p414
      %p963 = pneg %p411
      %p964 = pneg %p435
      %p965 = pneg %p432
      %p966 = pneg %p456
      %p967 = pneg %p453
      %p968 = pneg %p477
      %p969 = pneg %p474
      %p970 = pneg %p498
      %p971 = pneg %p495
      %p972 = pneg %p519
      %p973 = pneg %p516
      %p974 = pneg %p540
      %p975 = pneg %p537
      %p976 = pneg %p561
      %p977 = pneg %p558
      %p978 = pneg %p582
      %p979 = pneg %p579
      %p980 = pneg %p603
      %p981 = pneg %p600
      %p982 = pneg %p624
      %p983 = pneg %p621
      %p984 = pneg %p645
      %p985 = pneg %p642
      %p986 = pneg %p666
      %p987 = pneg %p663
      %p988 = pneg %p687
      %p989 = pneg %p684
      %p990 = pneg %p708
      %p991 = pneg %p705
      %p992 = pneg %p729
      %p993 = pneg %p726
      %p994 = pneg %p750
      %p995 = pneg %p747
      %p996 = pneg %p771
      %p997 = pneg %p768
      %p998 = pneg %p797
      %p999 = pneg %p794
      %p1000 = scmp.lt.s32.totalorder %s78, 1
      %s1001 = scalar_select %p1000, %s78, 1
      %s1002 = smul.addr %s1001, 2
      %s1003 = scalar_lea.vmem %s67, %s1002
      %p1004 = scmp.lt.s32.totalorder %s78, 1
      %s1005 = scalar_select %p1004, %s78, 1
      %s1006 = smul.addr %s1005, 2
      %s1007 = smul.addr %s1006, 4
      %s1008 = scalar_lea.vmem %s1, %s1007
      %p1009 = scmp.lt.s32.totalorder %s78, 1
      %s1010 = scalar_select %p1009, %s78, 1
      %s1011 = smul.addr %s1010, 2
      %s1012 = scalar_lea.vmem %s67, %s1011
      %v1013 = vld [vmem:[%s1008] sm:$0xff]
      %v1014 = vld [vmem:[%s3] sm:$0xff]
      %v1015 = vld [vmem:[%s3 + $0x8] sm:$0xff]
      %v1016 = vld [vmem:[%s3 + $0x10] sm:$0xff]
      %v1017 = vld [vmem:[%s3 + $0x18] sm:$0xff]
      %v1018 = vld [vmem:[%s3 + $0x20] sm:$0xff]
      %v1019 = vld [vmem:[%s3 + $0x28] sm:$0xff]
      %v1020 = vld [vmem:[%s3 + $0x30] sm:$0xff]
      %v1021 = vld [vmem:[%s3 + $0x38] sm:$0xff]
      %v1022 = vld [vmem:[%s3 + $0x40] sm:$0xff]
      %v1023 = vld [vmem:[%s3 + $0x48] sm:$0xff]
      %v1024 = vld [vmem:[%s3 + $0x50] sm:$0xff]
      %v1025 = vld [vmem:[%s3 + $0x58] sm:$0xff]
      %v1026 = vld [vmem:[%s3 + $0x60] sm:$0xff]
      %v1027 = vld [vmem:[%s3 + $0x68] sm:$0xff]
      %v1028 = vld [vmem:[%s3 + $0x70] sm:$0xff]
      %v1029 = vld [vmem:[%s3 + $0x78] sm:$0xff]
      %v1030 = vld [vmem:[%s3 + $0x80] sm:$0xff]
      %v1031 = vld [vmem:[%s3 + $0x88] sm:$0xff]
      %v1032 = vld [vmem:[%s3 + $0x90] sm:$0xff]
      %v1033 = vld [vmem:[%s3 + $0x98] sm:$0xff]
      %v1034 = vld [vmem:[%s3 + $0xa0] sm:$0xff]
      %v1035 = vld [vmem:[%s3 + $0xa8] sm:$0xff]
      %v1036 = vld [vmem:[%s3 + $0xb0] sm:$0xff]
      %v1037 = vld [vmem:[%s3 + $0xb8] sm:$0xff]
      %v1038 = vld [vmem:[%s5] sm:$0x1]
      %v1039 = vld [vmem:[%s7] sm:$0x1]
      %v1040 = vld [vmem:[%s9] sm:$0x1f]
      %v1042 = vperm.slane %v1038, 0
      %1045 = vst [vmem:[#allocation1] ss:$2 sm:$0xff] %v1013
      %v1046 = vld.sshfl [vmem:[#allocation1] sm:$0xff pattern:$0x75316420]
      %v1047 = vld.sshfl [vmem:[#allocation1 + $0x8] sm:$0xff pattern:$0x75316420]
      %vm1049 = vcmask 523264
      %v1050 = vsel %vm1049, %v1047, 0
      %1052 = vmatpush.msra.mxu0 %v1029
      %1053 = vmatpush.msra.mxu0 %v1028
      %1054 = vmatpush.msra.mxu0 %v1027
      %1055 = vmatpush.msra.mxu0 %v1026
      %1056 = vmatpush.msra.mxu0 %v1025
      %1057 = vmatpush.msra.mxu0 %v1024
      %1058 = vmatpush.msra.mxu0 %v1023
      %1059 = vmatpush.msra.mxu0 %v1022
      %1060 = vmatpush.msra.mxu0 %v1021
      %1061 = vmatpush.msra.mxu0 %v1020
      %1062 = vmatpush.msra.mxu0 %v1019
      %1063 = vmatpush.msra.mxu0 %v1018
      %1064 = vmatpush.msra.mxu0 %v1017
      %1065 = vmatpush.msra.mxu0 %v1016
      %1066 = vmatpush.msra.mxu0 %v1015
      %1067 = vmatpush.msra.mxu0 %v1014
      %1068 = vmatmul.f32.gmra.mxu0 %v1046
      %v1069 = vpop.f32.mrf.mxu0
      %v1070 = vadd.f32 %v1042, %v1069
      %1071 = vdwg.mxu0
      %1072 = vmatpush.msra.mxu0 0.0
      %1073 = vmatpush.msra.mxu0 0.0
      %1074 = vmatpush.msra.mxu0 0.0
      %1075 = vmatpush.msra.mxu0 0.0
      %1076 = vmatpush.msra.mxu0 0.0
      %1077 = vmatpush.msra.mxu0 0.0
      %1078 = vmatpush.msra.mxu0 0.0
      %1079 = vmatpush.msra.mxu0 0.0
      %1080 = vmatpush.msra.mxu0 %v1037
      %1081 = vmatpush.msra.mxu0 %v1036
      %1082 = vmatpush.msra.mxu0 %v1035
      %1083 = vmatpush.msra.mxu0 %v1034
      %1084 = vmatpush.msra.mxu0 %v1033
      %1085 = vmatpush.msra.mxu0 %v1032
      %1086 = vmatpush.msra.mxu0 %v1031
      %1087 = vmatpush.msra.mxu0 %v1030
      %1088 = vmatmul.f32.gmra.mxu0 %v1050
      %v1089 = vpop.f32.mrf.mxu0
      %v1090 = vadd.f32 %v1070, %v1089
      %1091 = vdwg.mxu0
      %v1092 = vadd.f32 %v1039, %v1040
      %vm1093 = vcmask 253952
      %1094 = vst.msk [vmem:[#allocation2] sm:$0x1] %vm1093, %v1092
      %v1096 = vrot.slane %v1040, 1
      %v1098 = vadd.f32 %v1090, %v1096
      %vm1099 = vcmask 257024
      %1100 = vst.msk [vmem:[#allocation2 + $0x1] sm:$0xf] %vm1099, %v1098
      %v1101 = vld [vmem:[%s11] sm:$0x1]
      %v1102 = vld [vmem:[%s13] sm:$0x1]
      %v1103 = vld [vmem:[%s15] sm:$0xff]
      %v1104 = vld [vmem:[%s15 + $0x8] sm:$0xff]
      %v1105 = vld [vmem:[%s15 + $0x10] sm:$0xff]
      %v1106 = vld [vmem:[%s15 + $0x18] sm:$0xff]
      %v1107 = vld [vmem:[%s17] sm:$0x1]
      %v1108 = vld [vmem:[%s19] sm:$0xff]
      %v1109 = vld [vmem:[%s19 + $0x8] sm:$0xff]
      %v1110 = vld [vmem:[%s19 + $0x10] sm:$0xff]
      %v1111 = vld [vmem:[%s19 + $0x18] sm:$0xff]
      %v1112 = vld [vmem:[%s21] sm:$0x1]
      %v1113 = vld [vmem:[%s23] sm:$0x1]
      %v1114 = vld [vmem:[%s25] sm:$0x1]
      %v1115 = vld [vmem:[%s27] sm:$0xff]
      %v1116 = vld [vmem:[%s27 + $0x8] sm:$0xff]
      %v1117 = vld [vmem:[%s27 + $0x10] sm:$0xff]
      %v1118 = vld [vmem:[%s27 + $0x18] sm:$0xff]
      %v1119 = vld [vmem:[%s29] sm:$0x1]
      %v1120 = vld [vmem:[%s31] sm:$0xff]
      %v1121 = vld [vmem:[%s31 + $0x8] sm:$0xff]
      %v1122 = vld [vmem:[%s31 + $0x10] sm:$0xff]
      %v1123 = vld [vmem:[%s31 + $0x18] sm:$0xff]
      %v1124 = vld [vmem:[%s31 + $0x20] sm:$0xff]
      %v1125 = vld [vmem:[%s31 + $0x28] sm:$0xff]
      %v1126 = vld [vmem:[%s31 + $0x30] sm:$0xff]
      %v1127 = vld [vmem:[%s31 + $0x38] sm:$0xff]
      %v1128 = vld [vmem:[%s33] sm:$0x1]
      %v1129 = vld [vmem:[#allocation2] sm:$0x1f]
      %vm1130 = vcmask 258048
      %v1131 = vsel %vm1130, %v1129, 0.0
      %1132 = vadd.xlane.f32.xlu0 %v1131
      %v1133 = vpop.xlane.xlu0 %1132
      %v1134 = vrcp.pop 32.0
      %v1135 = vmul.f32 32.0, %v1134
      %v1136 = vsub.f32 1.0, %v1135
      %v1137 = vmul.f32 %v1134, %v1136
      %v1138 = vadd.f32 %v1134, %v1137
      %vm1139 = vweird.f32 %v1134
      %v1140 = vsel %vm1139, %v1134, %v1138
      %v1141 = vmul.f32 %v1133, %v1140
      %v1142 = vsub.f32 %v1129, %v1141
      %v1143 = vmul.f32 %v1142, %v1142
      %v1144 = vsel %vm1130, %v1143, 0.0
      %1145 = vadd.xlane.f32.xlu0 %v1144
      %v1146 = vpop.xlane.xlu0 %1145
      %v1147 = vmul.f32 %v1146, %v1140
      %v1148 = vadd.f32 %v1147, 1e-06
      %v1149 = vrsqrt.pop %v1148
      %v1150 = vmul.f32 %v1149, %v1148
      %v1151 = vmul.f32 %v1150, %v1149
      %v1152 = vmul.f32 0.5, %v1151
      %v1153 = vsub.f32 1.5, %v1152
      %v1154 = vmul.f32 %v1149, %v1153
      %vm1155 = vweird.f32 %v1148
      %vm1156 = vweird.f32 %v1149
      %vm1157 = vmor %vm1155, %vm1156
      %v1158 = vsel %vm1157, %v1149, %v1154
      %v1159 = vmul.f32 %v1142, %v1158
      %v1161 = vperm.slane %v1101, 0
      %v1163 = vmul.f32 %v1159, %v1161
      %v1165 = vperm.slane %v1102, 0
      %v1167 = vadd.f32 %v1163, %v1165
      %v1169 = vperm.slane %v1107, 0
      %vm1171 = vcmask 261120
      %v1173 = vsel %vm1171, %v1167, 0
      %1175 = vmatpush.msra.mxu0 0.0
      %1176 = vmatpush.msra.mxu0 0.0
      %1177 = vmatpush.msra.mxu0 0.0
      %1178 = vmatpush.msra.mxu0 0.0
      %1179 = vmatpush.msra.mxu0 0.0
      %1180 = vmatpush.msra.mxu0 0.0
      %1181 = vmatpush.msra.mxu0 0.0
      %1182 = vmatpush.msra.mxu0 0.0
      %1183 = vmatpush.msra.mxu0 0.0
      %1184 = vmatpush.msra.mxu0 0.0
      %1185 = vmatpush.msra.mxu0 0.0
      %1186 = vmatpush.msra.mxu0 0.0
      %1187 = vmatpush.msra.mxu0 %v1106
      %1188 = vmatpush.msra.mxu0 %v1105
      %1189 = vmatpush.msra.mxu0 %v1104
      %1190 = vmatpush.msra.mxu0 %v1103
      %1191 = vmatmul.f32.gmra.mxu0 %v1173
      %v1192 = vpop.f32.mrf.mxu0
      %v1193 = vadd.f32 %v1169, %v1192
      %1194 = vdwg.mxu0
      %v1195 = vmul.f32 %v1193, 0.35355338
      %1197 = vrot.lane.b32.xlu0 %v1193, 96
      %v1198 = vpop.permute.xlu0 %1197
      %vm1199 = vcmask 64512
      %v1201 = vsel %vm1199, %v1195, 0
      %v1203 = vsel %vm1199, %v1198, 0
      %1205 = vmatpush.xpose.msra.mxu0 0.0
      %1206 = vmatpush.xpose.msra.mxu0 0.0
      %1207 = vmatpush.xpose.msra.mxu0 0.0
      %1208 = vmatpush.xpose.msra.mxu0 0.0
      %1209 = vmatpush.xpose.msra.mxu0 0.0
      %1210 = vmatpush.xpose.msra.mxu0 0.0
      %1211 = vmatpush.xpose.msra.mxu0 0.0
      %1212 = vmatpush.xpose.msra.mxu0 0.0
      %1213 = vmatpush.xpose.msra.mxu0 0.0
      %1214 = vmatpush.xpose.msra.mxu0 0.0
      %1215 = vmatpush.xpose.msra.mxu0 0.0
      %1216 = vmatpush.xpose.msra.mxu0 0.0
      %1217 = vmatpush.xpose.msra.mxu0 0.0
      %1218 = vmatpush.xpose.msra.mxu0 0.0
      %1219 = vmatpush.xpose.msra.mxu0 0.0
      %1220 = vmatpush.xpose.msra.mxu0 %v1203
      %1221 = vmatmul.f32.gmra.mxu0 %v1201
      %v1222 = vpop.f32.mrf.mxu0
      %v1223 = vadd.f32 0.0, %v1222
      %1224 = vdwg.mxu0
      %vm1225 = vcmask 36864
      %v1226 = vsel %vm1225, %v1223, -inf
      %1227 = vmax.xlane.f32.xlu0 %v1226
      %v1228 = vpop.xlane.xlu0 %1227
      %v1229 = vsub.f32 %v1223, %v1228
      %v1230 = vmul.f32 %v1229, 1.442695
      %v1231 = vpow.pop %v1230
      %v1232 = vsel %vm1225, %v1231, 0.0
      %1233 = vadd.xlane.f32.xlu0 %v1232
      %v1234 = vpop.xlane.xlu0 %1233
      %v1235 = vrcp.pop %v1234
      %v1236 = vmul.f32 %v1231, %v1235
      %1237 = vrot.lane.b32.xlu0 %v1193, 64
      %v1238 = vpop.permute.xlu0 %1237
      %vm1239 = vcmask 39936
      %v1241 = vsel %vm1239, %v1236, 0
      %vm1243 = vcmask 1044480
      %v1244 = vsel %vm1243, %v1238, 0
      %1246 = vmatpush.msra.mxu0 0.0
      %1247 = vmatpush.msra.mxu0 0.0
      %1248 = vmatpush.msra.mxu0 0.0
      %1249 = vmatpush.msra.mxu0 0.0
      %1250 = vmatpush.msra.mxu0 0.0
      %1251 = vmatpush.msra.mxu0 0.0
      %1252 = vmatpush.msra.mxu0 0.0
      %1253 = vmatpush.msra.mxu0 0.0
      %1254 = vmatpush.msra.mxu0 0.0
      %1255 = vmatpush.msra.mxu0 0.0
      %1256 = vmatpush.msra.mxu0 0.0
      %1257 = vmatpush.msra.mxu0 0.0
      %1258 = vmatpush.msra.mxu0 0.0
      %1259 = vmatpush.msra.mxu0 0.0
      %1260 = vmatpush.msra.mxu0 0.0
      %1261 = vmatpush.msra.mxu0 %v1244
      %1262 = vmatmul.f32.gmra.mxu0 %v1241
      %v1263 = vpop.f32.mrf.mxu0
      %v1264 = vadd.f32 0.0, %v1263
      %1265 = vdwg.mxu0
      %1266 = vrot.lane.b32.xlu0 %v1195, 120
      %v1267 = vpop.permute.xlu0 %1266
      %1268 = vrot.lane.b32.xlu0 %v1193, 88
      %v1269 = vpop.permute.xlu0 %1268
      %v1270 = vsel %vm1199, %v1267, 0
      %v1272 = vsel %vm1199, %v1269, 0
      %1274 = vmatpush.xpose.msra.mxu0 0.0
      %1275 = vmatpush.xpose.msra.mxu0 0.0
      %1276 = vmatpush.xpose.msra.mxu0 0.0
      %1277 = vmatpush.xpose.msra.mxu0 0.0
      %1278 = vmatpush.xpose.msra.mxu0 0.0
      %1279 = vmatpush.xpose.msra.mxu0 0.0
      %1280 = vmatpush.xpose.msra.mxu0 0.0
      %1281 = vmatpush.xpose.msra.mxu0 0.0
      %1282 = vmatpush.xpose.msra.mxu0 0.0
      %1283 = vmatpush.xpose.msra.mxu0 0.0
      %1284 = vmatpush.xpose.msra.mxu0 0.0
      %1285 = vmatpush.xpose.msra.mxu0 0.0
      %1286 = vmatpush.xpose.msra.mxu0 0.0
      %1287 = vmatpush.xpose.msra.mxu0 0.0
      %1288 = vmatpush.xpose.msra.mxu0 0.0
      %1289 = vmatpush.xpose.msra.mxu0 %v1272
      %1290 = vmatmul.f32.gmra.mxu0 %v1270
      %v1291 = vpop.f32.mrf.mxu0
      %v1292 = vadd.f32 0.0, %v1291
      %1293 = vdwg.mxu0
      %v1294 = vsel %vm1225, %v1292, -inf
      %1295 = vmax.xlane.f32.xlu0 %v1294
      %v1296 = vpop.xlane.xlu0 %1295
      %v1297 = vsub.f32 %v1292, %v1296
      %v1298 = vmul.f32 %v1297, 1.442695
      %v1299 = vpow.pop %v1298
      %v1300 = vsel %vm1225, %v1299, 0.0
      %1301 = vadd.xlane.f32.xlu0 %v1300
      %v1302 = vpop.xlane.xlu0 %1301
      %v1303 = vrcp.pop %v1302
      %v1304 = vmul.f32 %v1299, %v1303
      %1305 = vrot.lane.b32.xlu0 %v1193, 56
      %v1306 = vpop.permute.xlu0 %1305
      %v1308 = vsel %vm1239, %v1304, 0
      %v1310 = vsel %vm1243, %v1306, 0
      %1312 = vmatpush.msra.mxu0 0.0
      %1313 = vmatpush.msra.mxu0 0.0
      %1314 = vmatpush.msra.mxu0 0.0
      %1315 = vmatpush.msra.mxu0 0.0
      %1316 = vmatpush.msra.mxu0 0.0
      %1317 = vmatpush.msra.mxu0 0.0
      %1318 = vmatpush.msra.mxu0 0.0
      %1319 = vmatpush.msra.mxu0 0.0
      %1320 = vmatpush.msra.mxu0 0.0
      %1321 = vmatpush.msra.mxu0 0.0
      %1322 = vmatpush.msra.mxu0 0.0
      %1323 = vmatpush.msra.mxu0 0.0
      %1324 = vmatpush.msra.mxu0 0.0
      %1325 = vmatpush.msra.mxu0 0.0
      %1326 = vmatpush.msra.mxu0 0.0
      %1327 = vmatpush.msra.mxu0 %v1310
      %1328 = vmatmul.f32.gmra.mxu0 %v1308
      %v1329 = vpop.f32.mrf.mxu0
      %v1330 = vadd.f32 0.0, %v1329
      %1331 = vdwg.mxu0
      %v1333 = vsel %vm1199, %v1330, 0
      %1335 = vmatpush.msra.mxu0 0.0
      %1336 = vmatpush.msra.mxu0 0.0
      %1337 = vmatpush.msra.mxu0 0.0
      %1338 = vmatpush.msra.mxu0 0.0
      %1339 = vmatpush.msra.mxu0 0.0
      %1340 = vmatpush.msra.mxu0 0.0
      %1341 = vmatpush.msra.mxu0 0.0
      %1342 = vmatpush.msra.mxu0 0.0
      %1343 = vmatpush.msra.mxu0 0.0
      %1344 = vmatpush.msra.mxu0 0.0
      %1345 = vmatpush.msra.mxu0 0.0
      %1346 = vmatpush.msra.mxu0 0.0
      %1347 = vmatpush.msra.mxu0 0.0
      %1348 = vmatpush.msra.mxu0 0.0
      %1349 = vmatpush.msra.mxu0 0.0
      %1350 = vmatpush.msra.mxu0 %v1109
      %1351 = vmatmul.f32.gmra.mxu0 %v1333
      %v1352 = vpop.f32.mrf.mxu0
      %v1353 = vadd.f32 0.0, %v1352
      %1354 = vdwg.mxu0
      %v1356 = vsel %vm1199, %v1264, 0
      %1358 = vmatpush.msra.mxu0 0.0
      %1359 = vmatpush.msra.mxu0 0.0
      %1360 = vmatpush.msra.mxu0 0.0
      %1361 = vmatpush.msra.mxu0 0.0
      %1362 = vmatpush.msra.mxu0 0.0
      %1363 = vmatpush.msra.mxu0 0.0
      %1364 = vmatpush.msra.mxu0 0.0
      %1365 = vmatpush.msra.mxu0 0.0
      %1366 = vmatpush.msra.mxu0 0.0
      %1367 = vmatpush.msra.mxu0 0.0
      %1368 = vmatpush.msra.mxu0 0.0
      %1369 = vmatpush.msra.mxu0 0.0
      %1370 = vmatpush.msra.mxu0 0.0
      %1371 = vmatpush.msra.mxu0 0.0
      %1372 = vmatpush.msra.mxu0 0.0
      %1373 = vmatpush.msra.mxu0 %v1108
      %1374 = vmatmul.f32.gmra.mxu0 %v1356
      %v1375 = vpop.f32.mrf.mxu0
      %v1376 = vadd.f32 %v1353, %v1375
      %1377 = vdwg.mxu0
      %1378 = vrot.lane.b32.xlu0 %v1195, 112
      %v1379 = vpop.permute.xlu0 %1378
      %1380 = vrot.lane.b32.xlu0 %v1193, 80
      %v1381 = vpop.permute.xlu0 %1380
      %v1382 = vsel %vm1199, %v1379, 0
      %v1384 = vsel %vm1199, %v1381, 0
      %1386 = vmatpush.xpose.msra.mxu0 0.0
      %1387 = vmatpush.xpose.msra.mxu0 0.0
      %1388 = vmatpush.xpose.msra.mxu0 0.0
      %1389 = vmatpush.xpose.msra.mxu0 0.0
      %1390 = vmatpush.xpose.msra.mxu0 0.0
      %1391 = vmatpush.xpose.msra.mxu0 0.0
      %1392 = vmatpush.xpose.msra.mxu0 0.0
      %1393 = vmatpush.xpose.msra.mxu0 0.0
      %1394 = vmatpush.xpose.msra.mxu0 0.0
      %1395 = vmatpush.xpose.msra.mxu0 0.0
      %1396 = vmatpush.xpose.msra.mxu0 0.0
      %1397 = vmatpush.xpose.msra.mxu0 0.0
      %1398 = vmatpush.xpose.msra.mxu0 0.0
      %1399 = vmatpush.xpose.msra.mxu0 0.0
      %1400 = vmatpush.xpose.msra.mxu0 0.0
      %1401 = vmatpush.xpose.msra.mxu0 %v1384
      %1402 = vmatmul.f32.gmra.mxu0 %v1382
      %v1403 = vpop.f32.mrf.mxu0
      %v1404 = vadd.f32 0.0, %v1403
      %1405 = vdwg.mxu0
      %v1406 = vsel %vm1225, %v1404, -inf
      %1407 = vmax.xlane.f32.xlu0 %v1406
      %v1408 = vpop.xlane.xlu0 %1407
      %v1409 = vsub.f32 %v1404, %v1408
      %v1410 = vmul.f32 %v1409, 1.442695
      %v1411 = vpow.pop %v1410
      %v1412 = vsel %vm1225, %v1411, 0.0
      %1413 = vadd.xlane.f32.xlu0 %v1412
      %v1414 = vpop.xlane.xlu0 %1413
      %v1415 = vrcp.pop %v1414
      %v1416 = vmul.f32 %v1411, %v1415
      %1417 = vrot.lane.b32.xlu0 %v1193, 48
      %v1418 = vpop.permute.xlu0 %1417
      %v1420 = vsel %vm1239, %v1416, 0
      %v1422 = vsel %vm1243, %v1418, 0
      %1424 = vmatpush.msra.mxu0 0.0
      %1425 = vmatpush.msra.mxu0 0.0
      %1426 = vmatpush.msra.mxu0 0.0
      %1427 = vmatpush.msra.mxu0 0.0
      %1428 = vmatpush.msra.mxu0 0.0
      %1429 = vmatpush.msra.mxu0 0.0
      %1430 = vmatpush.msra.mxu0 0.0
      %1431 = vmatpush.msra.mxu0 0.0
      %1432 = vmatpush.msra.mxu0 0.0
      %1433 = vmatpush.msra.mxu0 0.0
      %1434 = vmatpush.msra.mxu0 0.0
      %1435 = vmatpush.msra.mxu0 0.0
      %1436 = vmatpush.msra.mxu0 0.0
      %1437 = vmatpush.msra.mxu0 0.0
      %1438 = vmatpush.msra.mxu0 0.0
      %1439 = vmatpush.msra.mxu0 %v1422
      %1440 = vmatmul.f32.gmra.mxu0 %v1420
      %v1441 = vpop.f32.mrf.mxu0
      %v1442 = vadd.f32 0.0, %v1441
      %1443 = vdwg.mxu0
      %v1445 = vsel %vm1199, %v1442, 0
      %1447 = vmatpush.msra.mxu0 0.0
      %1448 = vmatpush.msra.mxu0 0.0
      %1449 = vmatpush.msra.mxu0 0.0
      %1450 = vmatpush.msra.mxu0 0.0
      %1451 = vmatpush.msra.mxu0 0.0
      %1452 = vmatpush.msra.mxu0 0.0
      %1453 = vmatpush.msra.mxu0 0.0
      %1454 = vmatpush.msra.mxu0 0.0
      %1455 = vmatpush.msra.mxu0 0.0
      %1456 = vmatpush.msra.mxu0 0.0
      %1457 = vmatpush.msra.mxu0 0.0
      %1458 = vmatpush.msra.mxu0 0.0
      %1459 = vmatpush.msra.mxu0 0.0
      %1460 = vmatpush.msra.mxu0 0.0
      %1461 = vmatpush.msra.mxu0 0.0
      %1462 = vmatpush.msra.mxu0 %v1110
      %1463 = vmatmul.f32.gmra.mxu0 %v1445
      %v1464 = vpop.f32.mrf.mxu0
      %v1465 = vadd.f32 0.0, %v1464
      %1466 = vdwg.mxu0
      %v1467 = vadd.f32 %v1376, %v1465
      %1468 = vrot.lane.b32.xlu0 %v1195, 104
      %v1469 = vpop.permute.xlu0 %1468
      %1470 = vrot.lane.b32.xlu0 %v1193, 72
      %v1471 = vpop.permute.xlu0 %1470
      %v1472 = vsel %vm1199, %v1469, 0
      %v1474 = vsel %vm1199, %v1471, 0
      %1476 = vmatpush.xpose.msra.mxu0 0.0
      %1477 = vmatpush.xpose.msra.mxu0 0.0
      %1478 = vmatpush.xpose.msra.mxu0 0.0
      %1479 = vmatpush.xpose.msra.mxu0 0.0
      %1480 = vmatpush.xpose.msra.mxu0 0.0
      %1481 = vmatpush.xpose.msra.mxu0 0.0
      %1482 = vmatpush.xpose.msra.mxu0 0.0
      %1483 = vmatpush.xpose.msra.mxu0 0.0
      %1484 = vmatpush.xpose.msra.mxu0 0.0
      %1485 = vmatpush.xpose.msra.mxu0 0.0
      %1486 = vmatpush.xpose.msra.mxu0 0.0
      %1487 = vmatpush.xpose.msra.mxu0 0.0
      %1488 = vmatpush.xpose.msra.mxu0 0.0
      %1489 = vmatpush.xpose.msra.mxu0 0.0
      %1490 = vmatpush.xpose.msra.mxu0 0.0
      %1491 = vmatpush.xpose.msra.mxu0 %v1474
      %1492 = vmatmul.f32.gmra.mxu0 %v1472
      %v1493 = vpop.f32.mrf.mxu0
      %v1494 = vadd.f32 0.0, %v1493
      %1495 = vdwg.mxu0
      %v1496 = vsel %vm1225, %v1494, -inf
      %1497 = vmax.xlane.f32.xlu0 %v1496
      %v1498 = vpop.xlane.xlu0 %1497
      %v1499 = vsub.f32 %v1494, %v1498
      %v1500 = vmul.f32 %v1499, 1.442695
      %v1501 = vpow.pop %v1500
      %v1502 = vsel %vm1225, %v1501, 0.0
      %1503 = vadd.xlane.f32.xlu0 %v1502
      %v1504 = vpop.xlane.xlu0 %1503
      %v1505 = vrcp.pop %v1504
      %v1506 = vmul.f32 %v1501, %v1505
      %1507 = vrot.lane.b32.xlu0 %v1193, 40
      %v1508 = vpop.permute.xlu0 %1507
      %v1510 = vsel %vm1239, %v1506, 0
      %v1512 = vsel %vm1243, %v1508, 0
      %1514 = vmatpush.msra.mxu0 0.0
      %1515 = vmatpush.msra.mxu0 0.0
      %1516 = vmatpush.msra.mxu0 0.0
      %1517 = vmatpush.msra.mxu0 0.0
      %1518 = vmatpush.msra.mxu0 0.0
      %1519 = vmatpush.msra.mxu0 0.0
      %1520 = vmatpush.msra.mxu0 0.0
      %1521 = vmatpush.msra.mxu0 0.0
      %1522 = vmatpush.msra.mxu0 0.0
      %1523 = vmatpush.msra.mxu0 0.0
      %1524 = vmatpush.msra.mxu0 0.0
      %1525 = vmatpush.msra.mxu0 0.0
      %1526 = vmatpush.msra.mxu0 0.0
      %1527 = vmatpush.msra.mxu0 0.0
      %1528 = vmatpush.msra.mxu0 0.0
      %1529 = vmatpush.msra.mxu0 %v1512
      %1530 = vmatmul.f32.gmra.mxu0 %v1510
      %v1531 = vpop.f32.mrf.mxu0
      %v1532 = vadd.f32 0.0, %v1531
      %1533 = vdwg.mxu0
      %v1535 = vsel %vm1199, %v1532, 0
      %1537 = vmatpush.msra.mxu0 0.0
      %1538 = vmatpush.msra.mxu0 0.0
      %1539 = vmatpush.msra.mxu0 0.0
      %1540 = vmatpush.msra.mxu0 0.0
      %1541 = vmatpush.msra.mxu0 0.0
      %1542 = vmatpush.msra.mxu0 0.0
      %1543 = vmatpush.msra.mxu0 0.0
      %1544 = vmatpush.msra.mxu0 0.0
      %1545 = vmatpush.msra.mxu0 0.0
      %1546 = vmatpush.msra.mxu0 0.0
      %1547 = vmatpush.msra.mxu0 0.0
      %1548 = vmatpush.msra.mxu0 0.0
      %1549 = vmatpush.msra.mxu0 0.0
      %1550 = vmatpush.msra.mxu0 0.0
      %1551 = vmatpush.msra.mxu0 0.0
      %1552 = vmatpush.msra.mxu0 %v1111
      %1553 = vmatmul.f32.gmra.mxu0 %v1535
      %v1554 = vpop.f32.mrf.mxu0
      %v1555 = vadd.f32 0.0, %v1554
      %1556 = vdwg.mxu0
      %v1557 = vadd.f32 %v1467, %v1555
      %v1558 = vadd.f32 %v1129, %v1557
      %v1560 = vperm.slane %v1112, 0
      %v1562 = vadd.f32 %v1558, %v1560
      %1563 = vst.msk [vmem:[#allocation2] sm:$0x1f] %vm1130, %v1562
      %v1564 = vld [vmem:[#allocation2] sm:$0x1f]
      %v1565 = vsel %vm1130, %v1564, 0.0
      %1566 = vadd.xlane.f32.xlu0 %v1565
      %v1567 = vpop.xlane.xlu0 %1566
      %v1568 = vmul.f32 %v1567, %v1140
      %v1569 = vsub.f32 %v1564, %v1568
      %v1570 = vmul.f32 %v1569, %v1569
      %v1571 = vsel %vm1130, %v1570, 0.0
      %1572 = vadd.xlane.f32.xlu0 %v1571
      %v1573 = vpop.xlane.xlu0 %1572
      %v1574 = vmul.f32 %v1573, %v1140
      %v1575 = vadd.f32 %v1574, 1e-06
      %v1576 = vrsqrt.pop %v1575
      %v1577 = vmul.f32 %v1576, %v1575
      %v1578 = vmul.f32 %v1577, %v1576
      %v1579 = vmul.f32 0.5, %v1578
      %v1580 = vsub.f32 1.5, %v1579
      %v1581 = vmul.f32 %v1576, %v1580
      %vm1582 = vweird.f32 %v1575
      %vm1583 = vweird.f32 %v1576
      %vm1584 = vmor %vm1582, %vm1583
      %v1585 = vsel %vm1584, %v1576, %v1581
      %v1586 = vmul.f32 %v1569, %v1585
      %v1588 = vperm.slane %v1113, 0
      %v1590 = vmul.f32 %v1586, %v1588
      %v1592 = vperm.slane %v1114, 0
      %v1594 = vadd.f32 %v1590, %v1592
      %v1596 = vperm.slane %v1119, 0
      %v1599 = vsel %vm1171, %v1594, 0
      %1601 = vmatpush.msra.mxu0 0.0
      %1602 = vmatpush.msra.mxu0 0.0
      %1603 = vmatpush.msra.mxu0 0.0
      %1604 = vmatpush.msra.mxu0 0.0
      %1605 = vmatpush.msra.mxu0 0.0
      %1606 = vmatpush.msra.mxu0 0.0
      %1607 = vmatpush.msra.mxu0 0.0
      %1608 = vmatpush.msra.mxu0 0.0
      %1609 = vmatpush.msra.mxu0 0.0
      %1610 = vmatpush.msra.mxu0 0.0
      %1611 = vmatpush.msra.mxu0 0.0
      %1612 = vmatpush.msra.mxu0 0.0
      %1613 = vmatpush.msra.mxu0 %v1118
      %1614 = vmatpush.msra.mxu0 %v1117
      %1615 = vmatpush.msra.mxu0 %v1116
      %1616 = vmatpush.msra.mxu0 %v1115
      %1617 = vmatmul.f32.gmra.mxu0 %v1599
      %v1618 = vpop.f32.mrf.mxu0
      %v1619 = vadd.f32 %v1596, %v1618
      %1620 = vdwg.mxu0
      %v1621 = vmul.f32 %v1619, 0.5
      %v1622 = vmul.f32 %v1619, 0.70710677
      %v1623 = vmul.f32 %v1622, %v1622
      %v1624 = vmin.f32 16.0, %v1623
      %v1625 = vmul.f32 %v1624, 2.1237322e-06
      %v1626 = vadd.f32 %v1625, 0.00028619796
      %v1627 = vmul.f32 %v1624, %v1626
      %v1628 = vadd.f32 %v1627, 0.0036580483
      %v1629 = vmul.f32 %v1624, %v1628
      %v1630 = vadd.f32 %v1629, 0.05243302
      %v1631 = vmul.f32 %v1624, %v1630
      %v1632 = vadd.f32 %v1631, 0.18741608
      %v1633 = vmul.f32 %v1624, %v1632
      %v1634 = vadd.f32 %v1633, 1.1283791
      %v1635 = vmul.f32 %v1622, %v1634
      %v1636 = vmul.f32 %v1624, 3.8918573e-05
      %v1637 = vadd.f32 %v1636, 0.001143296
      %v1638 = vmul.f32 %v1624, %v1637
      %v1639 = vadd.f32 %v1638, 0.014752088
      %v1640 = vmul.f32 %v1624, %v1639
      %v1641 = vadd.f32 %v1640, 0.112945676
      %v1642 = vmul.f32 %v1624, %v1641
      %v1643 = vadd.f32 %v1642, 0.4994258
      %v1644 = vmul.f32 %v1624, %v1643
      %v1645 = vadd.f32 %v1644, 1.0
      %v1646 = vrcp.pop %v1645
      %v1647 = vmul.f32 %v1645, %v1646
      %v1648 = vsub.f32 1.0, %v1647
      %v1649 = vmul.f32 %v1646, %v1648
      %v1650 = vadd.f32 %v1646, %v1649
      %vm1651 = vweird.f32 %v1645
      %vm1652 = vweird.f32 %v1646
      %vm1653 = vmor %vm1651, %vm1652
      %v1654 = vsel %vm1653, %v1646, %v1650
      %v1655 = vand.u32 2147483647, %v1645
      %vm1656 = vcmp.eq.f32.partialorder %v1655, 8.507059e+37
      %v1657 = vand.u32 %v1645, 2147483648
      %v1658 = vor.u32 1.1754944e-38, %v1657
      %v1659 = vsel %vm1656, %v1658, %v1654
      %v1660 = vmul.f32 %v1635, %v1659
      %v1661 = vmin.f32 %v1660, 1.0
      %v1662 = vmax.f32 %v1661, -1.0
      %v1663 = vadd.f32 %v1662, 1.0
      %v1664 = vmul.f32 %v1621, %v1663
      %v1666 = vperm.slane %v1128, 0
      %v1669 = vsel %vm1049, %v1664, 0
      %1671 = vmatpush.msra.mxu0 0.0
      %1672 = vmatpush.msra.mxu0 0.0
      %1673 = vmatpush.msra.mxu0 0.0
      %1674 = vmatpush.msra.mxu0 0.0
      %1675 = vmatpush.msra.mxu0 0.0
      %1676 = vmatpush.msra.mxu0 0.0
      %1677 = vmatpush.msra.mxu0 0.0
      %1678 = vmatpush.msra.mxu0 0.0
      %1679 = vmatpush.msra.mxu0 %v1127
      %1680 = vmatpush.msra.mxu0 %v1126
      %1681 = vmatpush.msra.mxu0 %v1125
      %1682 = vmatpush.msra.mxu0 %v1124
      %1683 = vmatpush.msra.mxu0 %v1123
      %1684 = vmatpush.msra.mxu0 %v1122
      %1685 = vmatpush.msra.mxu0 %v1121
      %1686 = vmatpush.msra.mxu0 %v1120
      %1687 = vmatmul.f32.gmra.mxu0 %v1669
      %v1688 = vpop.f32.mrf.mxu0
      %v1689 = vadd.f32 %v1666, %v1688
      %1690 = vdwg.mxu0
      %v1691 = vadd.f32 %v1564, %v1689
      %1692 = vst.msk [vmem:[#allocation2] sm:$0x1f] %vm1130, %v1691
      %v1693 = vld [vmem:[%s35] sm:$0x1]
      %v1694 = vld [vmem:[%s37] sm:$0x1]
      %v1695 = vld [vmem:[%s39] sm:$0xff]
      %v1696 = vld [vmem:[%s39 + $0x8] sm:$0xff]
      %v1697 = vld [vmem:[%s39 + $0x10] sm:$0xff]
      %v1698 = vld [vmem:[%s39 + $0x18] sm:$0xff]
      %v1699 = vld [vmem:[%s41] sm:$0x1]
      %v1700 = vld [vmem:[%s43] sm:$0xff]
      %v1701 = vld [vmem:[%s43 + $0x8] sm:$0xff]
      %v1702 = vld [vmem:[%s43 + $0x10] sm:$0xff]
      %v1703 = vld [vmem:[%s43 + $0x18] sm:$0xff]
      %v1704 = vld [vmem:[%s45] sm:$0x1]
      %v1705 = vld [vmem:[%s47] sm:$0x1]
      %v1706 = vld [vmem:[%s49] sm:$0x1]
      %v1707 = vld [vmem:[%s51] sm:$0xff]
      %v1708 = vld [vmem:[%s51 + $0x8] sm:$0xff]
      %v1709 = vld [vmem:[%s51 + $0x10] sm:$0xff]
      %v1710 = vld [vmem:[%s51 + $0x18] sm:$0xff]
      %v1711 = vld [vmem:[%s53] sm:$0x1]
      %v1712 = vld [vmem:[%s55] sm:$0xff]
      %v1713 = vld [vmem:[%s55 + $0x8] sm:$0xff]
      %v1714 = vld [vmem:[%s55 + $0x10] sm:$0xff]
      %v1715 = vld [vmem:[%s55 + $0x18] sm:$0xff]
      %v1716 = vld [vmem:[%s55 + $0x20] sm:$0xff]
      %v1717 = vld [vmem:[%s55 + $0x28] sm:$0xff]
      %v1718 = vld [vmem:[%s55 + $0x30] sm:$0xff]
      %v1719 = vld [vmem:[%s55 + $0x38] sm:$0xff]
      %v1720 = vld [vmem:[%s57] sm:$0x1]
      %v1721 = vld [vmem:[#allocation2] sm:$0x1f]
      %v1722 = vsel %vm1130, %v1721, 0.0
      %1723 = vadd.xlane.f32.xlu0 %v1722
      %v1724 = vpop.xlane.xlu0 %1723
      %v1725 = vmul.f32 %v1724, %v1140
      %v1726 = vsub.f32 %v1721, %v1725
      %v1727 = vmul.f32 %v1726, %v1726
      %v1728 = vsel %vm1130, %v1727, 0.0
      %1729 = vadd.xlane.f32.xlu0 %v1728
      %v1730 = vpop.xlane.xlu0 %1729
      %v1731 = vmul.f32 %v1730, %v1140
      %v1732 = vadd.f32 %v1731, 1e-06
      %v1733 = vrsqrt.pop %v1732
      %v1734 = vmul.f32 %v1733, %v1732
      %v1735 = vmul.f32 %v1734, %v1733
      %v1736 = vmul.f32 0.5, %v1735
      %v1737 = vsub.f32 1.5, %v1736
      %v1738 = vmul.f32 %v1733, %v1737
      %vm1739 = vweird.f32 %v1732
      %vm1740 = vweird.f32 %v1733
      %vm1741 = vmor %vm1739, %vm1740
      %v1742 = vsel %vm1741, %v1733, %v1738
      %v1743 = vmul.f32 %v1726, %v1742
      %v1745 = vperm.slane %v1693, 0
      %v1747 = vmul.f32 %v1743, %v1745
      %v1749 = vperm.slane %v1694, 0
      %v1751 = vadd.f32 %v1747, %v1749
      %v1753 = vperm.slane %v1699, 0
      %v1756 = vsel %vm1171, %v1751, 0
      %1758 = vmatpush.msra.mxu0 0.0
      %1759 = vmatpush.msra.mxu0 0.0
      %1760 = vmatpush.msra.mxu0 0.0
      %1761 = vmatpush.msra.mxu0 0.0
      %1762 = vmatpush.msra.mxu0 0.0
      %1763 = vmatpush.msra.mxu0 0.0
      %1764 = vmatpush.msra.mxu0 0.0
      %1765 = vmatpush.msra.mxu0 0.0
      %1766 = vmatpush.msra.mxu0 0.0
      %1767 = vmatpush.msra.mxu0 0.0
      %1768 = vmatpush.msra.mxu0 0.0
      %1769 = vmatpush.msra.mxu0 0.0
      %1770 = vmatpush.msra.mxu0 %v1698
      %1771 = vmatpush.msra.mxu0 %v1697
      %1772 = vmatpush.msra.mxu0 %v1696
      %1773 = vmatpush.msra.mxu0 %v1695
      %1774 = vmatmul.f32.gmra.mxu0 %v1756
      %v1775 = vpop.f32.mrf.mxu0
      %v1776 = vadd.f32 %v1753, %v1775
      %1777 = vdwg.mxu0
      %v1778 = vmul.f32 %v1776, 0.35355338
      %1780 = vrot.lane.b32.xlu0 %v1776, 96
      %v1781 = vpop.permute.xlu0 %1780
      %v1783 = vsel %vm1199, %v1778, 0
      %v1785 = vsel %vm1199, %v1781, 0
      %1787 = vmatpush.xpose.msra.mxu0 0.0
      %1788 = vmatpush.xpose.msra.mxu0 0.0
      %1789 = vmatpush.xpose.msra.mxu0 0.0
      %1790 = vmatpush.xpose.msra.mxu0 0.0
      %1791 = vmatpush.xpose.msra.mxu0 0.0
      %1792 = vmatpush.xpose.msra.mxu0 0.0
      %1793 = vmatpush.xpose.msra.mxu0 0.0
      %1794 = vmatpush.xpose.msra.mxu0 0.0
      %1795 = vmatpush.xpose.msra.mxu0 0.0
      %1796 = vmatpush.xpose.msra.mxu0 0.0
      %1797 = vmatpush.xpose.msra.mxu0 0.0
      %1798 = vmatpush.xpose.msra.mxu0 0.0
      %1799 = vmatpush.xpose.msra.mxu0 0.0
      %1800 = vmatpush.xpose.msra.mxu0 0.0
      %1801 = vmatpush.xpose.msra.mxu0 0.0
      %1802 = vmatpush.xpose.msra.mxu0 %v1785
      %1803 = vmatmul.f32.gmra.mxu0 %v1783
      %v1804 = vpop.f32.mrf.mxu0
      %v1805 = vadd.f32 0.0, %v1804
      %1806 = vdwg.mxu0
      %v1807 = vsel %vm1225, %v1805, -inf
      %1808 = vmax.xlane.f32.xlu0 %v1807
      %v1809 = vpop.xlane.xlu0 %1808
      %v1810 = vsub.f32 %v1805, %v1809
      %v1811 = vmul.f32 %v1810, 1.442695
      %v1812 = vpow.pop %v1811
      %v1813 = vsel %vm1225, %v1812, 0.0
      %1814 = vadd.xlane.f32.xlu0 %v1813
      %v1815 = vpop.xlane.xlu0 %1814
      %v1816 = vrcp.pop %v1815
      %v1817 = vmul.f32 %v1812, %v1816
      %1818 = vrot.lane.b32.xlu0 %v1776, 64
      %v1819 = vpop.permute.xlu0 %1818
      %v1821 = vsel %vm1239, %v1817, 0
      %v1823 = vsel %vm1243, %v1819, 0
      %1825 = vmatpush.msra.mxu0 0.0
      %1826 = vmatpush.msra.mxu0 0.0
      %1827 = vmatpush.msra.mxu0 0.0
      %1828 = vmatpush.msra.mxu0 0.0
      %1829 = vmatpush.msra.mxu0 0.0
      %1830 = vmatpush.msra.mxu0 0.0
      %1831 = vmatpush.msra.mxu0 0.0
      %1832 = vmatpush.msra.mxu0 0.0
      %1833 = vmatpush.msra.mxu0 0.0
      %1834 = vmatpush.msra.mxu0 0.0
      %1835 = vmatpush.msra.mxu0 0.0
      %1836 = vmatpush.msra.mxu0 0.0
      %1837 = vmatpush.msra.mxu0 0.0
      %1838 = vmatpush.msra.mxu0 0.0
      %1839 = vmatpush.msra.mxu0 0.0
      %1840 = vmatpush.msra.mxu0 %v1823
      %1841 = vmatmul.f32.gmra.mxu0 %v1821
      %v1842 = vpop.f32.mrf.mxu0
      %v1843 = vadd.f32 0.0, %v1842
      %1844 = vdwg.mxu0
      %1845 = vrot.lane.b32.xlu0 %v1778, 120
      %v1846 = vpop.permute.xlu0 %1845
      %1847 = vrot.lane.b32.xlu0 %v1776, 88
      %v1848 = vpop.permute.xlu0 %1847
      %v1849 = vsel %vm1199, %v1846, 0
      %v1851 = vsel %vm1199, %v1848, 0
      %1853 = vmatpush.xpose.msra.mxu0 0.0
      %1854 = vmatpush.xpose.msra.mxu0 0.0
      %1855 = vmatpush.xpose.msra.mxu0 0.0
      %1856 = vmatpush.xpose.msra.mxu0 0.0
      %1857 = vmatpush.xpose.msra.mxu0 0.0
      %1858 = vmatpush.xpose.msra.mxu0 0.0
      %1859 = vmatpush.xpose.msra.mxu0 0.0
      %1860 = vmatpush.xpose.msra.mxu0 0.0
      %1861 = vmatpush.xpose.msra.mxu0 0.0
      %1862 = vmatpush.xpose.msra.mxu0 0.0
      %1863 = vmatpush.xpose.msra.mxu0 0.0
      %1864 = vmatpush.xpose.msra.mxu0 0.0
      %1865 = vmatpush.xpose.msra.mxu0 0.0
      %1866 = vmatpush.xpose.msra.mxu0 0.0
      %1867 = vmatpush.xpose.msra.mxu0 0.0
      %1868 = vmatpush.xpose.msra.mxu0 %v1851
      %1869 = vmatmul.f32.gmra.mxu0 %v1849
      %v1870 = vpop.f32.mrf.mxu0
      %v1871 = vadd.f32 0.0, %v1870
      %1872 = vdwg.mxu0
      %v1873 = vsel %vm1225, %v1871, -inf
      %1874 = vmax.xlane.f32.xlu0 %v1873
      %v1875 = vpop.xlane.xlu0 %1874
      %v1876 = vsub.f32 %v1871, %v1875
      %v1877 = vmul.f32 %v1876, 1.442695
      %v1878 = vpow.pop %v1877
      %v1879 = vsel %vm1225, %v1878, 0.0
      %1880 = vadd.xlane.f32.xlu0 %v1879
      %v1881 = vpop.xlane.xlu0 %1880
      %v1882 = vrcp.pop %v1881
      %v1883 = vmul.f32 %v1878, %v1882
      %1884 = vrot.lane.b32.xlu0 %v1776, 56
      %v1885 = vpop.permute.xlu0 %1884
      %v1887 = vsel %vm1239, %v1883, 0
      %v1889 = vsel %vm1243, %v1885, 0
      %1891 = vmatpush.msra.mxu0 0.0
      %1892 = vmatpush.msra.mxu0 0.0
      %1893 = vmatpush.msra.mxu0 0.0
      %1894 = vmatpush.msra.mxu0 0.0
      %1895 = vmatpush.msra.mxu0 0.0
      %1896 = vmatpush.msra.mxu0 0.0
      %1897 = vmatpush.msra.mxu0 0.0
      %1898 = vmatpush.msra.mxu0 0.0
      %1899 = vmatpush.msra.mxu0 0.0
      %1900 = vmatpush.msra.mxu0 0.0
      %1901 = vmatpush.msra.mxu0 0.0
      %1902 = vmatpush.msra.mxu0 0.0
      %1903 = vmatpush.msra.mxu0 0.0
      %1904 = vmatpush.msra.mxu0 0.0
      %1905 = vmatpush.msra.mxu0 0.0
      %1906 = vmatpush.msra.mxu0 %v1889
      %1907 = vmatmul.f32.gmra.mxu0 %v1887
      %v1908 = vpop.f32.mrf.mxu0
      %v1909 = vadd.f32 0.0, %v1908
      %1910 = vdwg.mxu0
      %v1912 = vsel %vm1199, %v1909, 0
      %1914 = vmatpush.msra.mxu0 0.0
      %1915 = vmatpush.msra.mxu0 0.0
      %1916 = vmatpush.msra.mxu0 0.0
      %1917 = vmatpush.msra.mxu0 0.0
      %1918 = vmatpush.msra.mxu0 0.0
      %1919 = vmatpush.msra.mxu0 0.0
      %1920 = vmatpush.msra.mxu0 0.0
      %1921 = vmatpush.msra.mxu0 0.0
      %1922 = vmatpush.msra.mxu0 0.0
      %1923 = vmatpush.msra.mxu0 0.0
      %1924 = vmatpush.msra.mxu0 0.0
      %1925 = vmatpush.msra.mxu0 0.0
      %1926 = vmatpush.msra.mxu0 0.0
      %1927 = vmatpush.msra.mxu0 0.0
      %1928 = vmatpush.msra.mxu0 0.0
      %1929 = vmatpush.msra.mxu0 %v1701
      %1930 = vmatmul.f32.gmra.mxu0 %v1912
      %v1931 = vpop.f32.mrf.mxu0
      %v1932 = vadd.f32 0.0, %v1931
      %1933 = vdwg.mxu0
      %v1935 = vsel %vm1199, %v1843, 0
      %1937 = vmatpush.msra.mxu0 0.0
      %1938 = vmatpush.msra.mxu0 0.0
      %1939 = vmatpush.msra.mxu0 0.0
      %1940 = vmatpush.msra.mxu0 0.0
      %1941 = vmatpush.msra.mxu0 0.0
      %1942 = vmatpush.msra.mxu0 0.0
      %1943 = vmatpush.msra.mxu0 0.0
      %1944 = vmatpush.msra.mxu0 0.0
      %1945 = vmatpush.msra.mxu0 0.0
      %1946 = vmatpush.msra.mxu0 0.0
      %1947 = vmatpush.msra.mxu0 0.0
      %1948 = vmatpush.msra.mxu0 0.0
      %1949 = vmatpush.msra.mxu0 0.0
      %1950 = vmatpush.msra.mxu0 0.0
      %1951 = vmatpush.msra.mxu0 0.0
      %1952 = vmatpush.msra.mxu0 %v1700
      %1953 = vmatmul.f32.gmra.mxu0 %v1935
      %v1954 = vpop.f32.mrf.mxu0
      %v1955 = vadd.f32 %v1932, %v1954
      %1956 = vdwg.mxu0
      %1957 = vrot.lane.b32.xlu0 %v1778, 112
      %v1958 = vpop.permute.xlu0 %1957
      %1959 = vrot.lane.b32.xlu0 %v1776, 80
      %v1960 = vpop.permute.xlu0 %1959
      %v1961 = vsel %vm1199, %v1958, 0
      %v1963 = vsel %vm1199, %v1960, 0
      %1965 = vmatpush.xpose.msra.mxu0 0.0
      %1966 = vmatpush.xpose.msra.mxu0 0.0
      %1967 = vmatpush.xpose.msra.mxu0 0.0
      %1968 = vmatpush.xpose.msra.mxu0 0.0
      %1969 = vmatpush.xpose.msra.mxu0 0.0
      %1970 = vmatpush.xpose.msra.mxu0 0.0
      %1971 = vmatpush.xpose.msra.mxu0 0.0
      %1972 = vmatpush.xpose.msra.mxu0 0.0
      %1973 = vmatpush.xpose.msra.mxu0 0.0
      %1974 = vmatpush.xpose.msra.mxu0 0.0
      %1975 = vmatpush.xpose.msra.mxu0 0.0
      %1976 = vmatpush.xpose.msra.mxu0 0.0
      %1977 = vmatpush.xpose.msra.mxu0 0.0
      %1978 = vmatpush.xpose.msra.mxu0 0.0
      %1979 = vmatpush.xpose.msra.mxu0 0.0
      %1980 = vmatpush.xpose.msra.mxu0 %v1963
      %1981 = vmatmul.f32.gmra.mxu0 %v1961
      %v1982 = vpop.f32.mrf.mxu0
      %v1983 = vadd.f32 0.0, %v1982
      %1984 = vdwg.mxu0
      %v1985 = vsel %vm1225, %v1983, -inf
      %1986 = vmax.xlane.f32.xlu0 %v1985
      %v1987 = vpop.xlane.xlu0 %1986
      %v1988 = vsub.f32 %v1983, %v1987
      %v1989 = vmul.f32 %v1988, 1.442695
      %v1990 = vpow.pop %v1989
      %v1991 = vsel %vm1225, %v1990, 0.0
      %1992 = vadd.xlane.f32.xlu0 %v1991
      %v1993 = vpop.xlane.xlu0 %1992
      %v1994 = vrcp.pop %v1993
      %v1995 = vmul.f32 %v1990, %v1994
      %1996 = vrot.lane.b32.xlu0 %v1776, 48
      %v1997 = vpop.permute.xlu0 %1996
      %v1999 = vsel %vm1239, %v1995, 0
      %v2001 = vsel %vm1243, %v1997, 0
      %2003 = vmatpush.msra.mxu0 0.0
      %2004 = vmatpush.msra.mxu0 0.0
      %2005 = vmatpush.msra.mxu0 0.0
      %2006 = vmatpush.msra.mxu0 0.0
      %2007 = vmatpush.msra.mxu0 0.0
      %2008 = vmatpush.msra.mxu0 0.0
      %2009 = vmatpush.msra.mxu0 0.0
      %2010 = vmatpush.msra.mxu0 0.0
      %2011 = vmatpush.msra.mxu0 0.0
      %2012 = vmatpush.msra.mxu0 0.0
      %2013 = vmatpush.msra.mxu0 0.0
      %2014 = vmatpush.msra.mxu0 0.0
      %2015 = vmatpush.msra.mxu0 0.0
      %2016 = vmatpush.msra.mxu0 0.0
      %2017 = vmatpush.msra.mxu0 0.0
      %2018 = vmatpush.msra.mxu0 %v2001
      %2019 = vmatmul.f32.gmra.mxu0 %v1999
      %v2020 = vpop.f32.mrf.mxu0
      %v2021 = vadd.f32 0.0, %v2020
      %2022 = vdwg.mxu0
      %v2024 = vsel %vm1199, %v2021, 0
      %2026 = vmatpush.msra.mxu0 0.0
      %2027 = vmatpush.msra.mxu0 0.0
      %2028 = vmatpush.msra.mxu0 0.0
      %2029 = vmatpush.msra.mxu0 0.0
      %2030 = vmatpush.msra.mxu0 0.0
      %2031 = vmatpush.msra.mxu0 0.0
      %2032 = vmatpush.msra.mxu0 0.0
      %2033 = vmatpush.msra.mxu0 0.0
      %2034 = vmatpush.msra.mxu0 0.0
      %2035 = vmatpush.msra.mxu0 0.0
      %2036 = vmatpush.msra.mxu0 0.0
      %2037 = vmatpush.msra.mxu0 0.0
      %2038 = vmatpush.msra.mxu0 0.0
      %2039 = vmatpush.msra.mxu0 0.0
      %2040 = vmatpush.msra.mxu0 0.0
      %2041 = vmatpush.msra.mxu0 %v1702
      %2042 = vmatmul.f32.gmra.mxu0 %v2024
      %v2043 = vpop.f32.mrf.mxu0
      %v2044 = vadd.f32 0.0, %v2043
      %2045 = vdwg.mxu0
      %v2046 = vadd.f32 %v1955, %v2044
      %2047 = vrot.lane.b32.xlu0 %v1778, 104
      %v2048 = vpop.permute.xlu0 %2047
      %2049 = vrot.lane.b32.xlu0 %v1776, 72
      %v2050 = vpop.permute.xlu0 %2049
      %v2051 = vsel %vm1199, %v2048, 0
      %v2053 = vsel %vm1199, %v2050, 0
      %2055 = vmatpush.xpose.msra.mxu0 0.0
      %2056 = vmatpush.xpose.msra.mxu0 0.0
      %2057 = vmatpush.xpose.msra.mxu0 0.0
      %2058 = vmatpush.xpose.msra.mxu0 0.0
      %2059 = vmatpush.xpose.msra.mxu0 0.0
      %2060 = vmatpush.xpose.msra.mxu0 0.0
      %2061 = vmatpush.xpose.msra.mxu0 0.0
      %2062 = vmatpush.xpose.msra.mxu0 0.0
      %2063 = vmatpush.xpose.msra.mxu0 0.0
      %2064 = vmatpush.xpose.msra.mxu0 0.0
      %2065 = vmatpush.xpose.msra.mxu0 0.0
      %2066 = vmatpush.xpose.msra.mxu0 0.0
      %2067 = vmatpush.xpose.msra.mxu0 0.0
      %2068 = vmatpush.xpose.msra.mxu0 0.0
      %2069 = vmatpush.xpose.msra.mxu0 0.0
      %2070 = vmatpush.xpose.msra.mxu0 %v2053
      %2071 = vmatmul.f32.gmra.mxu0 %v2051
      %v2072 = vpop.f32.mrf.mxu0
      %v2073 = vadd.f32 0.0, %v2072
      %2074 = vdwg.mxu0
      %v2075 = vsel %vm1225, %v2073, -inf
      %2076 = vmax.xlane.f32.xlu0 %v2075
      %v2077 = vpop.xlane.xlu0 %2076
      %v2078 = vsub.f32 %v2073, %v2077
      %v2079 = vmul.f32 %v2078, 1.442695
      %v2080 = vpow.pop %v2079
      %v2081 = vsel %vm1225, %v2080, 0.0
      %2082 = vadd.xlane.f32.xlu0 %v2081
      %v2083 = vpop.xlane.xlu0 %2082
      %v2084 = vrcp.pop %v2083
      %v2085 = vmul.f32 %v2080, %v2084
      %2086 = vrot.lane.b32.xlu0 %v1776, 40
      %v2087 = vpop.permute.xlu0 %2086
      %v2089 = vsel %vm1239, %v2085, 0
      %v2091 = vsel %vm1243, %v2087, 0
      %2093 = vmatpush.msra.mxu0 0.0
      %2094 = vmatpush.msra.mxu0 0.0
      %2095 = vmatpush.msra.mxu0 0.0
      %2096 = vmatpush.msra.mxu0 0.0
      %2097 = vmatpush.msra.mxu0 0.0
      %2098 = vmatpush.msra.mxu0 0.0
      %2099 = vmatpush.msra.mxu0 0.0
      %2100 = vmatpush.msra.mxu0 0.0
      %2101 = vmatpush.msra.mxu0 0.0
      %2102 = vmatpush.msra.mxu0 0.0
      %2103 = vmatpush.msra.mxu0 0.0
      %2104 = vmatpush.msra.mxu0 0.0
      %2105 = vmatpush.msra.mxu0 0.0
      %2106 = vmatpush.msra.mxu0 0.0
      %2107 = vmatpush.msra.mxu0 0.0
      %2108 = vmatpush.msra.mxu0 %v2091
      %2109 = vmatmul.f32.gmra.mxu0 %v2089
      %v2110 = vpop.f32.mrf.mxu0
      %v2111 = vadd.f32 0.0, %v2110
      %2112 = vdwg.mxu0
      %v2114 = vsel %vm1199, %v2111, 0
      %2116 = vmatpush.msra.mxu0 0.0
      %2117 = vmatpush.msra.mxu0 0.0
      %2118 = vmatpush.msra.mxu0 0.0
      %2119 = vmatpush.msra.mxu0 0.0
      %2120 = vmatpush.msra.mxu0 0.0
      %2121 = vmatpush.msra.mxu0 0.0
      %2122 = vmatpush.msra.mxu0 0.0
      %2123 = vmatpush.msra.mxu0 0.0
      %2124 = vmatpush.msra.mxu0 0.0
      %2125 = vmatpush.msra.mxu0 0.0
      %2126 = vmatpush.msra.mxu0 0.0
      %2127 = vmatpush.msra.mxu0 0.0
      %2128 = vmatpush.msra.mxu0 0.0
      %2129 = vmatpush.msra.mxu0 0.0
      %2130 = vmatpush.msra.mxu0 0.0
      %2131 = vmatpush.msra.mxu0 %v1703
      %2132 = vmatmul.f32.gmra.mxu0 %v2114
      %v2133 = vpop.f32.mrf.mxu0
      %v2134 = vadd.f32 0.0, %v2133
      %2135 = vdwg.mxu0
      %v2136 = vadd.f32 %v2046, %v2134
      %v2137 = vadd.f32 %v1721, %v2136
      %v2139 = vperm.slane %v1704, 0
      %v2141 = vadd.f32 %v2137, %v2139
      %2142 = vst.msk [vmem:[#allocation2] sm:$0x1f] %vm1130, %v2141
      %v2143 = vld [vmem:[#allocation2] sm:$0x1f]
      %v2144 = vsel %vm1130, %v2143, 0.0
      %2145 = vadd.xlane.f32.xlu0 %v2144
      %v2146 = vpop.xlane.xlu0 %2145
      %v2147 = vmul.f32 %v2146, %v1140
      %v2148 = vsub.f32 %v2143, %v2147
      %v2149 = vmul.f32 %v2148, %v2148
      %v2150 = vsel %vm1130, %v2149, 0.0
      %2151 = vadd.xlane.f32.xlu0 %v2150
      %v2152 = vpop.xlane.xlu0 %2151
      %v2153 = vmul.f32 %v2152, %v1140
      %v2154 = vadd.f32 %v2153, 1e-06
      %v2155 = vrsqrt.pop %v2154
      %v2156 = vmul.f32 %v2155, %v2154
      %v2157 = vmul.f32 %v2156, %v2155
      %v2158 = vmul.f32 0.5, %v2157
      %v2159 = vsub.f32 1.5, %v2158
      %v2160 = vmul.f32 %v2155, %v2159
      %vm2161 = vweird.f32 %v2154
      %vm2162 = vweird.f32 %v2155
      %vm2163 = vmor %vm2161, %vm2162
      %v2164 = vsel %vm2163, %v2155, %v2160
      %v2165 = vmul.f32 %v2148, %v2164
      %v2167 = vperm.slane %v1705, 0
      %v2169 = vmul.f32 %v2165, %v2167
      %v2171 = vperm.slane %v1706, 0
      %v2173 = vadd.f32 %v2169, %v2171
      %v2175 = vperm.slane %v1711, 0
      %v2178 = vsel %vm1171, %v2173, 0
      %2180 = vmatpush.msra.mxu0 0.0
      %2181 = vmatpush.msra.mxu0 0.0
      %2182 = vmatpush.msra.mxu0 0.0
      %2183 = vmatpush.msra.mxu0 0.0
      %2184 = vmatpush.msra.mxu0 0.0
      %2185 = vmatpush.msra.mxu0 0.0
      %2186 = vmatpush.msra.mxu0 0.0
      %2187 = vmatpush.msra.mxu0 0.0
      %2188 = vmatpush.msra.mxu0 0.0
      %2189 = vmatpush.msra.mxu0 0.0
      %2190 = vmatpush.msra.mxu0 0.0
      %2191 = vmatpush.msra.mxu0 0.0
      %2192 = vmatpush.msra.mxu0 %v1710
      %2193 = vmatpush.msra.mxu0 %v1709
      %2194 = vmatpush.msra.mxu0 %v1708
      %2195 = vmatpush.msra.mxu0 %v1707
      %2196 = vmatmul.f32.gmra.mxu0 %v2178
      %v2197 = vpop.f32.mrf.mxu0
      %v2198 = vadd.f32 %v2175, %v2197
      %2199 = vdwg.mxu0
      %v2200 = vmul.f32 %v2198, 0.5
      %v2201 = vmul.f32 %v2198, 0.70710677
      %v2202 = vmul.f32 %v2201, %v2201
      %v2203 = vmin.f32 16.0, %v2202
      %v2204 = vmul.f32 %v2203, 2.1237322e-06
      %v2205 = vadd.f32 %v2204, 0.00028619796
      %v2206 = vmul.f32 %v2203, %v2205
      %v2207 = vadd.f32 %v2206, 0.0036580483
      %v2208 = vmul.f32 %v2203, %v2207
      %v2209 = vadd.f32 %v2208, 0.05243302
      %v2210 = vmul.f32 %v2203, %v2209
      %v2211 = vadd.f32 %v2210, 0.18741608
      %v2212 = vmul.f32 %v2203, %v2211
      %v2213 = vadd.f32 %v2212, 1.1283791
      %v2214 = vmul.f32 %v2201, %v2213
      %v2215 = vmul.f32 %v2203, 3.8918573e-05
      %v2216 = vadd.f32 %v2215, 0.001143296
      %v2217 = vmul.f32 %v2203, %v2216
      %v2218 = vadd.f32 %v2217, 0.014752088
      %v2219 = vmul.f32 %v2203, %v2218
      %v2220 = vadd.f32 %v2219, 0.112945676
      %v2221 = vmul.f32 %v2203, %v2220
      %v2222 = vadd.f32 %v2221, 0.4994258
      %v2223 = vmul.f32 %v2203, %v2222
      %v2224 = vadd.f32 %v2223, 1.0
      %v2225 = vrcp.pop %v2224
      %v2226 = vmul.f32 %v2224, %v2225
      %v2227 = vsub.f32 1.0, %v2226
      %v2228 = vmul.f32 %v2225, %v2227
      %v2229 = vadd.f32 %v2225, %v2228
      %vm2230 = vweird.f32 %v2224
      %vm2231 = vweird.f32 %v2225
      %vm2232 = vmor %vm2230, %vm2231
      %v2233 = vsel %vm2232, %v2225, %v2229
      %v2234 = vand.u32 2147483647, %v2224
      %vm2235 = vcmp.eq.f32.partialorder %v2234, 8.507059e+37
      %v2236 = vand.u32 %v2224, 2147483648
      %v2237 = vor.u32 1.1754944e-38, %v2236
      %v2238 = vsel %vm2235, %v2237, %v2233
      %v2239 = vmul.f32 %v2214, %v2238
      %v2240 = vmin.f32 %v2239, 1.0
      %v2241 = vmax.f32 %v2240, -1.0
      %v2242 = vadd.f32 %v2241, 1.0
      %v2243 = vmul.f32 %v2200, %v2242
      %v2245 = vperm.slane %v1720, 0
      %v2248 = vsel %vm1049, %v2243, 0
      %2250 = vmatpush.msra.mxu0 0.0
      %2251 = vmatpush.msra.mxu0 0.0
      %2252 = vmatpush.msra.mxu0 0.0
      %2253 = vmatpush.msra.mxu0 0.0
      %2254 = vmatpush.msra.mxu0 0.0
      %2255 = vmatpush.msra.mxu0 0.0
      %2256 = vmatpush.msra.mxu0 0.0
      %2257 = vmatpush.msra.mxu0 0.0
      %2258 = vmatpush.msra.mxu0 %v1719
      %2259 = vmatpush.msra.mxu0 %v1718
      %2260 = vmatpush.msra.mxu0 %v1717
      %2261 = vmatpush.msra.mxu0 %v1716
      %2262 = vmatpush.msra.mxu0 %v1715
      %2263 = vmatpush.msra.mxu0 %v1714
      %2264 = vmatpush.msra.mxu0 %v1713
      %2265 = vmatpush.msra.mxu0 %v1712
      %2266 = vmatmul.f32.gmra.mxu0 %v2248
      %v2267 = vpop.f32.mrf.mxu0
      %v2268 = vadd.f32 %v2245, %v2267
      %2269 = vdwg.mxu0
      %v2270 = vadd.f32 %v2143, %v2268
      %2271 = vst.msk [vmem:[#allocation2] sm:$0x1f] %vm1130, %v2270
      %v2272 = vld [vmem:[%s59] sm:$0x1]
      %v2273 = vld [vmem:[%s61] sm:$0x1]
      %v2274 = vld [vmem:[%s63] sm:$0xff]
      %v2275 = vld [vmem:[%s63 + $0x8] sm:$0xff]
      %v2276 = vld [vmem:[%s63 + $0x10] sm:$0xff]
      %v2277 = vld [vmem:[%s63 + $0x18] sm:$0xff]
      %v2278 = vld [vmem:[%s63 + $0x20] sm:$0xff]
      %v2279 = vld [vmem:[%s63 + $0x28] sm:$0xff]
      %v2280 = vld [vmem:[%s63 + $0x30] sm:$0xff]
      %v2281 = vld [vmem:[%s63 + $0x38] sm:$0xff]
      %v2282 = vld [vmem:[%s65] sm:$0x3]
      %v2283 = vld [vmem:[#allocation2] sm:$0x1f]
      %v2284 = vsel %vm1130, %v2283, 0.0
      %2285 = vadd.xlane.f32.xlu0 %v2284
      %v2286 = vpop.xlane.xlu0 %2285
      %v2287 = vmul.f32 %v2286, %v1140
      %v2288 = vsub.f32 %v2283, %v2287
      %v2289 = vmul.f32 %v2288, %v2288
      %v2290 = vsel %vm1130, %v2289, 0.0
      %2291 = vadd.xlane.f32.xlu0 %v2290
      %v2292 = vpop.xlane.xlu0 %2291
      %v2293 = vmul.f32 %v2292, %v1140
      %v2294 = vadd.f32 %v2293, 1e-06
      %v2295 = vrsqrt.pop %v2294
      %v2296 = vmul.f32 %v2295, %v2294
      %v2297 = vmul.f32 %v2296, %v2295
      %v2298 = vmul.f32 0.5, %v2297
      %v2299 = vsub.f32 1.5, %v2298
      %v2300 = vmul.f32 %v2295, %v2299
      %vm2301 = vweird.f32 %v2294
      %vm2302 = vweird.f32 %v2295
      %vm2303 = vmor %vm2301, %vm2302
      %v2304 = vsel %vm2303, %v2295, %v2300
      %v2305 = vmul.f32 %v2288, %v2304
      %v2307 = vperm.slane %v2272, 0
      %v2309 = vmul.f32 %v2305, %v2307
      %v2311 = vperm.slane %v2273, 0
      %v2313 = vadd.f32 %v2309, %v2311
      %v2315 = vperm.slane %v2282, 0
      %v2316 = vperm.slane %v2282, 1
      %v2320 = vsel %vm1171, %v2313, 0
      %2322 = vmatpush.msra.mxu0 0.0
      %2323 = vmatpush.msra.mxu0 0.0
      %2324 = vmatpush.msra.mxu0 0.0
      %2325 = vmatpush.msra.mxu0 0.0
      %2326 = vmatpush.msra.mxu0 0.0
      %2327 = vmatpush.msra.mxu0 0.0
      %2328 = vmatpush.msra.mxu0 0.0
      %2329 = vmatpush.msra.mxu0 0.0
      %2330 = vmatpush.msra.mxu0 0.0
      %2331 = vmatpush.msra.mxu0 0.0
      %2332 = vmatpush.msra.mxu0 0.0
      %2333 = vmatpush.msra.mxu0 0.0
      %2334 = vmatpush.msra.mxu0 %v2280
      %2335 = vmatpush.msra.mxu0 %v2278
      %2336 = vmatpush.msra.mxu0 %v2276
      %2337 = vmatpush.msra.mxu0 %v2274
      %2338 = vmatmul.f32.gmra.mxu0 %v2320
      %v2339 = vpop.f32.mrf.mxu0
      %v2340 = vadd.f32 %v2315, %v2339
      %2341 = vdwg.mxu0
      %2342 = vmatpush.msra.mxu0 0.0
      %2343 = vmatpush.msra.mxu0 0.0
      %2344 = vmatpush.msra.mxu0 0.0
      %2345 = vmatpush.msra.mxu0 0.0
      %2346 = vmatpush.msra.mxu0 0.0
      %2347 = vmatpush.msra.mxu0 0.0
      %2348 = vmatpush.msra.mxu0 0.0
      %2349 = vmatpush.msra.mxu0 0.0
      %2350 = vmatpush.msra.mxu0 0.0
      %2351 = vmatpush.msra.mxu0 0.0
      %2352 = vmatpush.msra.mxu0 0.0
      %2353 = vmatpush.msra.mxu0 0.0
      %2354 = vmatpush.msra.mxu0 %v2281
      %2355 = vmatpush.msra.mxu0 %v2279
      %2356 = vmatpush.msra.mxu0 %v2277
      %2357 = vmatpush.msra.mxu0 %v2275
      %2358 = vmatmul.f32.gmra.mxu0 %v2320
      %v2359 = vpop.f32.mrf.mxu0
      %v2360 = vadd.f32 %v2316, %v2359
      %2361 = vdwg.mxu0
      %v2364 = vrot.slane %v2360, 7
      %vm2365 = vcmask 1040384
      %v2366 = vsel %vm2365, %v2340, %v2364
      %v2368 = vlaneseq
      %vm2369 = vcmp.ge.s32.totalorder %v2368, 0
      %vm2370 = vcmp.lt.s32.totalorder %v2368, 256
      %vm2371 = vmand %vm2369, %vm2370
      %2372 = vst.msk [vmem:[%s1012] sm:$0x3] %vm2371, %v2366
      %p2373 = scmp.lt.s32.totalorder %s78, 1
      %s2374 = scalar_select %p2373, %s78, 1
      %s2375 = smul.addr %s2374, 2
      %s2376 = scalar_lea.vmem %s67, %s2375
      // Predicated region
      $region153: #{vit_forward.1} parent=151 // pred_check
        %p2377 = pneg %p794
      $region154: #{vit_forward.1} parent=151 // pred_check_branch
        %2379 = sbr.rel (%p2377) target = $region156
      $region155: #{vit_forward.1} parent=151 // pred_region
        _
      $region156: #{vit_forward.1} parent=151 // pred_fallthru
        _
    $region152: #{vit_forward.1} parent=5 // pred_fallthru
      _
    %p2380 = scmp.le.s32.totalorder 2, %s73
    // Predicated region
    $region157: #{vit_forward.1} parent=5 // pred_check
      %p2381 = pneg %p2380
    $region158: #{vit_forward.1} parent=5 // pred_check_branch
      %2383 = sbr.rel (%p2381) target = $region160
    $region159: #{vit_forward.1} parent=5 // pred_region
      %s2384 = ssub.s32 %s73, 2
      // Predicated region
      $region161: #{vit_forward.1} parent=159 // pred_check
        %p2385 = pneg %p800
      $region162: #{vit_forward.1} parent=159 // pred_check_branch
        %2387 = sbr.rel (%p2385) target = $region164
      $region163: #{vit_forward.1} parent=159 // pred_region
        %p2388 = scmp.lt.s32.totalorder %s79, 1
        %s2389 = scalar_select %p2388, %s79, 1
        %s2390 = smul.addr %s2389, 2
        %s2391 = scalar_lea.vmem %s67, %s2390
      $region164: #{vit_forward.1} parent=159 // pred_fallthru
        _
    $region160: #{vit_forward.1} parent=5 // pred_fallthru
      _
  $region6: #{vit_forward.1} parent=0 // loop_footer
    %s77 = sadd.s32 1, %s73
  $region7: #{vit_forward.1} parent=0 // loop_footer_branch
    %72 = sbr.rel target = $region3
  $region8: #{vit_forward.1} parent=0 // loop_exit
    _

</llo_original>
